<compile_context>
chip_gen: v5e
topology: v5e:2x2
jax: 0.10.0
libtpu: 0.0.40
codegen_flags: <defaults>
</compile_context>

<pallas_src>
import jax
import jax.numpy as jnp
import numpy as np
from jax.experimental import pallas as pl
from jax.experimental.pallas import tpu as pltpu


def _round_up(x, m):
    return (x + m - 1) // m * m


def _cdiv(a, b):
    return (a + b - 1) // b


# --------------------------------------------------------------------------
# Pallas kernel: fused MLP tower + GMF + affine head + sigmoid
# --------------------------------------------------------------------------
def multi_mf_kernel(
    u_mlp_ref, i_mlp_ref,        # [TB, F_mlp] bf16
    u_mf_ref, i_mf_ref,          # [TB, F_mf]  bf16
    bert_ref, graph_ref,         # [TB, H] bf16, [TB, G] bf16
    w0_ref, b0_ref,              # [2*F_mlp, L1] bf16, [1, L1] f32
    w1_ref, b1_ref,              # [L1, L2] bf16,      [1, L2] f32
    w2_ref, b2_ref,              # [L2, L3] bf16,      [1, L3] f32
    wa_mlp_ref, wa_mf_ref,       # [1, L3] f32, [1, F_mf] f32
    wa_bert_ref, wa_graph_ref,   # [1, H] f32,  [1, G] f32
    ba_ref,                      # [1, 1] f32
    out_ref,                     # [TB, 1] f32
):
    f32 = jnp.float32
    bf16 = jnp.bfloat16
    f_mlp = u_mlp_ref.shape[1]

    # ---- MLP tower: concat(u, i) @ W0  ==  u @ W0[:F] + i @ W0[F:]
    w0u = w0_ref[:f_mlp, :]          # static, sublane-aligned slices of one slab
    w0i = w0_ref[f_mlp:, :]
    h = (jnp.dot(u_mlp_ref[...], w0u, preferred_element_type=f32)
         + jnp.dot(i_mlp_ref[...], w0i, preferred_element_type=f32)
         + b0_ref[...])
    h = jnp.maximum(h, 0.0).astype(bf16)
    h = jnp.maximum(
        jnp.dot(h, w1_ref[...], preferred_element_type=f32) + b1_ref[...],
        0.0).astype(bf16)
    mlp_vec = jnp.maximum(
        jnp.dot(h, w2_ref[...], preferred_element_type=f32) + b2_ref[...], 0.0)

    # ---- GMF: elementwise product of user/item factors (f32 VPU math)
    mf_vec = u_mf_ref[...].astype(f32) * i_mf_ref[...].astype(f32)

    # ---- affine_output on concat([mlp, mf, bert, graph]) as a VPU multiply
    #      + XLU lane-reduction per source (no N=1 MXU dots).
    logits = (
        jnp.sum(mlp_vec * wa_mlp_ref[...], axis=-1, keepdims=True)
        + jnp.sum(mf_vec * wa_mf_ref[...], axis=-1, keepdims=True)
        + jnp.sum(bert_ref[...].astype(f32) * wa_bert_ref[...],
                  axis=-1, keepdims=True)
        + jnp.sum(graph_ref[...].astype(f32) * wa_graph_ref[...],
                  axis=-1, keepdims=True)
        + ba_ref[...])

    out_ref[...] = jax.nn.sigmoid(logits).astype(out_ref.dtype)


# --------------------------------------------------------------------------
# Wrapper: embedding gathers (glue) + batch padding/tiling + pallas_call
# --------------------------------------------------------------------------
def multi_mf_forward(params, user_indices, item_indices, bert_vector,
                     graph_embeddings, *, max_tile=512):
    B = user_indices.shape[0]

    # Batch tile: as large as possible (<= max_tile), multiple of 16 (bf16
    # sublane packing).  Pick the tile count first so padded rows are
    # minimised (e.g. B=600 -> 2 tiles of 304, not 2 tiles of 512).
    n_tiles = max(1, _cdiv(B, max_tile))
    TB = _round_up(_cdiv(B, n_tiles), 16)
    B_pad = _round_up(B, TB)
    if B_pad != B:
        pad = B_pad - B
        user_indices = jnp.pad(user_indices, (0, pad))
        item_indices = jnp.pad(item_indices, (0, pad))
        bert_vector = jnp.pad(bert_vector, ((0, pad), (0, 0)))
        graph_embeddings = jnp.pad(graph_embeddings, ((0, pad), (0, 0)))

    # Embedding lookups (plain-JAX gather on bf16 tables -> bf16 streams).
    u_mlp = params["mlp_user_emb"][user_indices]   # [B_pad, F_mlp] bf16
    i_mlp = params["mlp_item_emb"][item_indices]   # [B_pad, F_mlp] bf16
    u_mf = params["gmf_user_emb"][user_indices]    # [B_pad, F_mf]  bf16
    i_mf = params["gmf_item_emb"][item_indices]    # [B_pad, F_mf]  bf16

    bert_bf = bert_vector.astype(jnp.bfloat16)       # no-op if already bf16
    graph_bf = graph_embeddings.astype(jnp.bfloat16)

    batch_inputs = [u_mlp, i_mlp, u_mf, i_mf, bert_bf, graph_bf]
    weight_inputs = [
        params["mlp_W0"], params["mlp_b0"],
        params["mlp_W1"], params["mlp_b1"],
        params["mlp_W2"], params["mlp_b2"],
        params["aff_W_mlp"], params["aff_W_mf"],
        params["aff_W_bert"], params["aff_W_graph"],
        params["aff_b"],
    ]

    batch_specs = [
        pl.BlockSpec((TB, x.shape[1]), lambda i: (i, 0)) for x in batch_inputs
    ]
    # Grid-invariant weights: constant block index -> DMA'd once, kept resident.
    weight_specs = [
        pl.BlockSpec(w.shape, lambda i: (0, 0)) for w in weight_inputs
    ]

    out = pl.pallas_call(
        multi_mf_kernel,
        out_shape=jax.ShapeDtypeStruct((B_pad, 1), jnp.float32),
        grid_spec=pltpu.PrefetchScalarGridSpec(
            num_scalar_prefetch=0,
            grid=(B_pad // TB,),
            in_specs=batch_specs + weight_specs,
            out_specs=pl.BlockSpec((TB, 1), lambda i: (i, 0)),
        ),
        compiler_params=pltpu.CompilerParams(
            dimension_semantics=("parallel",)),
    )(*batch_inputs, *weight_inputs)

    return out[:B, 0]  # rating.squeeze()


# --------------------------------------------------------------------------
# Pure-JAX reference (f32 compute on the same bf16-stored params)
# --------------------------------------------------------------------------
def multi_mf_reference(params, user_indices, item_indices, bert_vector,
                       graph_embeddings):
    f32 = jnp.float32
    u_mlp = params["mlp_user_emb"][user_indices].astype(f32)
    i_mlp = params["mlp_item_emb"][item_indices].astype(f32)
    u_mf = params["gmf_user_emb"][user_indices].astype(f32)
    i_mf = params["gmf_item_emb"][item_indices].astype(f32)

    x = jnp.concatenate([u_mlp, i_mlp], axis=1)
    x = jax.nn.relu(x @ params["mlp_W0"].astype(f32) + params["mlp_b0"])
    x = jax.nn.relu(x @ params["mlp_W1"].astype(f32) + params["mlp_b1"])
    mlp_vec = jax.nn.relu(x @ params["mlp_W2"].astype(f32) + params["mlp_b2"])

    mf_vec = u_mf * i_mf
    bert = bert_vector.astype(f32)
    graph = graph_embeddings.astype(f32)

    logits = (mlp_vec @ params["aff_W_mlp"].T
              + mf_vec @ params["aff_W_mf"].T
              + bert @ params["aff_W_bert"].T
              + graph @ params["aff_W_graph"].T
              + params["aff_b"])
    return jax.nn.sigmoid(logits).squeeze(-1)


# --------------------------------------------------------------------------
# Deterministic parameter init (synthetic; shapes per module __init__)
# --------------------------------------------------------------------------
def xavier_uniform(key, shape):
    fan_in, fan_out = shape[0], shape[1]
    bound = float(np.sqrt(6.0 / (fan_in + fan_out)))
    return jax.random.uniform(key, shape, jnp.float32, -bound, bound)


def init_params(key, num_users, num_items, factor_num_mf, layers,
                bert_hidden, graph_dim):
    factor_num_mlp = layers[0] // 2
    ks = jax.random.split(key, 16)
    affine_in = layers[-1] + factor_num_mf + bert_hidden + graph_dim
    aff_W = xavier_uniform(ks[10], (affine_in, 1))          # [D, 1] f32
    o = layers[-1]
    bf16 = jnp.bfloat16
    return {
        # embeddings (NCF init: normal(0, 0.01)), stored bf16 for transport
        "mlp_user_emb": (0.01 * jax.random.normal(ks[0], (num_users, factor_num_mlp))).astype(bf16),
        "mlp_item_emb": (0.01 * jax.random.normal(ks[1], (num_items, factor_num_mlp))).astype(bf16),
        "gmf_user_emb": (0.01 * jax.random.normal(ks[2], (num_users, factor_num_mf))).astype(bf16),
        "gmf_item_emb": (0.01 * jax.random.normal(ks[3], (num_items, factor_num_mf))).astype(bf16),
        # MLP tower (weights [in, out] in bf16; biases [1, out] in f32)
        "mlp_W0": xavier_uniform(ks[4], (layers[0], layers[1])).astype(bf16),
        "mlp_b0": jnp.zeros((1, layers[1]), jnp.float32),
        "mlp_W1": xavier_uniform(ks[5], (layers[1], layers[2])).astype(bf16),
        "mlp_b1": jnp.zeros((1, layers[2]), jnp.float32),
        "mlp_W2": xavier_uniform(ks[6], (layers[2], layers[3])).astype(bf16),
        "mlp_b2": jnp.zeros((1, layers[3]), jnp.float32),
        # affine head, split along the concat axis, stored as [1, D] rows (f32)
        "aff_W_mlp": aff_W[:o].T,
        "aff_W_mf": aff_W[o:o + factor_num_mf].T,
        "aff_W_bert": aff_W[o + factor_num_mf:o + factor_num_mf + bert_hidden].T,
        "aff_W_graph": aff_W[o + factor_num_mf + bert_hidden:].T,
        "aff_b": jnp.zeros((1, 1), jnp.float32),
    }


if __name__ == "__main__":
    # Small demo shapes (still exercises a 2-tile grid with TB=512).
    B = 1024
    num_users, num_items = 200, 300
    factor_num_mf = 8
    layers = [64, 32, 16, 8]          # args.layers -> factor_num_mlp = 32
    bert_hidden = 32                  # frozen BERT pooled-output dim (small demo)
    graph_dim = 258                   # use_item_embedding=True branch

    key = jax.random.PRNGKey(0)
    kp, k1, k2, k3, k4 = jax.random.split(key, 5)

    params = init_params(kp, num_users, num_items, factor_num_mf, layers,
                         bert_hidden, graph_dim)

    user_indices = jax.random.randint(k1, (B,), 0, num_users)
    item_indices = jax.random.randint(k2, (B,), 0, num_items)
    # train_bert=False path: `tokenizations` is already the pooled bert vector,
    # assumed to arrive from upstream in bf16 (transport precision).
    bert_vector = jax.random.normal(k3, (B, bert_hidden), jnp.float32).astype(jnp.bfloat16)
    graph_embeddings = jax.random.normal(k4, (B, graph_dim), jnp.float32).astype(jnp.bfloat16)

    rating = multi_mf_forward(params, user_indices, item_indices,
                              bert_vector, graph_embeddings)
    rating = jax.block_until_ready(rating)

    ref = multi_mf_reference(params, user_indices, item_indices,
                             bert_vector, graph_embeddings)
    np.testing.assert_allclose(np.asarray(rating), np.asarray(ref),
                               rtol=1e-2, atol=1e-2)

    print("KERNEL_OK")
</pallas_src>

<mosaic_0001>
module attributes {stable_mosaic.version = 11 : i64} {
  func.func @multi_mf_kernel(%arg0: i32, %arg1: memref<512x32xbf16, #tpu.memory_space<vmem>>, %arg2: memref<512x32xbf16, #tpu.memory_space<vmem>>, %arg3: memref<512x8xbf16, #tpu.memory_space<vmem>>, %arg4: memref<512x8xbf16, #tpu.memory_space<vmem>>, %arg5: memref<512x32xbf16, #tpu.memory_space<vmem>>, %arg6: memref<512x258xbf16, #tpu.memory_space<vmem>>, %arg7: memref<64x32xbf16, #tpu.memory_space<vmem>>, %arg8: memref<1x32xf32, #tpu.memory_space<vmem>>, %arg9: memref<32x16xbf16, #tpu.memory_space<vmem>>, %arg10: memref<1x16xf32, #tpu.memory_space<vmem>>, %arg11: memref<16x8xbf16, #tpu.memory_space<vmem>>, %arg12: memref<1x8xf32, #tpu.memory_space<vmem>>, %arg13: memref<1x8xf32, #tpu.memory_space<vmem>>, %arg14: memref<1x8xf32, #tpu.memory_space<vmem>>, %arg15: memref<1x32xf32, #tpu.memory_space<vmem>>, %arg16: memref<1x258xf32, #tpu.memory_space<vmem>>, %arg17: memref<1x1xf32, #tpu.memory_space<vmem>>, %arg18: memref<512x1xf32, #tpu.memory_space<vmem>>) attributes {dimension_semantics = [#tpu.dimension_semantics<parallel>], iteration_bounds = array<i64: 2>, scalar_prefetch = 0 : i64, scratch_operands = 0 : i64, tpu.core_type = #tpu.core_type<tc>, window_params = [{transform_indices = @transform_0, window_bounds = array<i64: 512, 32>}, {transform_indices = @transform_1, window_bounds = array<i64: 512, 32>}, {transform_indices = @transform_2, window_bounds = array<i64: 512, 8>}, {transform_indices = @transform_3, window_bounds = array<i64: 512, 8>}, {transform_indices = @transform_4, window_bounds = array<i64: 512, 32>}, {transform_indices = @transform_5, window_bounds = array<i64: 512, 258>}, {pipeline_mode = #tpu.pipeline_mode<synchronous>, transform_indices = @transform_6, window_bounds = array<i64: 64, 32>}, {pipeline_mode = #tpu.pipeline_mode<synchronous>, transform_indices = @transform_7, window_bounds = array<i64: 1, 32>}, {pipeline_mode = #tpu.pipeline_mode<synchronous>, transform_indices = @transform_8, window_bounds = array<i64: 32, 16>}, {pipeline_mode = #tpu.pipeline_mode<synchronous>, transform_indices = @transform_9, window_bounds = array<i64: 1, 16>}, {pipeline_mode = #tpu.pipeline_mode<synchronous>, transform_indices = @transform_10, window_bounds = array<i64: 16, 8>}, {pipeline_mode = #tpu.pipeline_mode<synchronous>, transform_indices = @transform_11, window_bounds = array<i64: 1, 8>}, {pipeline_mode = #tpu.pipeline_mode<synchronous>, transform_indices = @transform_12, window_bounds = array<i64: 1, 8>}, {pipeline_mode = #tpu.pipeline_mode<synchronous>, transform_indices = @transform_13, window_bounds = array<i64: 1, 8>}, {pipeline_mode = #tpu.pipeline_mode<synchronous>, transform_indices = @transform_14, window_bounds = array<i64: 1, 32>}, {pipeline_mode = #tpu.pipeline_mode<synchronous>, transform_indices = @transform_15, window_bounds = array<i64: 1, 258>}, {pipeline_mode = #tpu.pipeline_mode<synchronous>, transform_indices = @transform_16, window_bounds = array<i64: 1, 1>}, {transform_indices = @transform_17, window_bounds = array<i64: 512, 1>}]} {
    %c0 = arith.constant 0 : index
    %c0_0 = arith.constant 0 : index
    %0 = vector.load %arg7[%c0, %c0_0] : memref<64x32xbf16, #tpu.memory_space<vmem>>, vector<32x32xbf16>
    %c32 = arith.constant 32 : index
    %c0_1 = arith.constant 0 : index
    %1 = vector.load %arg7[%c32, %c0_1] : memref<64x32xbf16, #tpu.memory_space<vmem>>, vector<32x32xbf16>
    %c0_2 = arith.constant 0 : index
    %c0_3 = arith.constant 0 : index
    %2 = vector.load %arg1[%c0_2, %c0_3] : memref<512x32xbf16, #tpu.memory_space<vmem>>, vector<512x32xbf16>
    %cst = arith.constant dense<0.000000e+00> : vector<512x32xf32>
    %3 = tpu.matmul %2, %0, %cst {dimension_numbers = #tpu.dot_dimension_numbers<[1], [0], [0], [1], [0, 0, 1, 1], [], []>} : vector<512x32xbf16>, vector<32x32xbf16>, vector<512x32xf32> -> vector<512x32xf32>
    %c0_4 = arith.constant 0 : index
    %c0_5 = arith.constant 0 : index
    %4 = vector.load %arg2[%c0_4, %c0_5] : memref<512x32xbf16, #tpu.memory_space<vmem>>, vector<512x32xbf16>
    %cst_6 = arith.constant dense<0.000000e+00> : vector<512x32xf32>
    %5 = tpu.matmul %4, %1, %cst_6 {dimension_numbers = #tpu.dot_dimension_numbers<[1], [0], [0], [1], [0, 0, 1, 1], [], []>} : vector<512x32xbf16>, vector<32x32xbf16>, vector<512x32xf32> -> vector<512x32xf32>
    %6 = arith.addf %3, %5 : vector<512x32xf32>
    %c0_7 = arith.constant 0 : index
    %c0_8 = arith.constant 0 : index
    %7 = vector.load %arg8[%c0_7, %c0_8] : memref<1x32xf32, #tpu.memory_space<vmem>>, vector<1x32xf32>
    %8 = vector.broadcast %7 : vector<1x32xf32> to vector<512x32xf32>
    %9 = arith.addf %6, %8 : vector<512x32xf32>
    %cst_9 = arith.constant 0.000000e+00 : f32
    %10 = vector.broadcast %cst_9 : f32 to vector<512x32xf32>
    %11 = arith.maximumf %9, %10 : vector<512x32xf32>
    %12 = arith.truncf %11 : vector<512x32xf32> to vector<512x32xbf16>
    %c0_10 = arith.constant 0 : index
    %c0_11 = arith.constant 0 : index
    %13 = vector.load %arg9[%c0_10, %c0_11] : memref<32x16xbf16, #tpu.memory_space<vmem>>, vector<32x16xbf16>
    %cst_12 = arith.constant dense<0.000000e+00> : vector<512x16xf32>
    %14 = tpu.matmul %12, %13, %cst_12 {dimension_numbers = #tpu.dot_dimension_numbers<[1], [0], [0], [1], [0, 0, 1, 1], [], []>} : vector<512x32xbf16>, vector<32x16xbf16>, vector<512x16xf32> -> vector<512x16xf32>
    %c0_13 = arith.constant 0 : index
    %c0_14 = arith.constant 0 : index
    %15 = vector.load %arg10[%c0_13, %c0_14] : memref<1x16xf32, #tpu.memory_space<vmem>>, vector<1x16xf32>
    %16 = vector.broadcast %15 : vector<1x16xf32> to vector<512x16xf32>
    %17 = arith.addf %14, %16 : vector<512x16xf32>
    %cst_15 = arith.constant 0.000000e+00 : f32
    %18 = vector.broadcast %cst_15 : f32 to vector<512x16xf32>
    %19 = arith.maximumf %17, %18 : vector<512x16xf32>
    %20 = arith.truncf %19 : vector<512x16xf32> to vector<512x16xbf16>
    %c0_16 = arith.constant 0 : index
    %c0_17 = arith.constant 0 : index
    %21 = vector.load %arg11[%c0_16, %c0_17] : memref<16x8xbf16, #tpu.memory_space<vmem>>, vector<16x8xbf16>
    %cst_18 = arith.constant dense<0.000000e+00> : vector<512x8xf32>
    %22 = tpu.matmul %20, %21, %cst_18 {dimension_numbers = #tpu.dot_dimension_numbers<[1], [0], [0], [1], [0, 0, 1, 1], [], []>} : vector<512x16xbf16>, vector<16x8xbf16>, vector<512x8xf32> -> vector<512x8xf32>
    %c0_19 = arith.constant 0 : index
    %c0_20 = arith.constant 0 : index
    %23 = vector.load %arg12[%c0_19, %c0_20] : memref<1x8xf32, #tpu.memory_space<vmem>>, vector<1x8xf32>
    %24 = vector.broadcast %23 : vector<1x8xf32> to vector<512x8xf32>
    %25 = arith.addf %22, %24 : vector<512x8xf32>
    %cst_21 = arith.constant 0.000000e+00 : f32
    %26 = vector.broadcast %cst_21 : f32 to vector<512x8xf32>
    %27 = arith.maximumf %25, %26 : vector<512x8xf32>
    %c0_22 = arith.constant 0 : index
    %c0_23 = arith.constant 0 : index
    %28 = vector.load %arg3[%c0_22, %c0_23] : memref<512x8xbf16, #tpu.memory_space<vmem>>, vector<512x8xbf16>
    %29 = arith.extf %28 : vector<512x8xbf16> to vector<512x8xf32>
    %c0_24 = arith.constant 0 : index
    %c0_25 = arith.constant 0 : index
    %30 = vector.load %arg4[%c0_24, %c0_25] : memref<512x8xbf16, #tpu.memory_space<vmem>>, vector<512x8xbf16>
    %31 = arith.extf %30 : vector<512x8xbf16> to vector<512x8xf32>
    %32 = arith.mulf %29, %31 : vector<512x8xf32>
    %c0_26 = arith.constant 0 : index
    %c0_27 = arith.constant 0 : index
    %33 = vector.load %arg13[%c0_26, %c0_27] : memref<1x8xf32, #tpu.memory_space<vmem>>, vector<1x8xf32>
    %34 = vector.broadcast %33 : vector<1x8xf32> to vector<512x8xf32>
    %35 = arith.mulf %27, %34 : vector<512x8xf32>
    %cst_28 = arith.constant dense<0.000000e+00> : vector<512xf32>
    %36 = vector.multi_reduction <add>, %35, %cst_28 [1] : vector<512x8xf32> to vector<512xf32>
    %37 = vector.shape_cast %36 : vector<512xf32> to vector<512x1xf32>
    %c0_29 = arith.constant 0 : index
    %c0_30 = arith.constant 0 : index
    %38 = vector.load %arg14[%c0_29, %c0_30] : memref<1x8xf32, #tpu.memory_space<vmem>>, vector<1x8xf32>
    %39 = vector.broadcast %38 : vector<1x8xf32> to vector<512x8xf32>
    %40 = arith.mulf %32, %39 : vector<512x8xf32>
    %cst_31 = arith.constant dense<0.000000e+00> : vector<512xf32>
    %41 = vector.multi_reduction <add>, %40, %cst_31 [1] : vector<512x8xf32> to vector<512xf32>
    %42 = vector.shape_cast %41 : vector<512xf32> to vector<512x1xf32>
    %43 = arith.addf %37, %42 : vector<512x1xf32>
    %c0_32 = arith.constant 0 : index
    %c0_33 = arith.constant 0 : index
    %44 = vector.load %arg5[%c0_32, %c0_33] : memref<512x32xbf16, #tpu.memory_space<vmem>>, vector<512x32xbf16>
    %45 = arith.extf %44 : vector<512x32xbf16> to vector<512x32xf32>
    %c0_34 = arith.constant 0 : index
    %c0_35 = arith.constant 0 : index
    %46 = vector.load %arg15[%c0_34, %c0_35] : memref<1x32xf32, #tpu.memory_space<vmem>>, vector<1x32xf32>
    %47 = vector.broadcast %46 : vector<1x32xf32> to vector<512x32xf32>
    %48 = arith.mulf %45, %47 : vector<512x32xf32>
    %cst_36 = arith.constant dense<0.000000e+00> : vector<512xf32>
    %49 = vector.multi_reduction <add>, %48, %cst_36 [1] : vector<512x32xf32> to vector<512xf32>
    %50 = vector.shape_cast %49 : vector<512xf32> to vector<512x1xf32>
    %51 = arith.addf %43, %50 : vector<512x1xf32>
    %c0_37 = arith.constant 0 : index
    %c0_38 = arith.constant 0 : index
    %52 = vector.load %arg6[%c0_37, %c0_38] : memref<512x258xbf16, #tpu.memory_space<vmem>>, vector<512x258xbf16>
    %53 = arith.extf %52 : vector<512x258xbf16> to vector<512x258xf32>
    %c0_39 = arith.constant 0 : index
    %c0_40 = arith.constant 0 : index
    %54 = vector.load %arg16[%c0_39, %c0_40] : memref<1x258xf32, #tpu.memory_space<vmem>>, vector<1x258xf32>
    %55 = vector.broadcast %54 : vector<1x258xf32> to vector<512x258xf32>
    %56 = arith.mulf %53, %55 : vector<512x258xf32>
    %cst_41 = arith.constant dense<0.000000e+00> : vector<512xf32>
    %57 = vector.multi_reduction <add>, %56, %cst_41 [1] : vector<512x258xf32> to vector<512xf32>
    %58 = vector.shape_cast %57 : vector<512xf32> to vector<512x1xf32>
    %59 = arith.addf %51, %58 : vector<512x1xf32>
    %c0_42 = arith.constant 0 : index
    %c0_43 = arith.constant 0 : index
    %60 = vector.load %arg17[%c0_42, %c0_43] : memref<1x1xf32, #tpu.memory_space<vmem>>, vector<1x1xf32>
    %61 = vector.broadcast %60 : vector<1x1xf32> to vector<512x1xf32>
    %62 = arith.addf %59, %61 : vector<512x1xf32>
    %63 = arith.negf %62 : vector<512x1xf32>
    %64 = math.exp %63 : vector<512x1xf32>
    %cst_44 = arith.constant 1.000000e+00 : f32
    %65 = vector.broadcast %cst_44 : f32 to vector<512x1xf32>
    %66 = arith.addf %65, %64 : vector<512x1xf32>
    %67 = arith.divf %65, %66 : vector<512x1xf32>
    %c0_45 = arith.constant 0 : index
    %c0_46 = arith.constant 0 : index
    %68 = vector.load %arg18[%c0_45, %c0_46] : memref<512x1xf32, #tpu.memory_space<vmem>>, vector<512x1xf32>
    tpu.vector_store %arg18[%c0_45, %c0_46], %67 {strides = array<i32>} : memref<512x1xf32, #tpu.memory_space<vmem>>, vector<512x1xf32>,
    return
  }
  func.func @transform_0(%arg0: i32) -> (i32, i32) {
    %c0_i32 = arith.constant 0 : i32
    %c0_i32_0 = arith.constant 0 : i32
    return %arg0, %c0_i32 : i32, i32
  }
  func.func @transform_1(%arg0: i32) -> (i32, i32) {
    %c0_i32 = arith.constant 0 : i32
    %c0_i32_0 = arith.constant 0 : i32
    return %arg0, %c0_i32 : i32, i32
  }
  func.func @transform_2(%arg0: i32) -> (i32, i32) {
    %c0_i32 = arith.constant 0 : i32
    %c0_i32_0 = arith.constant 0 : i32
    return %arg0, %c0_i32 : i32, i32
  }
  func.func @transform_3(%arg0: i32) -> (i32, i32) {
    %c0_i32 = arith.constant 0 : i32
    %c0_i32_0 = arith.constant 0 : i32
    return %arg0, %c0_i32 : i32, i32
  }
  func.func @transform_4(%arg0: i32) -> (i32, i32) {
    %c0_i32 = arith.constant 0 : i32
    %c0_i32_0 = arith.constant 0 : i32
    return %arg0, %c0_i32 : i32, i32
  }
  func.func @transform_5(%arg0: i32) -> (i32, i32) {
    %c0_i32 = arith.constant 0 : i32
    %c0_i32_0 = arith.constant 0 : i32
    return %arg0, %c0_i32 : i32, i32
  }
  func.func @transform_6(%arg0: i32) -> (i32, i32) {
    %c0_i32 = arith.constant 0 : i32
    %c0_i32_0 = arith.constant 0 : i32
    %c0_i32_1 = arith.constant 0 : i32
    return %c0_i32, %c0_i32_0 : i32, i32
  }
  func.func @transform_7(%arg0: i32) -> (i32, i32) {
    %c0_i32 = arith.constant 0 : i32
    %c0_i32_0 = arith.constant 0 : i32
    %c0_i32_1 = arith.constant 0 : i32
    return %c0_i32, %c0_i32_0 : i32, i32
  }
  func.func @transform_8(%arg0: i32) -> (i32, i32) {
    %c0_i32 = arith.constant 0 : i32
    %c0_i32_0 = arith.constant 0 : i32
    %c0_i32_1 = arith.constant 0 : i32
    return %c0_i32, %c0_i32_0 : i32, i32
  }
  func.func @transform_9(%arg0: i32) -> (i32, i32) {
    %c0_i32 = arith.constant 0 : i32
    %c0_i32_0 = arith.constant 0 : i32
    %c0_i32_1 = arith.constant 0 : i32
    return %c0_i32, %c0_i32_0 : i32, i32
  }
  func.func @transform_10(%arg0: i32) -> (i32, i32) {
    %c0_i32 = arith.constant 0 : i32
    %c0_i32_0 = arith.constant 0 : i32
    %c0_i32_1 = arith.constant 0 : i32
    return %c0_i32, %c0_i32_0 : i32, i32
  }
  func.func @transform_11(%arg0: i32) -> (i32, i32) {
    %c0_i32 = arith.constant 0 : i32
    %c0_i32_0 = arith.constant 0 : i32
    %c0_i32_1 = arith.constant 0 : i32
    return %c0_i32, %c0_i32_0 : i32, i32
  }
  func.func @transform_12(%arg0: i32) -> (i32, i32) {
    %c0_i32 = arith.constant 0 : i32
    %c0_i32_0 = arith.constant 0 : i32
    %c0_i32_1 = arith.constant 0 : i32
    return %c0_i32, %c0_i32_0 : i32, i32
  }
  func.func @transform_13(%arg0: i32) -> (i32, i32) {
    %c0_i32 = arith.constant 0 : i32
    %c0_i32_0 = arith.constant 0 : i32
    %c0_i32_1 = arith.constant 0 : i32
    return %c0_i32, %c0_i32_0 : i32, i32
  }
  func.func @transform_14(%arg0: i32) -> (i32, i32) {
    %c0_i32 = arith.constant 0 : i32
    %c0_i32_0 = arith.constant 0 : i32
    %c0_i32_1 = arith.constant 0 : i32
    return %c0_i32, %c0_i32_0 : i32, i32
  }
  func.func @transform_15(%arg0: i32) -> (i32, i32) {
    %c0_i32 = arith.constant 0 : i32
    %c0_i32_0 = arith.constant 0 : i32
    %c0_i32_1 = arith.constant 0 : i32
    return %c0_i32, %c0_i32_0 : i32, i32
  }
  func.func @transform_16(%arg0: i32) -> (i32, i32) {
    %c0_i32 = arith.constant 0 : i32
    %c0_i32_0 = arith.constant 0 : i32
    %c0_i32_1 = arith.constant 0 : i32
    return %c0_i32, %c0_i32_0 : i32, i32
  }
  func.func @transform_17(%arg0: i32) -> (i32, i32) {
    %c0_i32 = arith.constant 0 : i32
    %c0_i32_0 = arith.constant 0 : i32
    return %arg0, %c0_i32 : i32, i32
  }
}

</mosaic_0001>

<llo_original>
// kernel: tpu_custom_call.1
$region0: #{tpu_custom_call.1}
  #allocation0 [shape = 'u32[]', space=smem, size = 0x4, offset = 0x4, fixed_abs, tag = 'smem constant byte address 0x4 - core index']
  #allocation1 [shape = 'u32[72,128]{1,0:T(1,128)}', space=vmem, size = 0x9000, scoped, tag = 'internal scratch']
  #allocation2 [shape = 'f32[1,1]{1,0:T(1,128)S(1)}', space=vmem, size = 0x200, scoped, tag = 'scoped memory for tpu_custom_call.1']
  %s0 = inlined_call_operand.vmem [shape: bf16[1024,32], index: 0, kind: input, shape index: {}]
  %s1 = inlined_call_operand.vmem [shape: bf16[1024,32], index: 1, kind: input, shape index: {}]
  %s2 = inlined_call_operand.vmem [shape: bf16[1024,8], index: 2, kind: input, shape index: {}]
  %s3 = inlined_call_operand.vmem [shape: bf16[1024,8], index: 3, kind: input, shape index: {}]
  %s4 = inlined_call_operand.vmem [shape: bf16[1024,32], index: 4, kind: input, shape index: {}]
  %s5 = inlined_call_operand.vmem [shape: bf16[1024,258], index: 5, kind: input, shape index: {}]
  %s6 = inlined_call_operand.vmem [shape: bf16[64,32], index: 6, kind: input, shape index: {}]
  %s7 = inlined_call_operand.vmem [shape: f32[1,32], index: 7, kind: input, shape index: {}]
  %s8 = inlined_call_operand.vmem [shape: bf16[32,16], index: 8, kind: input, shape index: {}]
  %s9 = inlined_call_operand.vmem [shape: f32[1,16], index: 9, kind: input, shape index: {}]
  %s10 = inlined_call_operand.vmem [shape: bf16[16,8], index: 10, kind: input, shape index: {}]
  %s11 = inlined_call_operand.vmem [shape: f32[1,8], index: 11, kind: input, shape index: {}]
  %s12 = inlined_call_operand.vmem [shape: f32[1,8], index: 12, kind: input, shape index: {}]
  %s13 = inlined_call_operand.vmem [shape: f32[1,8], index: 13, kind: input, shape index: {}]
  %s14 = inlined_call_operand.vmem [shape: f32[1,32], index: 14, kind: input, shape index: {}]
  %s15 = inlined_call_operand.vmem [shape: f32[1,258], index: 15, kind: input, shape index: {}]
  %s16 = inlined_call_operand.<no memory space> [shape: f32[1,1], index: 16, kind: input, shape index: {}]
  %s17 = inlined_call_operand.vmem [shape: f32[1024,1], index: 17, kind: output, shape index: {}]
  %s18 = sld [smem:[#allocation0]]
  $region101: #{tpu_custom_call.1} parent=0
    _
  %s20 = ssub.s32 1, %s18
  %s21 = scalar_select 0, %s20, %s18
  %v22 = vstv %s16
  %23 = vst [vmem:[#allocation2] sm:$0x1] %v22
  loop: start=0, step=1, limit=4
  $region2: #{tpu_custom_call.1} parent=0 // loop_pre_header
    _
  $region3: #{tpu_custom_call.1} parent=0 // loop_header
    %s25 = sphi 0, %s29
    %p26 = scmp.ge.s32.totalorder %s25, 4
    %s35 = sphi 0, %s37
    %s38 = sphi 0, %s35
    %s39 = sphi 0, %s38
    %s55 = sphi 0, %s39
    %s61 = sphi 0, %s63
    %s64 = sphi 0, %s61
    %s65 = sphi 0, %s64
    %s81 = sphi 0, %s65
    %s87 = sphi 0, %s89
    %s90 = sphi 0, %s87
    %s91 = sphi 0, %s90
    %s107 = sphi 0, %s91
    %s113 = sphi 0, %s115
    %s116 = sphi 0, %s113
    %s117 = sphi 0, %s116
    %s133 = sphi 0, %s117
    %s139 = sphi 0, %s141
    %s142 = sphi 0, %s139
    %s143 = sphi 0, %s142
    %s159 = sphi 0, %s143
    %s165 = sphi 0, %s167
    %s168 = sphi 0, %s165
    %s169 = sphi 0, %s168
    %s185 = sphi 0, %s169
    %s189 = sphi 0, %s189
    %s191 = sphi 0, %s189
    %s192 = sphi 0, %s191
    %s206 = sphi 0, %s192
    %s210 = sphi 0, %s210
    %s212 = sphi 0, %s210
    %s213 = sphi 0, %s212
    %s227 = sphi 0, %s213
    %s231 = sphi 0, %s231
    %s233 = sphi 0, %s231
    %s234 = sphi 0, %s233
    %s248 = sphi 0, %s234
    %s252 = sphi 0, %s252
    %s254 = sphi 0, %s252
    %s255 = sphi 0, %s254
    %s269 = sphi 0, %s255
    %s273 = sphi 0, %s273
    %s275 = sphi 0, %s273
    %s276 = sphi 0, %s275
    %s290 = sphi 0, %s276
    %s294 = sphi 0, %s294
    %s296 = sphi 0, %s294
    %s297 = sphi 0, %s296
    %s311 = sphi 0, %s297
    %s315 = sphi 0, %s315
    %s317 = sphi 0, %s315
    %s318 = sphi 0, %s317
    %s332 = sphi 0, %s318
    %s336 = sphi 0, %s336
    %s338 = sphi 0, %s336
    %s339 = sphi 0, %s338
    %s353 = sphi 0, %s339
    %s357 = sphi 0, %s357
    %s359 = sphi 0, %s357
    %s360 = sphi 0, %s359
    %s374 = sphi 0, %s360
    %s378 = sphi 0, %s378
    %s380 = sphi 0, %s378
    %s381 = sphi 0, %s380
    %s395 = sphi 0, %s381
    %s399 = sphi 0, %s399
    %s401 = sphi 0, %s399
    %s402 = sphi 0, %s401
    %s416 = sphi 0, %s402
    %s422 = sphi 0, %s424
    %s425 = sphi 0, %s422
    %s426 = sphi 0, %s425
    %s442 = sphi 0, %s426
  $region4: #{tpu_custom_call.1} parent=0 // loop_header_branch
    %28 = sbr.rel (%p26) target = $region8
  $region5: #{tpu_custom_call.1} parent=0 // loop_body
    %s30 = ssub.s32 %s25, 1
    %s31 = ssub.s32 %s25, 2
    %s32 = sadd.s32 %s25, 1
    %s33 = ssub.s32 %s25, %s32
    %p34 = scmp.eq.s32.totalorder %s33, 0
    %s36 = sadd.s32 %s35, 1
    %s37 = scalar_select %p34, %s35, %s36
    %p40 = pneg %p34
    %p41 = scmp.eq.s32.totalorder %s25, 1
    %p42 = por %p40, %p41
    %p43 = scmp.ne.s32.totalorder %s35, %s38
    %p44 = scmp.eq.s32.totalorder %s25, 0
    %p45 = por %p43, %p44
    %p46 = scmp.ne.s32.totalorder %s35, %s38
    %p47 = scmp.eq.s32.totalorder %s30, 1
    %p48 = por %p46, %p47
    %p49 = scmp.ne.s32.totalorder %s38, %s39
    %p50 = scmp.eq.s32.totalorder %s30, 0
    %p51 = por %p49, %p50
    %p52 = scmp.ne.s32.totalorder %s38, %s39
    %p53 = scmp.eq.s32.totalorder %s31, 1
    %p54 = por %p52, %p53
    %p56 = scmp.ne.s32.totalorder %s39, %s55
    %p57 = scmp.eq.s32.totalorder %s31, 0
    %p58 = por %p56, %p57
    %s59 = ssub.s32 %s25, %s32
    %p60 = scmp.eq.s32.totalorder %s59, 0
    %s62 = sadd.s32 %s61, 1
    %s63 = scalar_select %p60, %s61, %s62
    %p66 = pneg %p60
    %p67 = scmp.eq.s32.totalorder %s25, 1
    %p68 = por %p66, %p67
    %p69 = scmp.ne.s32.totalorder %s61, %s64
    %p70 = scmp.eq.s32.totalorder %s25, 0
    %p71 = por %p69, %p70
    %p72 = scmp.ne.s32.totalorder %s61, %s64
    %p73 = scmp.eq.s32.totalorder %s30, 1
    %p74 = por %p72, %p73
    %p75 = scmp.ne.s32.totalorder %s64, %s65
    %p76 = scmp.eq.s32.totalorder %s30, 0
    %p77 = por %p75, %p76
    %p78 = scmp.ne.s32.totalorder %s64, %s65
    %p79 = scmp.eq.s32.totalorder %s31, 1
    %p80 = por %p78, %p79
    %p82 = scmp.ne.s32.totalorder %s65, %s81
    %p83 = scmp.eq.s32.totalorder %s31, 0
    %p84 = por %p82, %p83
    %s85 = ssub.s32 %s25, %s32
    %p86 = scmp.eq.s32.totalorder %s85, 0
    %s88 = sadd.s32 %s87, 1
    %s89 = scalar_select %p86, %s87, %s88
    %p92 = pneg %p86
    %p93 = scmp.eq.s32.totalorder %s25, 1
    %p94 = por %p92, %p93
    %p95 = scmp.ne.s32.totalorder %s87, %s90
    %p96 = scmp.eq.s32.totalorder %s25, 0
    %p97 = por %p95, %p96
    %p98 = scmp.ne.s32.totalorder %s87, %s90
    %p99 = scmp.eq.s32.totalorder %s30, 1
    %p100 = por %p98, %p99
    %p101 = scmp.ne.s32.totalorder %s90, %s91
    %p102 = scmp.eq.s32.totalorder %s30, 0
    %p103 = por %p101, %p102
    %p104 = scmp.ne.s32.totalorder %s90, %s91
    %p105 = scmp.eq.s32.totalorder %s31, 1
    %p106 = por %p104, %p105
    %p108 = scmp.ne.s32.totalorder %s91, %s107
    %p109 = scmp.eq.s32.totalorder %s31, 0
    %p110 = por %p108, %p109
    %s111 = ssub.s32 %s25, %s32
    %p112 = scmp.eq.s32.totalorder %s111, 0
    %s114 = sadd.s32 %s113, 1
    %s115 = scalar_select %p112, %s113, %s114
    %p118 = pneg %p112
    %p119 = scmp.eq.s32.totalorder %s25, 1
    %p120 = por %p118, %p119
    %p121 = scmp.ne.s32.totalorder %s113, %s116
    %p122 = scmp.eq.s32.totalorder %s25, 0
    %p123 = por %p121, %p122
    %p124 = scmp.ne.s32.totalorder %s113, %s116
    %p125 = scmp.eq.s32.totalorder %s30, 1
    %p126 = por %p124, %p125
    %p127 = scmp.ne.s32.totalorder %s116, %s117
    %p128 = scmp.eq.s32.totalorder %s30, 0
    %p129 = por %p127, %p128
    %p130 = scmp.ne.s32.totalorder %s116, %s117
    %p131 = scmp.eq.s32.totalorder %s31, 1
    %p132 = por %p130, %p131
    %p134 = scmp.ne.s32.totalorder %s117, %s133
    %p135 = scmp.eq.s32.totalorder %s31, 0
    %p136 = por %p134, %p135
    %s137 = ssub.s32 %s25, %s32
    %p138 = scmp.eq.s32.totalorder %s137, 0
    %s140 = sadd.s32 %s139, 1
    %s141 = scalar_select %p138, %s139, %s140
    %p144 = pneg %p138
    %p145 = scmp.eq.s32.totalorder %s25, 1
    %p146 = por %p144, %p145
    %p147 = scmp.ne.s32.totalorder %s139, %s142
    %p148 = scmp.eq.s32.totalorder %s25, 0
    %p149 = por %p147, %p148
    %p150 = scmp.ne.s32.totalorder %s139, %s142
    %p151 = scmp.eq.s32.totalorder %s30, 1
    %p152 = por %p150, %p151
    %p153 = scmp.ne.s32.totalorder %s142, %s143
    %p154 = scmp.eq.s32.totalorder %s30, 0
    %p155 = por %p153, %p154
    %p156 = scmp.ne.s32.totalorder %s142, %s143
    %p157 = scmp.eq.s32.totalorder %s31, 1
    %p158 = por %p156, %p157
    %p160 = scmp.ne.s32.totalorder %s143, %s159
    %p161 = scmp.eq.s32.totalorder %s31, 0
    %p162 = por %p160, %p161
    %s163 = ssub.s32 %s25, %s32
    %p164 = scmp.eq.s32.totalorder %s163, 0
    %s166 = sadd.s32 %s165, 1
    %s167 = scalar_select %p164, %s165, %s166
    %p170 = pneg %p164
    %p171 = scmp.eq.s32.totalorder %s25, 1
    %p172 = por %p170, %p171
    %p173 = scmp.ne.s32.totalorder %s165, %s168
    %p174 = scmp.eq.s32.totalorder %s25, 0
    %p175 = por %p173, %p174
    %p176 = scmp.ne.s32.totalorder %s165, %s168
    %p177 = scmp.eq.s32.totalorder %s30, 1
    %p178 = por %p176, %p177
    %p179 = scmp.ne.s32.totalorder %s168, %s169
    %p180 = scmp.eq.s32.totalorder %s30, 0
    %p181 = por %p179, %p180
    %p182 = scmp.ne.s32.totalorder %s168, %s169
    %p183 = scmp.eq.s32.totalorder %s31, 1
    %p184 = por %p182, %p183
    %p186 = scmp.ne.s32.totalorder %s169, %s185
    %p187 = scmp.eq.s32.totalorder %s31, 0
    %p188 = por %p186, %p187
    %s190 = sadd.s32 %s189, 1
    %p193 = scmp.eq.s32.totalorder %s25, 1
    %p194 = scmp.ne.s32.totalorder %s189, %s191
    %p195 = scmp.eq.s32.totalorder %s25, 0
    %p196 = por %p194, %p195
    %p197 = scmp.ne.s32.totalorder %s189, %s191
    %p198 = scmp.eq.s32.totalorder %s30, 1
    %p199 = por %p197, %p198
    %p200 = scmp.ne.s32.totalorder %s191, %s192
    %p201 = scmp.eq.s32.totalorder %s30, 0
    %p202 = por %p200, %p201
    %p203 = scmp.ne.s32.totalorder %s191, %s192
    %p204 = scmp.eq.s32.totalorder %s31, 1
    %p205 = por %p203, %p204
    %p207 = scmp.ne.s32.totalorder %s192, %s206
    %p208 = scmp.eq.s32.totalorder %s31, 0
    %p209 = por %p207, %p208
    %s211 = sadd.s32 %s210, 1
    %p214 = scmp.eq.s32.totalorder %s25, 1
    %p215 = scmp.ne.s32.totalorder %s210, %s212
    %p216 = scmp.eq.s32.totalorder %s25, 0
    %p217 = por %p215, %p216
    %p218 = scmp.ne.s32.totalorder %s210, %s212
    %p219 = scmp.eq.s32.totalorder %s30, 1
    %p220 = por %p218, %p219
    %p221 = scmp.ne.s32.totalorder %s212, %s213
    %p222 = scmp.eq.s32.totalorder %s30, 0
    %p223 = por %p221, %p222
    %p224 = scmp.ne.s32.totalorder %s212, %s213
    %p225 = scmp.eq.s32.totalorder %s31, 1
    %p226 = por %p224, %p225
    %p228 = scmp.ne.s32.totalorder %s213, %s227
    %p229 = scmp.eq.s32.totalorder %s31, 0
    %p230 = por %p228, %p229
    %s232 = sadd.s32 %s231, 1
    %p235 = scmp.eq.s32.totalorder %s25, 1
    %p236 = scmp.ne.s32.totalorder %s231, %s233
    %p237 = scmp.eq.s32.totalorder %s25, 0
    %p238 = por %p236, %p237
    %p239 = scmp.ne.s32.totalorder %s231, %s233
    %p240 = scmp.eq.s32.totalorder %s30, 1
    %p241 = por %p239, %p240
    %p242 = scmp.ne.s32.totalorder %s233, %s234
    %p243 = scmp.eq.s32.totalorder %s30, 0
    %p244 = por %p242, %p243
    %p245 = scmp.ne.s32.totalorder %s233, %s234
    %p246 = scmp.eq.s32.totalorder %s31, 1
    %p247 = por %p245, %p246
    %p249 = scmp.ne.s32.totalorder %s234, %s248
    %p250 = scmp.eq.s32.totalorder %s31, 0
    %p251 = por %p249, %p250
    %s253 = sadd.s32 %s252, 1
    %p256 = scmp.eq.s32.totalorder %s25, 1
    %p257 = scmp.ne.s32.totalorder %s252, %s254
    %p258 = scmp.eq.s32.totalorder %s25, 0
    %p259 = por %p257, %p258
    %p260 = scmp.ne.s32.totalorder %s252, %s254
    %p261 = scmp.eq.s32.totalorder %s30, 1
    %p262 = por %p260, %p261
    %p263 = scmp.ne.s32.totalorder %s254, %s255
    %p264 = scmp.eq.s32.totalorder %s30, 0
    %p265 = por %p263, %p264
    %p266 = scmp.ne.s32.totalorder %s254, %s255
    %p267 = scmp.eq.s32.totalorder %s31, 1
    %p268 = por %p266, %p267
    %p270 = scmp.ne.s32.totalorder %s255, %s269
    %p271 = scmp.eq.s32.totalorder %s31, 0
    %p272 = por %p270, %p271
    %s274 = sadd.s32 %s273, 1
    %p277 = scmp.eq.s32.totalorder %s25, 1
    %p278 = scmp.ne.s32.totalorder %s273, %s275
    %p279 = scmp.eq.s32.totalorder %s25, 0
    %p280 = por %p278, %p279
    %p281 = scmp.ne.s32.totalorder %s273, %s275
    %p282 = scmp.eq.s32.totalorder %s30, 1
    %p283 = por %p281, %p282
    %p284 = scmp.ne.s32.totalorder %s275, %s276
    %p285 = scmp.eq.s32.totalorder %s30, 0
    %p286 = por %p284, %p285
    %p287 = scmp.ne.s32.totalorder %s275, %s276
    %p288 = scmp.eq.s32.totalorder %s31, 1
    %p289 = por %p287, %p288
    %p291 = scmp.ne.s32.totalorder %s276, %s290
    %p292 = scmp.eq.s32.totalorder %s31, 0
    %p293 = por %p291, %p292
    %s295 = sadd.s32 %s294, 1
    %p298 = scmp.eq.s32.totalorder %s25, 1
    %p299 = scmp.ne.s32.totalorder %s294, %s296
    %p300 = scmp.eq.s32.totalorder %s25, 0
    %p301 = por %p299, %p300
    %p302 = scmp.ne.s32.totalorder %s294, %s296
    %p303 = scmp.eq.s32.totalorder %s30, 1
    %p304 = por %p302, %p303
    %p305 = scmp.ne.s32.totalorder %s296, %s297
    %p306 = scmp.eq.s32.totalorder %s30, 0
    %p307 = por %p305, %p306
    %p308 = scmp.ne.s32.totalorder %s296, %s297
    %p309 = scmp.eq.s32.totalorder %s31, 1
    %p310 = por %p308, %p309
    %p312 = scmp.ne.s32.totalorder %s297, %s311
    %p313 = scmp.eq.s32.totalorder %s31, 0
    %p314 = por %p312, %p313
    %s316 = sadd.s32 %s315, 1
    %p319 = scmp.eq.s32.totalorder %s25, 1
    %p320 = scmp.ne.s32.totalorder %s315, %s317
    %p321 = scmp.eq.s32.totalorder %s25, 0
    %p322 = por %p320, %p321
    %p323 = scmp.ne.s32.totalorder %s315, %s317
    %p324 = scmp.eq.s32.totalorder %s30, 1
    %p325 = por %p323, %p324
    %p326 = scmp.ne.s32.totalorder %s317, %s318
    %p327 = scmp.eq.s32.totalorder %s30, 0
    %p328 = por %p326, %p327
    %p329 = scmp.ne.s32.totalorder %s317, %s318
    %p330 = scmp.eq.s32.totalorder %s31, 1
    %p331 = por %p329, %p330
    %p333 = scmp.ne.s32.totalorder %s318, %s332
    %p334 = scmp.eq.s32.totalorder %s31, 0
    %p335 = por %p333, %p334
    %s337 = sadd.s32 %s336, 1
    %p340 = scmp.eq.s32.totalorder %s25, 1
    %p341 = scmp.ne.s32.totalorder %s336, %s338
    %p342 = scmp.eq.s32.totalorder %s25, 0
    %p343 = por %p341, %p342
    %p344 = scmp.ne.s32.totalorder %s336, %s338
    %p345 = scmp.eq.s32.totalorder %s30, 1
    %p346 = por %p344, %p345
    %p347 = scmp.ne.s32.totalorder %s338, %s339
    %p348 = scmp.eq.s32.totalorder %s30, 0
    %p349 = por %p347, %p348
    %p350 = scmp.ne.s32.totalorder %s338, %s339
    %p351 = scmp.eq.s32.totalorder %s31, 1
    %p352 = por %p350, %p351
    %p354 = scmp.ne.s32.totalorder %s339, %s353
    %p355 = scmp.eq.s32.totalorder %s31, 0
    %p356 = por %p354, %p355
    %s358 = sadd.s32 %s357, 1
    %p361 = scmp.eq.s32.totalorder %s25, 1
    %p362 = scmp.ne.s32.totalorder %s357, %s359
    %p363 = scmp.eq.s32.totalorder %s25, 0
    %p364 = por %p362, %p363
    %p365 = scmp.ne.s32.totalorder %s357, %s359
    %p366 = scmp.eq.s32.totalorder %s30, 1
    %p367 = por %p365, %p366
    %p368 = scmp.ne.s32.totalorder %s359, %s360
    %p369 = scmp.eq.s32.totalorder %s30, 0
    %p370 = por %p368, %p369
    %p371 = scmp.ne.s32.totalorder %s359, %s360
    %p372 = scmp.eq.s32.totalorder %s31, 1
    %p373 = por %p371, %p372
    %p375 = scmp.ne.s32.totalorder %s360, %s374
    %p376 = scmp.eq.s32.totalorder %s31, 0
    %p377 = por %p375, %p376
    %s379 = sadd.s32 %s378, 1
    %p382 = scmp.eq.s32.totalorder %s25, 1
    %p383 = scmp.ne.s32.totalorder %s378, %s380
    %p384 = scmp.eq.s32.totalorder %s25, 0
    %p385 = por %p383, %p384
    %p386 = scmp.ne.s32.totalorder %s378, %s380
    %p387 = scmp.eq.s32.totalorder %s30, 1
    %p388 = por %p386, %p387
    %p389 = scmp.ne.s32.totalorder %s380, %s381
    %p390 = scmp.eq.s32.totalorder %s30, 0
    %p391 = por %p389, %p390
    %p392 = scmp.ne.s32.totalorder %s380, %s381
    %p393 = scmp.eq.s32.totalorder %s31, 1
    %p394 = por %p392, %p393
    %p396 = scmp.ne.s32.totalorder %s381, %s395
    %p397 = scmp.eq.s32.totalorder %s31, 0
    %p398 = por %p396, %p397
    %s400 = sadd.s32 %s399, 1
    %p403 = scmp.eq.s32.totalorder %s25, 1
    %p404 = scmp.ne.s32.totalorder %s399, %s401
    %p405 = scmp.eq.s32.totalorder %s25, 0
    %p406 = por %p404, %p405
    %p407 = scmp.ne.s32.totalorder %s399, %s401
    %p408 = scmp.eq.s32.totalorder %s30, 1
    %p409 = por %p407, %p408
    %p410 = scmp.ne.s32.totalorder %s401, %s402
    %p411 = scmp.eq.s32.totalorder %s30, 0
    %p412 = por %p410, %p411
    %p413 = scmp.ne.s32.totalorder %s401, %s402
    %p414 = scmp.eq.s32.totalorder %s31, 1
    %p415 = por %p413, %p414
    %p417 = scmp.ne.s32.totalorder %s402, %s416
    %p418 = scmp.eq.s32.totalorder %s31, 0
    %p419 = por %p417, %p418
    %s420 = ssub.s32 %s25, %s32
    %p421 = scmp.eq.s32.totalorder %s420, 0
    %s423 = sadd.s32 %s422, 1
    %s424 = scalar_select %p421, %s422, %s423
    %p427 = pneg %p421
    %p428 = scmp.eq.s32.totalorder %s25, 1
    %p429 = por %p427, %p428
    %p430 = scmp.ne.s32.totalorder %s422, %s425
    %p431 = scmp.eq.s32.totalorder %s25, 0
    %p432 = por %p430, %p431
    %p433 = scmp.ne.s32.totalorder %s422, %s425
    %p434 = scmp.eq.s32.totalorder %s30, 1
    %p435 = por %p433, %p434
    %p436 = scmp.ne.s32.totalorder %s425, %s426
    %p437 = scmp.eq.s32.totalorder %s30, 0
    %p438 = por %p436, %p437
    %p439 = scmp.ne.s32.totalorder %s425, %s426
    %p440 = scmp.eq.s32.totalorder %s31, 1
    %p441 = por %p439, %p440
    %p443 = scmp.ne.s32.totalorder %s426, %s442
    %p444 = scmp.eq.s32.totalorder %s31, 0
    %p445 = por %p443, %p444
    %p446 = scmp.le.s32.totalorder 1, %s25
    %p447 = scmp.lt.s32.totalorder %s25, 3
    %p448 = pnand %p446, %p447
    %p449 = pneg %p448
    // Predicated region
    $region9: #{tpu_custom_call.1} parent=5 // pred_check
      _
    $region10: #{tpu_custom_call.1} parent=5 // pred_check_branch
      %451 = sbr.rel (%p448) target = $region12
    $region11: #{tpu_custom_call.1} parent=5 // pred_region
      %s452 = ssub.s32 %s25, 1
      // Predicated region
      $region13: #{tpu_custom_call.1} parent=11 // pred_check
        %p453 = pneg %p202
      $region14: #{tpu_custom_call.1} parent=11 // pred_check_branch
        %455 = sbr.rel (%p453) target = $region16
      $region15: #{tpu_custom_call.1} parent=11 // pred_region
        _
      $region16: #{tpu_custom_call.1} parent=11 // pred_fallthru
        _
      // Predicated region
      $region17: #{tpu_custom_call.1} parent=11 // pred_check
        %p456 = pneg %p223
      $region18: #{tpu_custom_call.1} parent=11 // pred_check_branch
        %458 = sbr.rel (%p456) target = $region20
      $region19: #{tpu_custom_call.1} parent=11 // pred_region
        _
      $region20: #{tpu_custom_call.1} parent=11 // pred_fallthru
        _
      // Predicated region
      $region21: #{tpu_custom_call.1} parent=11 // pred_check
        %p459 = pneg %p244
      $region22: #{tpu_custom_call.1} parent=11 // pred_check_branch
        %461 = sbr.rel (%p459) target = $region24
      $region23: #{tpu_custom_call.1} parent=11 // pred_region
        _
      $region24: #{tpu_custom_call.1} parent=11 // pred_fallthru
        _
      // Predicated region
      $region25: #{tpu_custom_call.1} parent=11 // pred_check
        %p462 = pneg %p265
      $region26: #{tpu_custom_call.1} parent=11 // pred_check_branch
        %464 = sbr.rel (%p462) target = $region28
      $region27: #{tpu_custom_call.1} parent=11 // pred_region
        _
      $region28: #{tpu_custom_call.1} parent=11 // pred_fallthru
        _
      // Predicated region
      $region29: #{tpu_custom_call.1} parent=11 // pred_check
        %p465 = pneg %p286
      $region30: #{tpu_custom_call.1} parent=11 // pred_check_branch
        %467 = sbr.rel (%p465) target = $region32
      $region31: #{tpu_custom_call.1} parent=11 // pred_region
        _
      $region32: #{tpu_custom_call.1} parent=11 // pred_fallthru
        _
      // Predicated region
      $region33: #{tpu_custom_call.1} parent=11 // pred_check
        %p468 = pneg %p307
      $region34: #{tpu_custom_call.1} parent=11 // pred_check_branch
        %470 = sbr.rel (%p468) target = $region36
      $region35: #{tpu_custom_call.1} parent=11 // pred_region
        _
      $region36: #{tpu_custom_call.1} parent=11 // pred_fallthru
        _
      // Predicated region
      $region37: #{tpu_custom_call.1} parent=11 // pred_check
        %p471 = pneg %p328
      $region38: #{tpu_custom_call.1} parent=11 // pred_check_branch
        %473 = sbr.rel (%p471) target = $region40
      $region39: #{tpu_custom_call.1} parent=11 // pred_region
        _
      $region40: #{tpu_custom_call.1} parent=11 // pred_fallthru
        _
      // Predicated region
      $region41: #{tpu_custom_call.1} parent=11 // pred_check
        %p474 = pneg %p349
      $region42: #{tpu_custom_call.1} parent=11 // pred_check_branch
        %476 = sbr.rel (%p474) target = $region44
      $region43: #{tpu_custom_call.1} parent=11 // pred_region
        _
      $region44: #{tpu_custom_call.1} parent=11 // pred_fallthru
        _
      // Predicated region
      $region45: #{tpu_custom_call.1} parent=11 // pred_check
        %p477 = pneg %p370
      $region46: #{tpu_custom_call.1} parent=11 // pred_check_branch
        %479 = sbr.rel (%p477) target = $region48
      $region47: #{tpu_custom_call.1} parent=11 // pred_region
        _
      $region48: #{tpu_custom_call.1} parent=11 // pred_fallthru
        _
      // Predicated region
      $region49: #{tpu_custom_call.1} parent=11 // pred_check
        %p480 = pneg %p391
      $region50: #{tpu_custom_call.1} parent=11 // pred_check_branch
        %482 = sbr.rel (%p480) target = $region52
      $region51: #{tpu_custom_call.1} parent=11 // pred_region
        _
      $region52: #{tpu_custom_call.1} parent=11 // pred_fallthru
        _
      // Predicated region
      $region53: #{tpu_custom_call.1} parent=11 // pred_check
        %p483 = pneg %p412
      $region54: #{tpu_custom_call.1} parent=11 // pred_check_branch
        %485 = sbr.rel (%p483) target = $region56
      $region55: #{tpu_custom_call.1} parent=11 // pred_region
        _
      $region56: #{tpu_custom_call.1} parent=11 // pred_fallthru
        _
    $region12: #{tpu_custom_call.1} parent=5 // pred_fallthru
      _
    %p486 = scmp.lt.s32.totalorder %s25, 2
    // Predicated region
    $region57: #{tpu_custom_call.1} parent=5 // pred_check
      %p487 = pneg %p486
    $region58: #{tpu_custom_call.1} parent=5 // pred_check_branch
      %489 = sbr.rel (%p487) target = $region60
    $region59: #{tpu_custom_call.1} parent=5 // pred_region
      // Predicated region
      $region61: #{tpu_custom_call.1} parent=59 // pred_check
        %p490 = pneg %p45
      $region62: #{tpu_custom_call.1} parent=59 // pred_check_branch
        %492 = sbr.rel (%p490) target = $region64
      $region63: #{tpu_custom_call.1} parent=59 // pred_region
        %s493 = smul.u32 64, %s25
        %p494 = scmp.lt.s32.totalorder %s493, 127
        %s495 = scalar_select %p494, %s493, 127
        %s496 = smul.addr %s495, 4
        %s497 = scalar_lea.vmem %s0, %s496
        %s498 = smul.u32 64, %s25
      $region64: #{tpu_custom_call.1} parent=59 // pred_fallthru
        _
      // Predicated region
      $region65: #{tpu_custom_call.1} parent=59 // pred_check
        %p499 = pneg %p71
      $region66: #{tpu_custom_call.1} parent=59 // pred_check_branch
        %501 = sbr.rel (%p499) target = $region68
      $region67: #{tpu_custom_call.1} parent=59 // pred_region
        %s502 = smul.u32 64, %s25
        %p503 = scmp.lt.s32.totalorder %s502, 127
        %s504 = scalar_select %p503, %s502, 127
        %s505 = smul.addr %s504, 4
        %s506 = scalar_lea.vmem %s1, %s505
        %s507 = smul.u32 64, %s25
      $region68: #{tpu_custom_call.1} parent=59 // pred_fallthru
        _
      // Predicated region
      $region69: #{tpu_custom_call.1} parent=59 // pred_check
        %p508 = pneg %p97
      $region70: #{tpu_custom_call.1} parent=59 // pred_check_branch
        %510 = sbr.rel (%p508) target = $region72
      $region71: #{tpu_custom_call.1} parent=59 // pred_region
        %s511 = smul.u32 64, %s25
        %p512 = scmp.lt.s32.totalorder %s511, 127
        %s513 = scalar_select %p512, %s511, 127
        %s514 = smul.addr %s513, 4
        %s515 = scalar_lea.vmem %s2, %s514
        %s516 = smul.u32 64, %s25
      $region72: #{tpu_custom_call.1} parent=59 // pred_fallthru
        _
      // Predicated region
      $region73: #{tpu_custom_call.1} parent=59 // pred_check
        %p517 = pneg %p123
      $region74: #{tpu_custom_call.1} parent=59 // pred_check_branch
        %519 = sbr.rel (%p517) target = $region76
      $region75: #{tpu_custom_call.1} parent=59 // pred_region
        %s520 = smul.u32 64, %s25
        %p521 = scmp.lt.s32.totalorder %s520, 127
        %s522 = scalar_select %p521, %s520, 127
        %s523 = smul.addr %s522, 4
        %s524 = scalar_lea.vmem %s3, %s523
        %s525 = smul.u32 64, %s25
      $region76: #{tpu_custom_call.1} parent=59 // pred_fallthru
        _
      // Predicated region
      $region77: #{tpu_custom_call.1} parent=59 // pred_check
        %p526 = pneg %p149
      $region78: #{tpu_custom_call.1} parent=59 // pred_check_branch
        %528 = sbr.rel (%p526) target = $region80
      $region79: #{tpu_custom_call.1} parent=59 // pred_region
        %s529 = smul.u32 64, %s25
        %p530 = scmp.lt.s32.totalorder %s529, 127
        %s531 = scalar_select %p530, %s529, 127
        %s532 = smul.addr %s531, 4
        %s533 = scalar_lea.vmem %s4, %s532
        %s534 = smul.u32 64, %s25
      $region80: #{tpu_custom_call.1} parent=59 // pred_fallthru
        _
      // Predicated region
      $region81: #{tpu_custom_call.1} parent=59 // pred_check
        %p535 = pneg %p175
      $region82: #{tpu_custom_call.1} parent=59 // pred_check_branch
        %537 = sbr.rel (%p535) target = $region84
      $region83: #{tpu_custom_call.1} parent=59 // pred_region
        %s538 = smul.u32 64, %s25
        %p539 = scmp.lt.s32.totalorder %s538, 127
        %s540 = scalar_select %p539, %s538, 127
        %s541 = smul.addr %s540, 3
        %s542 = smul.addr %s541, 4
        %s543 = scalar_lea.vmem %s5, %s542
        %s544 = smul.u32 64, %s25
      $region84: #{tpu_custom_call.1} parent=59 // pred_fallthru
        _
    $region60: #{tpu_custom_call.1} parent=5 // pred_fallthru
      _
    %p545 = scmp.le.s32.totalorder 1, %s25
    %p546 = scmp.lt.s32.totalorder %s25, 3
    %p547 = pnand %p545, %p546
    %p548 = pneg %p547
    // Predicated region
    $region85: #{tpu_custom_call.1} parent=5 // pred_check
      _
    $region86: #{tpu_custom_call.1} parent=5 // pred_check_branch
      %550 = sbr.rel (%p547) target = $region88
    $region87: #{tpu_custom_call.1} parent=5 // pred_region
      %s551 = ssub.s32 %s25, 1
      %s552 = smul.u32 64, %s30
      %p553 = scmp.lt.s32.totalorder %s552, 127
      %s554 = scalar_select %p553, %s552, 127
      %s555 = smul.addr %s554, 4
      %s556 = scalar_lea.vmem %s0, %s555
      %p557 = pneg %p51
      %p558 = pneg %p48
      %s559 = smul.u32 64, %s30
      %p560 = scmp.lt.s32.totalorder %s559, 127
      %s561 = scalar_select %p560, %s559, 127
      %s562 = smul.addr %s561, 4
      %s563 = scalar_lea.vmem %s1, %s562
      %p564 = pneg %p77
      %p565 = pneg %p74
      %s566 = smul.u32 64, %s30
      %p567 = scmp.lt.s32.totalorder %s566, 127
      %s568 = scalar_select %p567, %s566, 127
      %s569 = smul.addr %s568, 4
      %s570 = scalar_lea.vmem %s2, %s569
      %p571 = pneg %p103
      %p572 = pneg %p100
      %s573 = smul.u32 64, %s30
      %p574 = scmp.lt.s32.totalorder %s573, 127
      %s575 = scalar_select %p574, %s573, 127
      %s576 = smul.addr %s575, 4
      %s577 = scalar_lea.vmem %s3, %s576
      %p578 = pneg %p129
      %p579 = pneg %p126
      %s580 = smul.u32 64, %s30
      %p581 = scmp.lt.s32.totalorder %s580, 127
      %s582 = scalar_select %p581, %s580, 127
      %s583 = smul.addr %s582, 4
      %s584 = scalar_lea.vmem %s4, %s583
      %p585 = pneg %p155
      %p586 = pneg %p152
      %s587 = smul.u32 64, %s30
      %p588 = scmp.lt.s32.totalorder %s587, 127
      %s589 = scalar_select %p588, %s587, 127
      %s590 = smul.addr %s589, 3
      %s591 = smul.addr %s590, 4
      %s592 = scalar_lea.vmem %s5, %s591
      %p593 = pneg %p181
      %p594 = pneg %p178
      %p595 = pneg %p202
      %p596 = pneg %p199
      %p597 = pneg %p223
      %p598 = pneg %p220
      %p599 = pneg %p244
      %p600 = pneg %p241
      %p601 = pneg %p265
      %p602 = pneg %p262
      %p603 = pneg %p286
      %p604 = pneg %p283
      %p605 = pneg %p307
      %p606 = pneg %p304
      %p607 = pneg %p328
      %p608 = pneg %p325
      %p609 = pneg %p349
      %p610 = pneg %p346
      %p611 = pneg %p370
      %p612 = pneg %p367
      %p613 = pneg %p391
      %p614 = pneg %p388
      %p615 = pneg %p412
      %p616 = pneg %p409
      %p617 = pneg %p438
      %p618 = pneg %p435
      %s619 = smul.u32 64, %s30
      %p620 = scmp.lt.s32.totalorder %s619, 127
      %s621 = scalar_select %p620, %s619, 127
      %s622 = smul.addr %s621, 8
      %s623 = scalar_lea.vmem %s17, %s622
      %s624 = smul.u32 64, %s30
      %p625 = scmp.lt.s32.totalorder %s624, 127
      %s626 = scalar_select %p625, %s624, 127
      %s627 = smul.addr %s626, 4
      %s628 = scalar_lea.vmem %s0, %s627
      %s629 = smul.u32 64, %s30
      %s630 = smul.u32 64, %s30
      %p631 = scmp.lt.s32.totalorder %s630, 127
      %s632 = scalar_select %p631, %s630, 127
      %s633 = smul.addr %s632, 4
      %s634 = scalar_lea.vmem %s1, %s633
      %s635 = smul.u32 64, %s30
      %s636 = smul.u32 64, %s30
      %p637 = scmp.lt.s32.totalorder %s636, 127
      %s638 = scalar_select %p637, %s636, 127
      %s639 = smul.addr %s638, 4
      %s640 = scalar_lea.vmem %s2, %s639
      %s641 = smul.u32 64, %s30
      %s642 = smul.u32 64, %s30
      %p643 = scmp.lt.s32.totalorder %s642, 127
      %s644 = scalar_select %p643, %s642, 127
      %s645 = smul.addr %s644, 4
      %s646 = scalar_lea.vmem %s3, %s645
      %s647 = smul.u32 64, %s30
      %s648 = smul.u32 64, %s30
      %p649 = scmp.lt.s32.totalorder %s648, 127
      %s650 = scalar_select %p649, %s648, 127
      %s651 = smul.addr %s650, 4
      %s652 = scalar_lea.vmem %s4, %s651
      %s653 = smul.u32 64, %s30
      %s654 = smul.u32 64, %s30
      %p655 = scmp.lt.s32.totalorder %s654, 127
      %s656 = scalar_select %p655, %s654, 127
      %s657 = smul.addr %s656, 3
      %s658 = smul.addr %s657, 4
      %s659 = scalar_lea.vmem %s5, %s658
      %s660 = smul.u32 64, %s30
      %s661 = smul.u32 64, %s30
      %p662 = scmp.lt.s32.totalorder %s661, 127
      %s663 = scalar_select %p662, %s661, 127
      %s664 = smul.addr %s663, 8
      %s665 = scalar_lea.vmem %s17, %s664
      %s666 = smul.u32 64, %s30
      %v668 = vld [vmem:[%s6] sm:$0xf]
      %v669 = vld [vmem:[%s6 + $0x4] sm:$0xf]
      %v670 = vld [vmem:[%s6 + $0x8] sm:$0xf]
      %v671 = vld [vmem:[%s6 + $0xc] sm:$0xf]
      %v672 = vld [vmem:[%s6 + $0x10] sm:$0xf]
      %v673 = vld [vmem:[%s6 + $0x14] sm:$0xf]
      %v674 = vld [vmem:[%s6 + $0x18] sm:$0xf]
      %v675 = vld [vmem:[%s6 + $0x1c] sm:$0xf]
      %v676 = vld [vmem:[%s628] sm:$0xf]
      %v677 = vld [vmem:[%s628 + $0x4] sm:$0xf]
      %v678 = vld [vmem:[%s628 + $0x8] sm:$0xf]
      %v679 = vld [vmem:[%s628 + $0xc] sm:$0xf]
      %v680 = vld [vmem:[%s628 + $0x10] sm:$0xf]
      %v681 = vld [vmem:[%s628 + $0x14] sm:$0xf]
      %v682 = vld [vmem:[%s628 + $0x18] sm:$0xf]
      %v683 = vld [vmem:[%s628 + $0x1c] sm:$0xf]
      %v684 = vld [vmem:[%s628 + $0x20] sm:$0xf]
      %v685 = vld [vmem:[%s628 + $0x24] sm:$0xf]
      %v686 = vld [vmem:[%s628 + $0x28] sm:$0xf]
      %v687 = vld [vmem:[%s628 + $0x2c] sm:$0xf]
      %v688 = vld [vmem:[%s628 + $0x30] sm:$0xf]
      %v689 = vld [vmem:[%s628 + $0x34] sm:$0xf]
      %v690 = vld [vmem:[%s628 + $0x38] sm:$0xf]
      %v691 = vld [vmem:[%s628 + $0x3c] sm:$0xf]
      %v692 = vld [vmem:[%s628 + $0x40] sm:$0xf]
      %v693 = vld [vmem:[%s628 + $0x44] sm:$0xf]
      %v694 = vld [vmem:[%s628 + $0x48] sm:$0xf]
      %v695 = vld [vmem:[%s628 + $0x4c] sm:$0xf]
      %v696 = vld [vmem:[%s628 + $0x50] sm:$0xf]
      %v697 = vld [vmem:[%s628 + $0x54] sm:$0xf]
      %v698 = vld [vmem:[%s628 + $0x58] sm:$0xf]
      %v699 = vld [vmem:[%s628 + $0x5c] sm:$0xf]
      %v700 = vld [vmem:[%s628 + $0x60] sm:$0xf]
      %v701 = vld [vmem:[%s628 + $0x64] sm:$0xf]
      %v702 = vld [vmem:[%s628 + $0x68] sm:$0xf]
      %v703 = vld [vmem:[%s628 + $0x6c] sm:$0xf]
      %v704 = vld [vmem:[%s628 + $0x70] sm:$0xf]
      %v705 = vld [vmem:[%s628 + $0x74] sm:$0xf]
      %v706 = vld [vmem:[%s628 + $0x78] sm:$0xf]
      %v707 = vld [vmem:[%s628 + $0x7c] sm:$0xf]
      %v708 = vld [vmem:[%s628 + $0x80] sm:$0xf]
      %v709 = vld [vmem:[%s628 + $0x84] sm:$0xf]
      %v710 = vld [vmem:[%s628 + $0x88] sm:$0xf]
      %v711 = vld [vmem:[%s628 + $0x8c] sm:$0xf]
      %v712 = vld [vmem:[%s628 + $0x90] sm:$0xf]
      %v713 = vld [vmem:[%s628 + $0x94] sm:$0xf]
      %v714 = vld [vmem:[%s628 + $0x98] sm:$0xf]
      %v715 = vld [vmem:[%s628 + $0x9c] sm:$0xf]
      %v716 = vld [vmem:[%s628 + $0xa0] sm:$0xf]
      %v717 = vld [vmem:[%s628 + $0xa4] sm:$0xf]
      %v718 = vld [vmem:[%s628 + $0xa8] sm:$0xf]
      %v719 = vld [vmem:[%s628 + $0xac] sm:$0xf]
      %v720 = vld [vmem:[%s628 + $0xb0] sm:$0xf]
      %v721 = vld [vmem:[%s628 + $0xb4] sm:$0xf]
      %v722 = vld [vmem:[%s628 + $0xb8] sm:$0xf]
      %v723 = vld [vmem:[%s628 + $0xbc] sm:$0xf]
      %v724 = vld [vmem:[%s628 + $0xc0] sm:$0xf]
      %v725 = vld [vmem:[%s628 + $0xc4] sm:$0xf]
      %v726 = vld [vmem:[%s628 + $0xc8] sm:$0xf]
      %v727 = vld [vmem:[%s628 + $0xcc] sm:$0xf]
      %v728 = vld [vmem:[%s628 + $0xd0] sm:$0xf]
      %v729 = vld [vmem:[%s628 + $0xd4] sm:$0xf]
      %v730 = vld [vmem:[%s628 + $0xd8] sm:$0xf]
      %v731 = vld [vmem:[%s628 + $0xdc] sm:$0xf]
      %v732 = vld [vmem:[%s628 + $0xe0] sm:$0xf]
      %v733 = vld [vmem:[%s628 + $0xe4] sm:$0xf]
      %v734 = vld [vmem:[%s628 + $0xe8] sm:$0xf]
      %v735 = vld [vmem:[%s628 + $0xec] sm:$0xf]
      %v736 = vld [vmem:[%s628 + $0xf0] sm:$0xf]
      %v737 = vld [vmem:[%s628 + $0xf4] sm:$0xf]
      %v738 = vld [vmem:[%s628 + $0xf8] sm:$0xf]
      %v739 = vld [vmem:[%s628 + $0xfc] sm:$0xf]
      %v740 = vld [vmem:[%s634] sm:$0xf]
      %v741 = vld [vmem:[%s634 + $0x4] sm:$0xf]
      %v742 = vld [vmem:[%s634 + $0x8] sm:$0xf]
      %v743 = vld [vmem:[%s634 + $0xc] sm:$0xf]
      %v744 = vld [vmem:[%s634 + $0x10] sm:$0xf]
      %v745 = vld [vmem:[%s634 + $0x14] sm:$0xf]
      %v746 = vld [vmem:[%s634 + $0x18] sm:$0xf]
      %v747 = vld [vmem:[%s634 + $0x1c] sm:$0xf]
      %v748 = vld [vmem:[%s634 + $0x20] sm:$0xf]
      %v749 = vld [vmem:[%s634 + $0x24] sm:$0xf]
      %v750 = vld [vmem:[%s634 + $0x28] sm:$0xf]
      %v751 = vld [vmem:[%s634 + $0x2c] sm:$0xf]
      %v752 = vld [vmem:[%s634 + $0x30] sm:$0xf]
      %v753 = vld [vmem:[%s634 + $0x34] sm:$0xf]
      %v754 = vld [vmem:[%s634 + $0x38] sm:$0xf]
      %v755 = vld [vmem:[%s634 + $0x3c] sm:$0xf]
      %v756 = vld [vmem:[%s634 + $0x40] sm:$0xf]
      %v757 = vld [vmem:[%s634 + $0x44] sm:$0xf]
      %v758 = vld [vmem:[%s634 + $0x48] sm:$0xf]
      %v759 = vld [vmem:[%s634 + $0x4c] sm:$0xf]
      %v760 = vld [vmem:[%s634 + $0x50] sm:$0xf]
      %v761 = vld [vmem:[%s634 + $0x54] sm:$0xf]
      %v762 = vld [vmem:[%s634 + $0x58] sm:$0xf]
      %v763 = vld [vmem:[%s634 + $0x5c] sm:$0xf]
      %v764 = vld [vmem:[%s634 + $0x60] sm:$0xf]
      %v765 = vld [vmem:[%s634 + $0x64] sm:$0xf]
      %v766 = vld [vmem:[%s634 + $0x68] sm:$0xf]
      %v767 = vld [vmem:[%s634 + $0x6c] sm:$0xf]
      %v768 = vld [vmem:[%s634 + $0x70] sm:$0xf]
      %v769 = vld [vmem:[%s634 + $0x74] sm:$0xf]
      %v770 = vld [vmem:[%s634 + $0x78] sm:$0xf]
      %v771 = vld [vmem:[%s634 + $0x7c] sm:$0xf]
      %v772 = vld [vmem:[%s634 + $0x80] sm:$0xf]
      %v773 = vld [vmem:[%s634 + $0x84] sm:$0xf]
      %v774 = vld [vmem:[%s634 + $0x88] sm:$0xf]
      %v775 = vld [vmem:[%s634 + $0x8c] sm:$0xf]
      %v776 = vld [vmem:[%s634 + $0x90] sm:$0xf]
      %v777 = vld [vmem:[%s634 + $0x94] sm:$0xf]
      %v778 = vld [vmem:[%s634 + $0x98] sm:$0xf]
      %v779 = vld [vmem:[%s634 + $0x9c] sm:$0xf]
      %v780 = vld [vmem:[%s634 + $0xa0] sm:$0xf]
      %v781 = vld [vmem:[%s634 + $0xa4] sm:$0xf]
      %v782 = vld [vmem:[%s634 + $0xa8] sm:$0xf]
      %v783 = vld [vmem:[%s634 + $0xac] sm:$0xf]
      %v784 = vld [vmem:[%s634 + $0xb0] sm:$0xf]
      %v785 = vld [vmem:[%s634 + $0xb4] sm:$0xf]
      %v786 = vld [vmem:[%s634 + $0xb8] sm:$0xf]
      %v787 = vld [vmem:[%s634 + $0xbc] sm:$0xf]
      %v788 = vld [vmem:[%s634 + $0xc0] sm:$0xf]
      %v789 = vld [vmem:[%s634 + $0xc4] sm:$0xf]
      %v790 = vld [vmem:[%s634 + $0xc8] sm:$0xf]
      %v791 = vld [vmem:[%s634 + $0xcc] sm:$0xf]
      %v792 = vld [vmem:[%s634 + $0xd0] sm:$0xf]
      %v793 = vld [vmem:[%s634 + $0xd4] sm:$0xf]
      %v794 = vld [vmem:[%s634 + $0xd8] sm:$0xf]
      %v795 = vld [vmem:[%s634 + $0xdc] sm:$0xf]
      %v796 = vld [vmem:[%s634 + $0xe0] sm:$0xf]
      %v797 = vld [vmem:[%s634 + $0xe4] sm:$0xf]
      %v798 = vld [vmem:[%s634 + $0xe8] sm:$0xf]
      %v799 = vld [vmem:[%s634 + $0xec] sm:$0xf]
      %v800 = vld [vmem:[%s634 + $0xf0] sm:$0xf]
      %v801 = vld [vmem:[%s634 + $0xf4] sm:$0xf]
      %v802 = vld [vmem:[%s634 + $0xf8] sm:$0xf]
      %v803 = vld [vmem:[%s634 + $0xfc] sm:$0xf]
      %v868 = vunpack.c.l.b16 %v740
      %v869 = vunpack.c.l.b16 %v741
      %v870 = vunpack.c.l.b16 %v742
      %v871 = vunpack.c.l.b16 %v743
      %v872 = vunpack.c.l.b16 %v744
      %v873 = vunpack.c.l.b16 %v745
      %v874 = vunpack.c.l.b16 %v746
      %v875 = vunpack.c.l.b16 %v747
      %v876 = vunpack.c.l.b16 %v748
      %v877 = vunpack.c.l.b16 %v749
      %v878 = vunpack.c.l.b16 %v750
      %v879 = vunpack.c.l.b16 %v751
      %v880 = vunpack.c.l.b16 %v752
      %v881 = vunpack.c.l.b16 %v753
      %v882 = vunpack.c.l.b16 %v754
      %v883 = vunpack.c.l.b16 %v755
      %v884 = vunpack.c.l.b16 %v756
      %v885 = vunpack.c.l.b16 %v757
      %v886 = vunpack.c.l.b16 %v758
      %v887 = vunpack.c.l.b16 %v759
      %v888 = vunpack.c.l.b16 %v760
      %v889 = vunpack.c.l.b16 %v761
      %v890 = vunpack.c.l.b16 %v762
      %v891 = vunpack.c.l.b16 %v763
      %v892 = vunpack.c.l.b16 %v764
      %v893 = vunpack.c.l.b16 %v765
      %v894 = vunpack.c.l.b16 %v766
      %v895 = vunpack.c.l.b16 %v767
      %v896 = vunpack.c.l.b16 %v768
      %v897 = vunpack.c.l.b16 %v769
      %v898 = vunpack.c.l.b16 %v770
      %v899 = vunpack.c.l.b16 %v771
      %v900 = vunpack.c.l.b16 %v772
      %v901 = vunpack.c.l.b16 %v773
      %v902 = vunpack.c.l.b16 %v774
      %v903 = vunpack.c.l.b16 %v775
      %v904 = vunpack.c.l.b16 %v776
      %v905 = vunpack.c.l.b16 %v777
      %v906 = vunpack.c.l.b16 %v778
      %v907 = vunpack.c.l.b16 %v779
      %v908 = vunpack.c.l.b16 %v780
      %v909 = vunpack.c.l.b16 %v781
      %v910 = vunpack.c.l.b16 %v782
      %v911 = vunpack.c.l.b16 %v783
      %v912 = vunpack.c.l.b16 %v784
      %v913 = vunpack.c.l.b16 %v785
      %v914 = vunpack.c.l.b16 %v786
      %v915 = vunpack.c.l.b16 %v787
      %v916 = vunpack.c.l.b16 %v788
      %v917 = vunpack.c.l.b16 %v789
      %v918 = vunpack.c.l.b16 %v790
      %v919 = vunpack.c.l.b16 %v791
      %v920 = vunpack.c.l.b16 %v792
      %v921 = vunpack.c.l.b16 %v793
      %v922 = vunpack.c.l.b16 %v794
      %v923 = vunpack.c.l.b16 %v795
      %v924 = vunpack.c.l.b16 %v796
      %v925 = vunpack.c.l.b16 %v797
      %v926 = vunpack.c.l.b16 %v798
      %v927 = vunpack.c.l.b16 %v799
      %v928 = vunpack.c.l.b16 %v800
      %v929 = vunpack.c.l.b16 %v801
      %v930 = vunpack.c.l.b16 %v802
      %v931 = vunpack.c.l.b16 %v803
      %v932 = vpack.c.b16 %v869, %v868
      %v933 = vpack.c.b16 %v871, %v870
      %v934 = vpack.c.b16 %v873, %v872
      %v935 = vpack.c.b16 %v875, %v874
      %v936 = vpack.c.b16 %v877, %v876
      %v937 = vpack.c.b16 %v879, %v878
      %v938 = vpack.c.b16 %v881, %v880
      %v939 = vpack.c.b16 %v883, %v882
      %v940 = vpack.c.b16 %v885, %v884
      %v941 = vpack.c.b16 %v887, %v886
      %v942 = vpack.c.b16 %v889, %v888
      %v943 = vpack.c.b16 %v891, %v890
      %v944 = vpack.c.b16 %v893, %v892
      %v945 = vpack.c.b16 %v895, %v894
      %v946 = vpack.c.b16 %v897, %v896
      %v947 = vpack.c.b16 %v899, %v898
      %v948 = vpack.c.b16 %v901, %v900
      %v949 = vpack.c.b16 %v903, %v902
      %v950 = vpack.c.b16 %v905, %v904
      %v951 = vpack.c.b16 %v907, %v906
      %v952 = vpack.c.b16 %v909, %v908
      %v953 = vpack.c.b16 %v911, %v910
      %v954 = vpack.c.b16 %v913, %v912
      %v955 = vpack.c.b16 %v915, %v914
      %v956 = vpack.c.b16 %v917, %v916
      %v957 = vpack.c.b16 %v919, %v918
      %v958 = vpack.c.b16 %v921, %v920
      %v959 = vpack.c.b16 %v923, %v922
      %v960 = vpack.c.b16 %v925, %v924
      %v961 = vpack.c.b16 %v927, %v926
      %v962 = vpack.c.b16 %v929, %v928
      %v963 = vpack.c.b16 %v931, %v930
      %v968 = vunpack.c.l.b16 %v672
      %v969 = vunpack.c.l.b16 %v673
      %v970 = vunpack.c.l.b16 %v674
      %v971 = vunpack.c.l.b16 %v675
      %v972 = vpack.c.b16 %v969, %v968
      %v973 = vpack.c.b16 %v971, %v970
      %vm976 = vcmask 261120
      %v978 = vsel %vm976, %v932, 0
      %v981 = vsel %vm976, %v933, 0
      %v984 = vsel %vm976, %v934, 0
      %v987 = vsel %vm976, %v935, 0
      %v990 = vsel %vm976, %v936, 0
      %v993 = vsel %vm976, %v937, 0
      %v996 = vsel %vm976, %v938, 0
      %v999 = vsel %vm976, %v939, 0
      %v1002 = vsel %vm976, %v940, 0
      %v1005 = vsel %vm976, %v941, 0
      %v1008 = vsel %vm976, %v942, 0
      %v1011 = vsel %vm976, %v943, 0
      %v1014 = vsel %vm976, %v944, 0
      %v1017 = vsel %vm976, %v945, 0
      %v1020 = vsel %vm976, %v946, 0
      %v1023 = vsel %vm976, %v947, 0
      %v1026 = vsel %vm976, %v948, 0
      %v1029 = vsel %vm976, %v949, 0
      %v1032 = vsel %vm976, %v950, 0
      %v1035 = vsel %vm976, %v951, 0
      %v1038 = vsel %vm976, %v952, 0
      %v1041 = vsel %vm976, %v953, 0
      %v1044 = vsel %vm976, %v954, 0
      %v1047 = vsel %vm976, %v955, 0
      %v1050 = vsel %vm976, %v956, 0
      %v1053 = vsel %vm976, %v957, 0
      %v1056 = vsel %vm976, %v958, 0
      %v1059 = vsel %vm976, %v959, 0
      %v1062 = vsel %vm976, %v960, 0
      %v1065 = vsel %vm976, %v961, 0
      %v1068 = vsel %vm976, %v962, 0
      %v1071 = vsel %vm976, %v963, 0
      %1073 = vmatpush.bf16.msra.mxu0 0
      %1074 = vmatpush.bf16.msra.mxu0 0
      %1075 = vmatpush.bf16.msra.mxu0 0
      %1076 = vmatpush.bf16.msra.mxu0 0
      %1077 = vmatpush.bf16.msra.mxu0 0
      %1078 = vmatpush.bf16.msra.mxu0 0
      %1079 = vmatpush.bf16.msra.mxu0 %v973
      %1080 = vmatpush.bf16.msra.mxu0 %v972
      %1081 = vmatmul.bf16.gmra.mxu0 %v978
      %v1082 = vpop.f32.mrf.mxu0
      %v1083 = vadd.f32 0.0, %v1082
      %v1084 = vpop.f32.mrf.mxu0
      %v1085 = vadd.f32 0.0, %v1084
      %1086 = vmatmul.bf16.gmra.mxu0 %v981
      %v1087 = vpop.f32.mrf.mxu0
      %v1088 = vadd.f32 0.0, %v1087
      %v1089 = vpop.f32.mrf.mxu0
      %v1090 = vadd.f32 0.0, %v1089
      %1091 = vmatmul.bf16.gmra.mxu0 %v984
      %v1092 = vpop.f32.mrf.mxu0
      %v1093 = vadd.f32 0.0, %v1092
      %v1094 = vpop.f32.mrf.mxu0
      %v1095 = vadd.f32 0.0, %v1094
      %1096 = vmatmul.bf16.gmra.mxu0 %v987
      %v1097 = vpop.f32.mrf.mxu0
      %v1098 = vadd.f32 0.0, %v1097
      %v1099 = vpop.f32.mrf.mxu0
      %v1100 = vadd.f32 0.0, %v1099
      %1101 = vmatmul.bf16.gmra.mxu0 %v990
      %v1102 = vpop.f32.mrf.mxu0
      %v1103 = vadd.f32 0.0, %v1102
      %v1104 = vpop.f32.mrf.mxu0
      %v1105 = vadd.f32 0.0, %v1104
      %1106 = vmatmul.bf16.gmra.mxu0 %v993
      %v1107 = vpop.f32.mrf.mxu0
      %v1108 = vadd.f32 0.0, %v1107
      %v1109 = vpop.f32.mrf.mxu0
      %v1110 = vadd.f32 0.0, %v1109
      %1111 = vmatmul.bf16.gmra.mxu0 %v996
      %v1112 = vpop.f32.mrf.mxu0
      %v1113 = vadd.f32 0.0, %v1112
      %v1114 = vpop.f32.mrf.mxu0
      %v1115 = vadd.f32 0.0, %v1114
      %1116 = vmatmul.bf16.gmra.mxu0 %v999
      %v1117 = vpop.f32.mrf.mxu0
      %v1118 = vadd.f32 0.0, %v1117
      %v1119 = vpop.f32.mrf.mxu0
      %v1120 = vadd.f32 0.0, %v1119
      %1121 = vmatmul.bf16.gmra.mxu0 %v1002
      %v1122 = vpop.f32.mrf.mxu0
      %v1123 = vadd.f32 0.0, %v1122
      %v1124 = vpop.f32.mrf.mxu0
      %v1125 = vadd.f32 0.0, %v1124
      %1126 = vmatmul.bf16.gmra.mxu0 %v1005
      %v1127 = vpop.f32.mrf.mxu0
      %v1128 = vadd.f32 0.0, %v1127
      %v1129 = vpop.f32.mrf.mxu0
      %v1130 = vadd.f32 0.0, %v1129
      %1131 = vmatmul.bf16.gmra.mxu0 %v1008
      %v1132 = vpop.f32.mrf.mxu0
      %v1133 = vadd.f32 0.0, %v1132
      %v1134 = vpop.f32.mrf.mxu0
      %v1135 = vadd.f32 0.0, %v1134
      %1136 = vmatmul.bf16.gmra.mxu0 %v1011
      %v1137 = vpop.f32.mrf.mxu0
      %v1138 = vadd.f32 0.0, %v1137
      %v1139 = vpop.f32.mrf.mxu0
      %v1140 = vadd.f32 0.0, %v1139
      %1141 = vmatmul.bf16.gmra.mxu0 %v1014
      %v1142 = vpop.f32.mrf.mxu0
      %v1143 = vadd.f32 0.0, %v1142
      %v1144 = vpop.f32.mrf.mxu0
      %v1145 = vadd.f32 0.0, %v1144
      %1146 = vmatmul.bf16.gmra.mxu0 %v1017
      %v1147 = vpop.f32.mrf.mxu0
      %v1148 = vadd.f32 0.0, %v1147
      %v1149 = vpop.f32.mrf.mxu0
      %v1150 = vadd.f32 0.0, %v1149
      %1151 = vmatmul.bf16.gmra.mxu0 %v1020
      %v1152 = vpop.f32.mrf.mxu0
      %v1153 = vadd.f32 0.0, %v1152
      %v1154 = vpop.f32.mrf.mxu0
      %v1155 = vadd.f32 0.0, %v1154
      %1156 = vmatmul.bf16.gmra.mxu0 %v1023
      %v1157 = vpop.f32.mrf.mxu0
      %v1158 = vadd.f32 0.0, %v1157
      %v1159 = vpop.f32.mrf.mxu0
      %v1160 = vadd.f32 0.0, %v1159
      %1161 = vmatmul.bf16.gmra.mxu0 %v1026
      %v1162 = vpop.f32.mrf.mxu0
      %v1163 = vadd.f32 0.0, %v1162
      %v1164 = vpop.f32.mrf.mxu0
      %v1165 = vadd.f32 0.0, %v1164
      %1166 = vmatmul.bf16.gmra.mxu0 %v1029
      %v1167 = vpop.f32.mrf.mxu0
      %v1168 = vadd.f32 0.0, %v1167
      %v1169 = vpop.f32.mrf.mxu0
      %v1170 = vadd.f32 0.0, %v1169
      %1171 = vmatmul.bf16.gmra.mxu0 %v1032
      %v1172 = vpop.f32.mrf.mxu0
      %v1173 = vadd.f32 0.0, %v1172
      %v1174 = vpop.f32.mrf.mxu0
      %v1175 = vadd.f32 0.0, %v1174
      %1176 = vmatmul.bf16.gmra.mxu0 %v1035
      %v1177 = vpop.f32.mrf.mxu0
      %v1178 = vadd.f32 0.0, %v1177
      %v1179 = vpop.f32.mrf.mxu0
      %v1180 = vadd.f32 0.0, %v1179
      %1181 = vmatmul.bf16.gmra.mxu0 %v1038
      %v1182 = vpop.f32.mrf.mxu0
      %v1183 = vadd.f32 0.0, %v1182
      %v1184 = vpop.f32.mrf.mxu0
      %v1185 = vadd.f32 0.0, %v1184
      %1186 = vmatmul.bf16.gmra.mxu0 %v1041
      %v1187 = vpop.f32.mrf.mxu0
      %v1188 = vadd.f32 0.0, %v1187
      %v1189 = vpop.f32.mrf.mxu0
      %v1190 = vadd.f32 0.0, %v1189
      %1191 = vmatmul.bf16.gmra.mxu0 %v1044
      %v1192 = vpop.f32.mrf.mxu0
      %v1193 = vadd.f32 0.0, %v1192
      %v1194 = vpop.f32.mrf.mxu0
      %v1195 = vadd.f32 0.0, %v1194
      %1196 = vmatmul.bf16.gmra.mxu0 %v1047
      %v1197 = vpop.f32.mrf.mxu0
      %v1198 = vadd.f32 0.0, %v1197
      %v1199 = vpop.f32.mrf.mxu0
      %v1200 = vadd.f32 0.0, %v1199
      %1201 = vmatmul.bf16.gmra.mxu0 %v1050
      %v1202 = vpop.f32.mrf.mxu0
      %v1203 = vadd.f32 0.0, %v1202
      %v1204 = vpop.f32.mrf.mxu0
      %v1205 = vadd.f32 0.0, %v1204
      %1206 = vmatmul.bf16.gmra.mxu0 %v1053
      %v1207 = vpop.f32.mrf.mxu0
      %v1208 = vadd.f32 0.0, %v1207
      %v1209 = vpop.f32.mrf.mxu0
      %v1210 = vadd.f32 0.0, %v1209
      %1211 = vmatmul.bf16.gmra.mxu0 %v1056
      %v1212 = vpop.f32.mrf.mxu0
      %v1213 = vadd.f32 0.0, %v1212
      %v1214 = vpop.f32.mrf.mxu0
      %v1215 = vadd.f32 0.0, %v1214
      %1216 = vmatmul.bf16.gmra.mxu0 %v1059
      %v1217 = vpop.f32.mrf.mxu0
      %v1218 = vadd.f32 0.0, %v1217
      %v1219 = vpop.f32.mrf.mxu0
      %v1220 = vadd.f32 0.0, %v1219
      %1221 = vmatmul.bf16.gmra.mxu0 %v1062
      %v1222 = vpop.f32.mrf.mxu0
      %v1223 = vadd.f32 0.0, %v1222
      %v1224 = vpop.f32.mrf.mxu0
      %v1225 = vadd.f32 0.0, %v1224
      %1226 = vmatmul.bf16.gmra.mxu0 %v1065
      %v1227 = vpop.f32.mrf.mxu0
      %v1228 = vadd.f32 0.0, %v1227
      %v1229 = vpop.f32.mrf.mxu0
      %v1230 = vadd.f32 0.0, %v1229
      %1231 = vmatmul.bf16.gmra.mxu0 %v1068
      %v1232 = vpop.f32.mrf.mxu0
      %v1233 = vadd.f32 0.0, %v1232
      %v1234 = vpop.f32.mrf.mxu0
      %v1235 = vadd.f32 0.0, %v1234
      %1236 = vmatmul.bf16.gmra.mxu0 %v1071
      %v1237 = vpop.f32.mrf.mxu0
      %v1238 = vadd.f32 0.0, %v1237
      %v1239 = vpop.f32.mrf.mxu0
      %v1240 = vadd.f32 0.0, %v1239
      %1241 = vdwg.mxu0
      %v1306 = vunpack.c.l.b16 %v676
      %v1307 = vunpack.c.l.b16 %v677
      %v1308 = vunpack.c.l.b16 %v678
      %v1309 = vunpack.c.l.b16 %v679
      %v1310 = vunpack.c.l.b16 %v680
      %v1311 = vunpack.c.l.b16 %v681
      %v1312 = vunpack.c.l.b16 %v682
      %v1313 = vunpack.c.l.b16 %v683
      %v1314 = vunpack.c.l.b16 %v684
      %v1315 = vunpack.c.l.b16 %v685
      %v1316 = vunpack.c.l.b16 %v686
      %v1317 = vunpack.c.l.b16 %v687
      %v1318 = vunpack.c.l.b16 %v688
      %v1319 = vunpack.c.l.b16 %v689
      %v1320 = vunpack.c.l.b16 %v690
      %v1321 = vunpack.c.l.b16 %v691
      %v1322 = vunpack.c.l.b16 %v692
      %v1323 = vunpack.c.l.b16 %v693
      %v1324 = vunpack.c.l.b16 %v694
      %v1325 = vunpack.c.l.b16 %v695
      %v1326 = vunpack.c.l.b16 %v696
      %v1327 = vunpack.c.l.b16 %v697
      %v1328 = vunpack.c.l.b16 %v698
      %v1329 = vunpack.c.l.b16 %v699
      %v1330 = vunpack.c.l.b16 %v700
      %v1331 = vunpack.c.l.b16 %v701
      %v1332 = vunpack.c.l.b16 %v702
      %v1333 = vunpack.c.l.b16 %v703
      %v1334 = vunpack.c.l.b16 %v704
      %v1335 = vunpack.c.l.b16 %v705
      %v1336 = vunpack.c.l.b16 %v706
      %v1337 = vunpack.c.l.b16 %v707
      %v1338 = vunpack.c.l.b16 %v708
      %v1339 = vunpack.c.l.b16 %v709
      %v1340 = vunpack.c.l.b16 %v710
      %v1341 = vunpack.c.l.b16 %v711
      %v1342 = vunpack.c.l.b16 %v712
      %v1343 = vunpack.c.l.b16 %v713
      %v1344 = vunpack.c.l.b16 %v714
      %v1345 = vunpack.c.l.b16 %v715
      %v1346 = vunpack.c.l.b16 %v716
      %v1347 = vunpack.c.l.b16 %v717
      %v1348 = vunpack.c.l.b16 %v718
      %v1349 = vunpack.c.l.b16 %v719
      %v1350 = vunpack.c.l.b16 %v720
      %v1351 = vunpack.c.l.b16 %v721
      %v1352 = vunpack.c.l.b16 %v722
      %v1353 = vunpack.c.l.b16 %v723
      %v1354 = vunpack.c.l.b16 %v724
      %v1355 = vunpack.c.l.b16 %v725
      %v1356 = vunpack.c.l.b16 %v726
      %v1357 = vunpack.c.l.b16 %v727
      %v1358 = vunpack.c.l.b16 %v728
      %v1359 = vunpack.c.l.b16 %v729
      %v1360 = vunpack.c.l.b16 %v730
      %v1361 = vunpack.c.l.b16 %v731
      %v1362 = vunpack.c.l.b16 %v732
      %v1363 = vunpack.c.l.b16 %v733
      %v1364 = vunpack.c.l.b16 %v734
      %v1365 = vunpack.c.l.b16 %v735
      %v1366 = vunpack.c.l.b16 %v736
      %v1367 = vunpack.c.l.b16 %v737
      %v1368 = vunpack.c.l.b16 %v738
      %v1369 = vunpack.c.l.b16 %v739
      %v1370 = vpack.c.b16 %v1307, %v1306
      %v1371 = vpack.c.b16 %v1309, %v1308
      %v1372 = vpack.c.b16 %v1311, %v1310
      %v1373 = vpack.c.b16 %v1313, %v1312
      %v1374 = vpack.c.b16 %v1315, %v1314
      %v1375 = vpack.c.b16 %v1317, %v1316
      %v1376 = vpack.c.b16 %v1319, %v1318
      %v1377 = vpack.c.b16 %v1321, %v1320
      %v1378 = vpack.c.b16 %v1323, %v1322
      %v1379 = vpack.c.b16 %v1325, %v1324
      %v1380 = vpack.c.b16 %v1327, %v1326
      %v1381 = vpack.c.b16 %v1329, %v1328
      %v1382 = vpack.c.b16 %v1331, %v1330
      %v1383 = vpack.c.b16 %v1333, %v1332
      %v1384 = vpack.c.b16 %v1335, %v1334
      %v1385 = vpack.c.b16 %v1337, %v1336
      %v1386 = vpack.c.b16 %v1339, %v1338
      %v1387 = vpack.c.b16 %v1341, %v1340
      %v1388 = vpack.c.b16 %v1343, %v1342
      %v1389 = vpack.c.b16 %v1345, %v1344
      %v1390 = vpack.c.b16 %v1347, %v1346
      %v1391 = vpack.c.b16 %v1349, %v1348
      %v1392 = vpack.c.b16 %v1351, %v1350
      %v1393 = vpack.c.b16 %v1353, %v1352
      %v1394 = vpack.c.b16 %v1355, %v1354
      %v1395 = vpack.c.b16 %v1357, %v1356
      %v1396 = vpack.c.b16 %v1359, %v1358
      %v1397 = vpack.c.b16 %v1361, %v1360
      %v1398 = vpack.c.b16 %v1363, %v1362
      %v1399 = vpack.c.b16 %v1365, %v1364
      %v1400 = vpack.c.b16 %v1367, %v1366
      %v1401 = vpack.c.b16 %v1369, %v1368
      %v1406 = vunpack.c.l.b16 %v668
      %v1407 = vunpack.c.l.b16 %v669
      %v1408 = vunpack.c.l.b16 %v670
      %v1409 = vunpack.c.l.b16 %v671
      %v1410 = vpack.c.b16 %v1407, %v1406
      %v1411 = vpack.c.b16 %v1409, %v1408
      %v1415 = vsel %vm976, %v1370, 0
      %v1418 = vsel %vm976, %v1371, 0
      %v1421 = vsel %vm976, %v1372, 0
      %v1424 = vsel %vm976, %v1373, 0
      %v1427 = vsel %vm976, %v1374, 0
      %v1430 = vsel %vm976, %v1375, 0
      %v1433 = vsel %vm976, %v1376, 0
      %v1436 = vsel %vm976, %v1377, 0
      %v1439 = vsel %vm976, %v1378, 0
      %v1442 = vsel %vm976, %v1379, 0
      %v1445 = vsel %vm976, %v1380, 0
      %v1448 = vsel %vm976, %v1381, 0
      %v1451 = vsel %vm976, %v1382, 0
      %v1454 = vsel %vm976, %v1383, 0
      %v1457 = vsel %vm976, %v1384, 0
      %v1460 = vsel %vm976, %v1385, 0
      %v1463 = vsel %vm976, %v1386, 0
      %v1466 = vsel %vm976, %v1387, 0
      %v1469 = vsel %vm976, %v1388, 0
      %v1472 = vsel %vm976, %v1389, 0
      %v1475 = vsel %vm976, %v1390, 0
      %v1478 = vsel %vm976, %v1391, 0
      %v1481 = vsel %vm976, %v1392, 0
      %v1484 = vsel %vm976, %v1393, 0
      %v1487 = vsel %vm976, %v1394, 0
      %v1490 = vsel %vm976, %v1395, 0
      %v1493 = vsel %vm976, %v1396, 0
      %v1496 = vsel %vm976, %v1397, 0
      %v1499 = vsel %vm976, %v1398, 0
      %v1502 = vsel %vm976, %v1399, 0
      %v1505 = vsel %vm976, %v1400, 0
      %v1508 = vsel %vm976, %v1401, 0
      %1510 = vmatpush.bf16.msra.mxu0 0
      %1511 = vmatpush.bf16.msra.mxu0 0
      %1512 = vmatpush.bf16.msra.mxu0 0
      %1513 = vmatpush.bf16.msra.mxu0 0
      %1514 = vmatpush.bf16.msra.mxu0 0
      %1515 = vmatpush.bf16.msra.mxu0 0
      %1516 = vmatpush.bf16.msra.mxu0 %v1411
      %1517 = vmatpush.bf16.msra.mxu0 %v1410
      %1518 = vmatmul.bf16.gmra.mxu0 %v1415
      %v1519 = vpop.f32.mrf.mxu0
      %v1520 = vadd.f32 %v1083, %v1519
      %v1521 = vpop.f32.mrf.mxu0
      %v1522 = vadd.f32 %v1085, %v1521
      %1523 = vmatmul.bf16.gmra.mxu0 %v1418
      %v1524 = vpop.f32.mrf.mxu0
      %v1525 = vadd.f32 %v1088, %v1524
      %v1526 = vpop.f32.mrf.mxu0
      %v1527 = vadd.f32 %v1090, %v1526
      %1528 = vmatmul.bf16.gmra.mxu0 %v1421
      %v1529 = vpop.f32.mrf.mxu0
      %v1530 = vadd.f32 %v1093, %v1529
      %v1531 = vpop.f32.mrf.mxu0
      %v1532 = vadd.f32 %v1095, %v1531
      %1533 = vmatmul.bf16.gmra.mxu0 %v1424
      %v1534 = vpop.f32.mrf.mxu0
      %v1535 = vadd.f32 %v1098, %v1534
      %v1536 = vpop.f32.mrf.mxu0
      %v1537 = vadd.f32 %v1100, %v1536
      %1538 = vmatmul.bf16.gmra.mxu0 %v1427
      %v1539 = vpop.f32.mrf.mxu0
      %v1540 = vadd.f32 %v1103, %v1539
      %v1541 = vpop.f32.mrf.mxu0
      %v1542 = vadd.f32 %v1105, %v1541
      %1543 = vmatmul.bf16.gmra.mxu0 %v1430
      %v1544 = vpop.f32.mrf.mxu0
      %v1545 = vadd.f32 %v1108, %v1544
      %v1546 = vpop.f32.mrf.mxu0
      %v1547 = vadd.f32 %v1110, %v1546
      %1548 = vmatmul.bf16.gmra.mxu0 %v1433
      %v1549 = vpop.f32.mrf.mxu0
      %v1550 = vadd.f32 %v1113, %v1549
      %v1551 = vpop.f32.mrf.mxu0
      %v1552 = vadd.f32 %v1115, %v1551
      %1553 = vmatmul.bf16.gmra.mxu0 %v1436
      %v1554 = vpop.f32.mrf.mxu0
      %v1555 = vadd.f32 %v1118, %v1554
      %v1556 = vpop.f32.mrf.mxu0
      %v1557 = vadd.f32 %v1120, %v1556
      %1558 = vmatmul.bf16.gmra.mxu0 %v1439
      %v1559 = vpop.f32.mrf.mxu0
      %v1560 = vadd.f32 %v1123, %v1559
      %v1561 = vpop.f32.mrf.mxu0
      %v1562 = vadd.f32 %v1125, %v1561
      %1563 = vmatmul.bf16.gmra.mxu0 %v1442
      %v1564 = vpop.f32.mrf.mxu0
      %v1565 = vadd.f32 %v1128, %v1564
      %v1566 = vpop.f32.mrf.mxu0
      %v1567 = vadd.f32 %v1130, %v1566
      %1568 = vmatmul.bf16.gmra.mxu0 %v1445
      %v1569 = vpop.f32.mrf.mxu0
      %v1570 = vadd.f32 %v1133, %v1569
      %v1571 = vpop.f32.mrf.mxu0
      %v1572 = vadd.f32 %v1135, %v1571
      %1573 = vmatmul.bf16.gmra.mxu0 %v1448
      %v1574 = vpop.f32.mrf.mxu0
      %v1575 = vadd.f32 %v1138, %v1574
      %v1576 = vpop.f32.mrf.mxu0
      %v1577 = vadd.f32 %v1140, %v1576
      %1578 = vmatmul.bf16.gmra.mxu0 %v1451
      %v1579 = vpop.f32.mrf.mxu0
      %v1580 = vadd.f32 %v1143, %v1579
      %v1581 = vpop.f32.mrf.mxu0
      %v1582 = vadd.f32 %v1145, %v1581
      %1583 = vmatmul.bf16.gmra.mxu0 %v1454
      %v1584 = vpop.f32.mrf.mxu0
      %v1585 = vadd.f32 %v1148, %v1584
      %v1586 = vpop.f32.mrf.mxu0
      %v1587 = vadd.f32 %v1150, %v1586
      %1588 = vmatmul.bf16.gmra.mxu0 %v1457
      %v1589 = vpop.f32.mrf.mxu0
      %v1590 = vadd.f32 %v1153, %v1589
      %v1591 = vpop.f32.mrf.mxu0
      %v1592 = vadd.f32 %v1155, %v1591
      %1593 = vmatmul.bf16.gmra.mxu0 %v1460
      %v1594 = vpop.f32.mrf.mxu0
      %v1595 = vadd.f32 %v1158, %v1594
      %v1596 = vpop.f32.mrf.mxu0
      %v1597 = vadd.f32 %v1160, %v1596
      %1598 = vmatmul.bf16.gmra.mxu0 %v1463
      %v1599 = vpop.f32.mrf.mxu0
      %v1600 = vadd.f32 %v1163, %v1599
      %v1601 = vpop.f32.mrf.mxu0
      %v1602 = vadd.f32 %v1165, %v1601
      %1603 = vmatmul.bf16.gmra.mxu0 %v1466
      %v1604 = vpop.f32.mrf.mxu0
      %v1605 = vadd.f32 %v1168, %v1604
      %v1606 = vpop.f32.mrf.mxu0
      %v1607 = vadd.f32 %v1170, %v1606
      %1608 = vmatmul.bf16.gmra.mxu0 %v1469
      %v1609 = vpop.f32.mrf.mxu0
      %v1610 = vadd.f32 %v1173, %v1609
      %v1611 = vpop.f32.mrf.mxu0
      %v1612 = vadd.f32 %v1175, %v1611
      %1613 = vmatmul.bf16.gmra.mxu0 %v1472
      %v1614 = vpop.f32.mrf.mxu0
      %v1615 = vadd.f32 %v1178, %v1614
      %v1616 = vpop.f32.mrf.mxu0
      %v1617 = vadd.f32 %v1180, %v1616
      %1618 = vmatmul.bf16.gmra.mxu0 %v1475
      %v1619 = vpop.f32.mrf.mxu0
      %v1620 = vadd.f32 %v1183, %v1619
      %v1621 = vpop.f32.mrf.mxu0
      %v1622 = vadd.f32 %v1185, %v1621
      %1623 = vmatmul.bf16.gmra.mxu0 %v1478
      %v1624 = vpop.f32.mrf.mxu0
      %v1625 = vadd.f32 %v1188, %v1624
      %v1626 = vpop.f32.mrf.mxu0
      %v1627 = vadd.f32 %v1190, %v1626
      %1628 = vmatmul.bf16.gmra.mxu0 %v1481
      %v1629 = vpop.f32.mrf.mxu0
      %v1630 = vadd.f32 %v1193, %v1629
      %v1631 = vpop.f32.mrf.mxu0
      %v1632 = vadd.f32 %v1195, %v1631
      %1633 = vmatmul.bf16.gmra.mxu0 %v1484
      %v1634 = vpop.f32.mrf.mxu0
      %v1635 = vadd.f32 %v1198, %v1634
      %v1636 = vpop.f32.mrf.mxu0
      %v1637 = vadd.f32 %v1200, %v1636
      %1638 = vmatmul.bf16.gmra.mxu0 %v1487
      %v1639 = vpop.f32.mrf.mxu0
      %v1640 = vadd.f32 %v1203, %v1639
      %v1641 = vpop.f32.mrf.mxu0
      %v1642 = vadd.f32 %v1205, %v1641
      %1643 = vmatmul.bf16.gmra.mxu0 %v1490
      %v1644 = vpop.f32.mrf.mxu0
      %v1645 = vadd.f32 %v1208, %v1644
      %v1646 = vpop.f32.mrf.mxu0
      %v1647 = vadd.f32 %v1210, %v1646
      %1648 = vmatmul.bf16.gmra.mxu0 %v1493
      %v1649 = vpop.f32.mrf.mxu0
      %v1650 = vadd.f32 %v1213, %v1649
      %v1651 = vpop.f32.mrf.mxu0
      %v1652 = vadd.f32 %v1215, %v1651
      %1653 = vmatmul.bf16.gmra.mxu0 %v1496
      %v1654 = vpop.f32.mrf.mxu0
      %v1655 = vadd.f32 %v1218, %v1654
      %v1656 = vpop.f32.mrf.mxu0
      %v1657 = vadd.f32 %v1220, %v1656
      %1658 = vmatmul.bf16.gmra.mxu0 %v1499
      %v1659 = vpop.f32.mrf.mxu0
      %v1660 = vadd.f32 %v1223, %v1659
      %v1661 = vpop.f32.mrf.mxu0
      %v1662 = vadd.f32 %v1225, %v1661
      %1663 = vmatmul.bf16.gmra.mxu0 %v1502
      %v1664 = vpop.f32.mrf.mxu0
      %v1665 = vadd.f32 %v1228, %v1664
      %v1666 = vpop.f32.mrf.mxu0
      %v1667 = vadd.f32 %v1230, %v1666
      %1668 = vmatmul.bf16.gmra.mxu0 %v1505
      %v1669 = vpop.f32.mrf.mxu0
      %v1670 = vadd.f32 %v1233, %v1669
      %v1671 = vpop.f32.mrf.mxu0
      %v1672 = vadd.f32 %v1235, %v1671
      %1673 = vmatmul.bf16.gmra.mxu0 %v1508
      %v1674 = vpop.f32.mrf.mxu0
      %v1675 = vadd.f32 %v1238, %v1674
      %v1676 = vpop.f32.mrf.mxu0
      %v1677 = vadd.f32 %v1240, %v1676
      %1678 = vdwg.mxu0
      %v1679 = vld [vmem:[%s7] sm:$0x1]
      %v1681 = vperm.slane %v1679, 0
      %v1683 = vadd.f32 %v1520, %v1681
      %v1684 = vadd.f32 %v1522, %v1681
      %v1685 = vadd.f32 %v1525, %v1681
      %v1686 = vadd.f32 %v1527, %v1681
      %v1687 = vadd.f32 %v1530, %v1681
      %v1688 = vadd.f32 %v1532, %v1681
      %v1689 = vadd.f32 %v1535, %v1681
      %v1690 = vadd.f32 %v1537, %v1681
      %v1691 = vadd.f32 %v1540, %v1681
      %v1692 = vadd.f32 %v1542, %v1681
      %v1693 = vadd.f32 %v1545, %v1681
      %v1694 = vadd.f32 %v1547, %v1681
      %v1695 = vadd.f32 %v1550, %v1681
      %v1696 = vadd.f32 %v1552, %v1681
      %v1697 = vadd.f32 %v1555, %v1681
      %v1698 = vadd.f32 %v1557, %v1681
      %v1699 = vadd.f32 %v1560, %v1681
      %v1700 = vadd.f32 %v1562, %v1681
      %v1701 = vadd.f32 %v1565, %v1681
      %v1702 = vadd.f32 %v1567, %v1681
      %v1703 = vadd.f32 %v1570, %v1681
      %v1704 = vadd.f32 %v1572, %v1681
      %v1705 = vadd.f32 %v1575, %v1681
      %v1706 = vadd.f32 %v1577, %v1681
      %v1707 = vadd.f32 %v1580, %v1681
      %v1708 = vadd.f32 %v1582, %v1681
      %v1709 = vadd.f32 %v1585, %v1681
      %v1710 = vadd.f32 %v1587, %v1681
      %v1711 = vadd.f32 %v1590, %v1681
      %v1712 = vadd.f32 %v1592, %v1681
      %v1713 = vadd.f32 %v1595, %v1681
      %v1714 = vadd.f32 %v1597, %v1681
      %v1715 = vadd.f32 %v1600, %v1681
      %v1716 = vadd.f32 %v1602, %v1681
      %v1717 = vadd.f32 %v1605, %v1681
      %v1718 = vadd.f32 %v1607, %v1681
      %v1719 = vadd.f32 %v1610, %v1681
      %v1720 = vadd.f32 %v1612, %v1681
      %v1721 = vadd.f32 %v1615, %v1681
      %v1722 = vadd.f32 %v1617, %v1681
      %v1723 = vadd.f32 %v1620, %v1681
      %v1724 = vadd.f32 %v1622, %v1681
      %v1725 = vadd.f32 %v1625, %v1681
      %v1726 = vadd.f32 %v1627, %v1681
      %v1727 = vadd.f32 %v1630, %v1681
      %v1728 = vadd.f32 %v1632, %v1681
      %v1729 = vadd.f32 %v1635, %v1681
      %v1730 = vadd.f32 %v1637, %v1681
      %v1731 = vadd.f32 %v1640, %v1681
      %v1732 = vadd.f32 %v1642, %v1681
      %v1733 = vadd.f32 %v1645, %v1681
      %v1734 = vadd.f32 %v1647, %v1681
      %v1735 = vadd.f32 %v1650, %v1681
      %v1736 = vadd.f32 %v1652, %v1681
      %v1737 = vadd.f32 %v1655, %v1681
      %v1738 = vadd.f32 %v1657, %v1681
      %v1739 = vadd.f32 %v1660, %v1681
      %v1740 = vadd.f32 %v1662, %v1681
      %v1741 = vadd.f32 %v1665, %v1681
      %v1742 = vadd.f32 %v1667, %v1681
      %v1743 = vadd.f32 %v1670, %v1681
      %v1744 = vadd.f32 %v1672, %v1681
      %v1745 = vadd.f32 %v1675, %v1681
      %v1746 = vadd.f32 %v1677, %v1681
      %v1747 = vmax.f32 %v1683, 0.0
      %v1748 = vmax.f32 %v1684, 0.0
      %v1749 = vmax.f32 %v1685, 0.0
      %v1750 = vmax.f32 %v1686, 0.0
      %v1751 = vmax.f32 %v1687, 0.0
      %v1752 = vmax.f32 %v1688, 0.0
      %v1753 = vmax.f32 %v1689, 0.0
      %v1754 = vmax.f32 %v1690, 0.0
      %v1755 = vmax.f32 %v1691, 0.0
      %v1756 = vmax.f32 %v1692, 0.0
      %v1757 = vmax.f32 %v1693, 0.0
      %v1758 = vmax.f32 %v1694, 0.0
      %v1759 = vmax.f32 %v1695, 0.0
      %v1760 = vmax.f32 %v1696, 0.0
      %v1761 = vmax.f32 %v1697, 0.0
      %v1762 = vmax.f32 %v1698, 0.0
      %v1763 = vmax.f32 %v1699, 0.0
      %v1764 = vmax.f32 %v1700, 0.0
      %v1765 = vmax.f32 %v1701, 0.0
      %v1766 = vmax.f32 %v1702, 0.0
      %v1767 = vmax.f32 %v1703, 0.0
      %v1768 = vmax.f32 %v1704, 0.0
      %v1769 = vmax.f32 %v1705, 0.0
      %v1770 = vmax.f32 %v1706, 0.0
      %v1771 = vmax.f32 %v1707, 0.0
      %v1772 = vmax.f32 %v1708, 0.0
      %v1773 = vmax.f32 %v1709, 0.0
      %v1774 = vmax.f32 %v1710, 0.0
      %v1775 = vmax.f32 %v1711, 0.0
      %v1776 = vmax.f32 %v1712, 0.0
      %v1777 = vmax.f32 %v1713, 0.0
      %v1778 = vmax.f32 %v1714, 0.0
      %v1779 = vmax.f32 %v1715, 0.0
      %v1780 = vmax.f32 %v1716, 0.0
      %v1781 = vmax.f32 %v1717, 0.0
      %v1782 = vmax.f32 %v1718, 0.0
      %v1783 = vmax.f32 %v1719, 0.0
      %v1784 = vmax.f32 %v1720, 0.0
      %v1785 = vmax.f32 %v1721, 0.0
      %v1786 = vmax.f32 %v1722, 0.0
      %v1787 = vmax.f32 %v1723, 0.0
      %v1788 = vmax.f32 %v1724, 0.0
      %v1789 = vmax.f32 %v1725, 0.0
      %v1790 = vmax.f32 %v1726, 0.0
      %v1791 = vmax.f32 %v1727, 0.0
      %v1792 = vmax.f32 %v1728, 0.0
      %v1793 = vmax.f32 %v1729, 0.0
      %v1794 = vmax.f32 %v1730, 0.0
      %v1795 = vmax.f32 %v1731, 0.0
      %v1796 = vmax.f32 %v1732, 0.0
      %v1797 = vmax.f32 %v1733, 0.0
      %v1798 = vmax.f32 %v1734, 0.0
      %v1799 = vmax.f32 %v1735, 0.0
      %v1800 = vmax.f32 %v1736, 0.0
      %v1801 = vmax.f32 %v1737, 0.0
      %v1802 = vmax.f32 %v1738, 0.0
      %v1803 = vmax.f32 %v1739, 0.0
      %v1804 = vmax.f32 %v1740, 0.0
      %v1805 = vmax.f32 %v1741, 0.0
      %v1806 = vmax.f32 %v1742, 0.0
      %v1807 = vmax.f32 %v1743, 0.0
      %v1808 = vmax.f32 %v1744, 0.0
      %v1809 = vmax.f32 %v1745, 0.0
      %v1810 = vmax.f32 %v1746, 0.0
      %v1811 = vpack.c.bf16 %v1748, %v1747
      %v1812 = vpack.c.bf16 %v1750, %v1749
      %v1813 = vpack.c.bf16 %v1752, %v1751
      %v1814 = vpack.c.bf16 %v1754, %v1753
      %v1815 = vpack.c.bf16 %v1756, %v1755
      %v1816 = vpack.c.bf16 %v1758, %v1757
      %v1817 = vpack.c.bf16 %v1760, %v1759
      %v1818 = vpack.c.bf16 %v1762, %v1761
      %v1819 = vpack.c.bf16 %v1764, %v1763
      %v1820 = vpack.c.bf16 %v1766, %v1765
      %v1821 = vpack.c.bf16 %v1768, %v1767
      %v1822 = vpack.c.bf16 %v1770, %v1769
      %v1823 = vpack.c.bf16 %v1772, %v1771
      %v1824 = vpack.c.bf16 %v1774, %v1773
      %v1825 = vpack.c.bf16 %v1776, %v1775
      %v1826 = vpack.c.bf16 %v1778, %v1777
      %v1827 = vpack.c.bf16 %v1780, %v1779
      %v1828 = vpack.c.bf16 %v1782, %v1781
      %v1829 = vpack.c.bf16 %v1784, %v1783
      %v1830 = vpack.c.bf16 %v1786, %v1785
      %v1831 = vpack.c.bf16 %v1788, %v1787
      %v1832 = vpack.c.bf16 %v1790, %v1789
      %v1833 = vpack.c.bf16 %v1792, %v1791
      %v1834 = vpack.c.bf16 %v1794, %v1793
      %v1835 = vpack.c.bf16 %v1796, %v1795
      %v1836 = vpack.c.bf16 %v1798, %v1797
      %v1837 = vpack.c.bf16 %v1800, %v1799
      %v1838 = vpack.c.bf16 %v1802, %v1801
      %v1839 = vpack.c.bf16 %v1804, %v1803
      %v1840 = vpack.c.bf16 %v1806, %v1805
      %v1841 = vpack.c.bf16 %v1808, %v1807
      %v1842 = vpack.c.bf16 %v1810, %v1809
      %v1843 = vld [vmem:[%s8] sm:$0xf]
      %v1844 = vld [vmem:[%s8 + $0x4] sm:$0xf]
      %v1845 = vld [vmem:[%s8 + $0x8] sm:$0xf]
      %v1846 = vld [vmem:[%s8 + $0xc] sm:$0xf]
      %v1847 = vld [vmem:[%s9] sm:$0x1]
      %v1849 = vperm.slane %v1847, 0
      %v1855 = vunpack.c.l.b16 %v1843
      %v1856 = vunpack.c.l.b16 %v1844
      %v1857 = vunpack.c.l.b16 %v1845
      %v1858 = vunpack.c.l.b16 %v1846
      %v1859 = vpack.c.b16 %v1856, %v1855
      %v1860 = vpack.c.b16 %v1858, %v1857
      %v1864 = vsel %vm976, %v1811, 0
      %v1867 = vsel %vm976, %v1812, 0
      %v1870 = vsel %vm976, %v1813, 0
      %v1873 = vsel %vm976, %v1814, 0
      %v1876 = vsel %vm976, %v1815, 0
      %v1879 = vsel %vm976, %v1816, 0
      %v1882 = vsel %vm976, %v1817, 0
      %v1885 = vsel %vm976, %v1818, 0
      %v1888 = vsel %vm976, %v1819, 0
      %v1891 = vsel %vm976, %v1820, 0
      %v1894 = vsel %vm976, %v1821, 0
      %v1897 = vsel %vm976, %v1822, 0
      %v1900 = vsel %vm976, %v1823, 0
      %v1903 = vsel %vm976, %v1824, 0
      %v1906 = vsel %vm976, %v1825, 0
      %v1909 = vsel %vm976, %v1826, 0
      %v1912 = vsel %vm976, %v1827, 0
      %v1915 = vsel %vm976, %v1828, 0
      %v1918 = vsel %vm976, %v1829, 0
      %v1921 = vsel %vm976, %v1830, 0
      %v1924 = vsel %vm976, %v1831, 0
      %v1927 = vsel %vm976, %v1832, 0
      %v1930 = vsel %vm976, %v1833, 0
      %v1933 = vsel %vm976, %v1834, 0
      %v1936 = vsel %vm976, %v1835, 0
      %v1939 = vsel %vm976, %v1836, 0
      %v1942 = vsel %vm976, %v1837, 0
      %v1945 = vsel %vm976, %v1838, 0
      %v1948 = vsel %vm976, %v1839, 0
      %v1951 = vsel %vm976, %v1840, 0
      %v1954 = vsel %vm976, %v1841, 0
      %v1957 = vsel %vm976, %v1842, 0
      %1959 = vmatpush.bf16.msra.mxu0 0
      %1960 = vmatpush.bf16.msra.mxu0 0
      %1961 = vmatpush.bf16.msra.mxu0 0
      %1962 = vmatpush.bf16.msra.mxu0 0
      %1963 = vmatpush.bf16.msra.mxu0 0
      %1964 = vmatpush.bf16.msra.mxu0 0
      %1965 = vmatpush.bf16.msra.mxu0 %v1860
      %1966 = vmatpush.bf16.msra.mxu0 %v1859
      %1967 = vmatmul.bf16.gmra.mxu0 %v1864
      %v1968 = vpop.f32.mrf.mxu0
      %v1969 = vadd.f32 %v1849, %v1968
      %v1970 = vpop.f32.mrf.mxu0
      %v1971 = vadd.f32 %v1849, %v1970
      %1972 = vmatmul.bf16.gmra.mxu0 %v1867
      %v1973 = vpop.f32.mrf.mxu0
      %v1974 = vadd.f32 %v1849, %v1973
      %v1975 = vpop.f32.mrf.mxu0
      %v1976 = vadd.f32 %v1849, %v1975
      %1977 = vmatmul.bf16.gmra.mxu0 %v1870
      %v1978 = vpop.f32.mrf.mxu0
      %v1979 = vadd.f32 %v1849, %v1978
      %v1980 = vpop.f32.mrf.mxu0
      %v1981 = vadd.f32 %v1849, %v1980
      %1982 = vmatmul.bf16.gmra.mxu0 %v1873
      %v1983 = vpop.f32.mrf.mxu0
      %v1984 = vadd.f32 %v1849, %v1983
      %v1985 = vpop.f32.mrf.mxu0
      %v1986 = vadd.f32 %v1849, %v1985
      %1987 = vmatmul.bf16.gmra.mxu0 %v1876
      %v1988 = vpop.f32.mrf.mxu0
      %v1989 = vadd.f32 %v1849, %v1988
      %v1990 = vpop.f32.mrf.mxu0
      %v1991 = vadd.f32 %v1849, %v1990
      %1992 = vmatmul.bf16.gmra.mxu0 %v1879
      %v1993 = vpop.f32.mrf.mxu0
      %v1994 = vadd.f32 %v1849, %v1993
      %v1995 = vpop.f32.mrf.mxu0
      %v1996 = vadd.f32 %v1849, %v1995
      %1997 = vmatmul.bf16.gmra.mxu0 %v1882
      %v1998 = vpop.f32.mrf.mxu0
      %v1999 = vadd.f32 %v1849, %v1998
      %v2000 = vpop.f32.mrf.mxu0
      %v2001 = vadd.f32 %v1849, %v2000
      %2002 = vmatmul.bf16.gmra.mxu0 %v1885
      %v2003 = vpop.f32.mrf.mxu0
      %v2004 = vadd.f32 %v1849, %v2003
      %v2005 = vpop.f32.mrf.mxu0
      %v2006 = vadd.f32 %v1849, %v2005
      %2007 = vmatmul.bf16.gmra.mxu0 %v1888
      %v2008 = vpop.f32.mrf.mxu0
      %v2009 = vadd.f32 %v1849, %v2008
      %v2010 = vpop.f32.mrf.mxu0
      %v2011 = vadd.f32 %v1849, %v2010
      %2012 = vmatmul.bf16.gmra.mxu0 %v1891
      %v2013 = vpop.f32.mrf.mxu0
      %v2014 = vadd.f32 %v1849, %v2013
      %v2015 = vpop.f32.mrf.mxu0
      %v2016 = vadd.f32 %v1849, %v2015
      %2017 = vmatmul.bf16.gmra.mxu0 %v1894
      %v2018 = vpop.f32.mrf.mxu0
      %v2019 = vadd.f32 %v1849, %v2018
      %v2020 = vpop.f32.mrf.mxu0
      %v2021 = vadd.f32 %v1849, %v2020
      %2022 = vmatmul.bf16.gmra.mxu0 %v1897
      %v2023 = vpop.f32.mrf.mxu0
      %v2024 = vadd.f32 %v1849, %v2023
      %v2025 = vpop.f32.mrf.mxu0
      %v2026 = vadd.f32 %v1849, %v2025
      %2027 = vmatmul.bf16.gmra.mxu0 %v1900
      %v2028 = vpop.f32.mrf.mxu0
      %v2029 = vadd.f32 %v1849, %v2028
      %v2030 = vpop.f32.mrf.mxu0
      %v2031 = vadd.f32 %v1849, %v2030
      %2032 = vmatmul.bf16.gmra.mxu0 %v1903
      %v2033 = vpop.f32.mrf.mxu0
      %v2034 = vadd.f32 %v1849, %v2033
      %v2035 = vpop.f32.mrf.mxu0
      %v2036 = vadd.f32 %v1849, %v2035
      %2037 = vmatmul.bf16.gmra.mxu0 %v1906
      %v2038 = vpop.f32.mrf.mxu0
      %v2039 = vadd.f32 %v1849, %v2038
      %v2040 = vpop.f32.mrf.mxu0
      %v2041 = vadd.f32 %v1849, %v2040
      %2042 = vmatmul.bf16.gmra.mxu0 %v1909
      %v2043 = vpop.f32.mrf.mxu0
      %v2044 = vadd.f32 %v1849, %v2043
      %v2045 = vpop.f32.mrf.mxu0
      %v2046 = vadd.f32 %v1849, %v2045
      %2047 = vmatmul.bf16.gmra.mxu0 %v1912
      %v2048 = vpop.f32.mrf.mxu0
      %v2049 = vadd.f32 %v1849, %v2048
      %v2050 = vpop.f32.mrf.mxu0
      %v2051 = vadd.f32 %v1849, %v2050
      %2052 = vmatmul.bf16.gmra.mxu0 %v1915
      %v2053 = vpop.f32.mrf.mxu0
      %v2054 = vadd.f32 %v1849, %v2053
      %v2055 = vpop.f32.mrf.mxu0
      %v2056 = vadd.f32 %v1849, %v2055
      %2057 = vmatmul.bf16.gmra.mxu0 %v1918
      %v2058 = vpop.f32.mrf.mxu0
      %v2059 = vadd.f32 %v1849, %v2058
      %v2060 = vpop.f32.mrf.mxu0
      %v2061 = vadd.f32 %v1849, %v2060
      %2062 = vmatmul.bf16.gmra.mxu0 %v1921
      %v2063 = vpop.f32.mrf.mxu0
      %v2064 = vadd.f32 %v1849, %v2063
      %v2065 = vpop.f32.mrf.mxu0
      %v2066 = vadd.f32 %v1849, %v2065
      %2067 = vmatmul.bf16.gmra.mxu0 %v1924
      %v2068 = vpop.f32.mrf.mxu0
      %v2069 = vadd.f32 %v1849, %v2068
      %v2070 = vpop.f32.mrf.mxu0
      %v2071 = vadd.f32 %v1849, %v2070
      %2072 = vmatmul.bf16.gmra.mxu0 %v1927
      %v2073 = vpop.f32.mrf.mxu0
      %v2074 = vadd.f32 %v1849, %v2073
      %v2075 = vpop.f32.mrf.mxu0
      %v2076 = vadd.f32 %v1849, %v2075
      %2077 = vmatmul.bf16.gmra.mxu0 %v1930
      %v2078 = vpop.f32.mrf.mxu0
      %v2079 = vadd.f32 %v1849, %v2078
      %v2080 = vpop.f32.mrf.mxu0
      %v2081 = vadd.f32 %v1849, %v2080
      %2082 = vmatmul.bf16.gmra.mxu0 %v1933
      %v2083 = vpop.f32.mrf.mxu0
      %v2084 = vadd.f32 %v1849, %v2083
      %v2085 = vpop.f32.mrf.mxu0
      %v2086 = vadd.f32 %v1849, %v2085
      %2087 = vmatmul.bf16.gmra.mxu0 %v1936
      %v2088 = vpop.f32.mrf.mxu0
      %v2089 = vadd.f32 %v1849, %v2088
      %v2090 = vpop.f32.mrf.mxu0
      %v2091 = vadd.f32 %v1849, %v2090
      %2092 = vmatmul.bf16.gmra.mxu0 %v1939
      %v2093 = vpop.f32.mrf.mxu0
      %v2094 = vadd.f32 %v1849, %v2093
      %v2095 = vpop.f32.mrf.mxu0
      %v2096 = vadd.f32 %v1849, %v2095
      %2097 = vmatmul.bf16.gmra.mxu0 %v1942
      %v2098 = vpop.f32.mrf.mxu0
      %v2099 = vadd.f32 %v1849, %v2098
      %v2100 = vpop.f32.mrf.mxu0
      %v2101 = vadd.f32 %v1849, %v2100
      %2102 = vmatmul.bf16.gmra.mxu0 %v1945
      %v2103 = vpop.f32.mrf.mxu0
      %v2104 = vadd.f32 %v1849, %v2103
      %v2105 = vpop.f32.mrf.mxu0
      %v2106 = vadd.f32 %v1849, %v2105
      %2107 = vmatmul.bf16.gmra.mxu0 %v1948
      %v2108 = vpop.f32.mrf.mxu0
      %v2109 = vadd.f32 %v1849, %v2108
      %v2110 = vpop.f32.mrf.mxu0
      %v2111 = vadd.f32 %v1849, %v2110
      %2112 = vmatmul.bf16.gmra.mxu0 %v1951
      %v2113 = vpop.f32.mrf.mxu0
      %v2114 = vadd.f32 %v1849, %v2113
      %v2115 = vpop.f32.mrf.mxu0
      %v2116 = vadd.f32 %v1849, %v2115
      %2117 = vmatmul.bf16.gmra.mxu0 %v1954
      %v2118 = vpop.f32.mrf.mxu0
      %v2119 = vadd.f32 %v1849, %v2118
      %v2120 = vpop.f32.mrf.mxu0
      %v2121 = vadd.f32 %v1849, %v2120
      %2122 = vmatmul.bf16.gmra.mxu0 %v1957
      %v2123 = vpop.f32.mrf.mxu0
      %v2124 = vadd.f32 %v1849, %v2123
      %v2125 = vpop.f32.mrf.mxu0
      %v2126 = vadd.f32 %v1849, %v2125
      %2127 = vdwg.mxu0
      %v2128 = vmax.f32 %v1969, 0.0
      %v2129 = vmax.f32 %v1971, 0.0
      %v2130 = vmax.f32 %v1974, 0.0
      %v2131 = vmax.f32 %v1976, 0.0
      %v2132 = vmax.f32 %v1979, 0.0
      %v2133 = vmax.f32 %v1981, 0.0
      %v2134 = vmax.f32 %v1984, 0.0
      %v2135 = vmax.f32 %v1986, 0.0
      %v2136 = vmax.f32 %v1989, 0.0
      %v2137 = vmax.f32 %v1991, 0.0
      %v2138 = vmax.f32 %v1994, 0.0
      %v2139 = vmax.f32 %v1996, 0.0
      %v2140 = vmax.f32 %v1999, 0.0
      %v2141 = vmax.f32 %v2001, 0.0
      %v2142 = vmax.f32 %v2004, 0.0
      %v2143 = vmax.f32 %v2006, 0.0
      %v2144 = vmax.f32 %v2009, 0.0
      %v2145 = vmax.f32 %v2011, 0.0
      %v2146 = vmax.f32 %v2014, 0.0
      %v2147 = vmax.f32 %v2016, 0.0
      %v2148 = vmax.f32 %v2019, 0.0
      %v2149 = vmax.f32 %v2021, 0.0
      %v2150 = vmax.f32 %v2024, 0.0
      %v2151 = vmax.f32 %v2026, 0.0
      %v2152 = vmax.f32 %v2029, 0.0
      %v2153 = vmax.f32 %v2031, 0.0
      %v2154 = vmax.f32 %v2034, 0.0
      %v2155 = vmax.f32 %v2036, 0.0
      %v2156 = vmax.f32 %v2039, 0.0
      %v2157 = vmax.f32 %v2041, 0.0
      %v2158 = vmax.f32 %v2044, 0.0
      %v2159 = vmax.f32 %v2046, 0.0
      %v2160 = vmax.f32 %v2049, 0.0
      %v2161 = vmax.f32 %v2051, 0.0
      %v2162 = vmax.f32 %v2054, 0.0
      %v2163 = vmax.f32 %v2056, 0.0
      %v2164 = vmax.f32 %v2059, 0.0
      %v2165 = vmax.f32 %v2061, 0.0
      %v2166 = vmax.f32 %v2064, 0.0
      %v2167 = vmax.f32 %v2066, 0.0
      %v2168 = vmax.f32 %v2069, 0.0
      %v2169 = vmax.f32 %v2071, 0.0
      %v2170 = vmax.f32 %v2074, 0.0
      %v2171 = vmax.f32 %v2076, 0.0
      %v2172 = vmax.f32 %v2079, 0.0
      %v2173 = vmax.f32 %v2081, 0.0
      %v2174 = vmax.f32 %v2084, 0.0
      %v2175 = vmax.f32 %v2086, 0.0
      %v2176 = vmax.f32 %v2089, 0.0
      %v2177 = vmax.f32 %v2091, 0.0
      %v2178 = vmax.f32 %v2094, 0.0
      %v2179 = vmax.f32 %v2096, 0.0
      %v2180 = vmax.f32 %v2099, 0.0
      %v2181 = vmax.f32 %v2101, 0.0
      %v2182 = vmax.f32 %v2104, 0.0
      %v2183 = vmax.f32 %v2106, 0.0
      %v2184 = vmax.f32 %v2109, 0.0
      %v2185 = vmax.f32 %v2111, 0.0
      %v2186 = vmax.f32 %v2114, 0.0
      %v2187 = vmax.f32 %v2116, 0.0
      %v2188 = vmax.f32 %v2119, 0.0
      %v2189 = vmax.f32 %v2121, 0.0
      %v2190 = vmax.f32 %v2124, 0.0
      %v2191 = vmax.f32 %v2126, 0.0
      %v2192 = vpack.c.bf16 %v2129, %v2128
      %v2193 = vpack.c.bf16 %v2131, %v2130
      %v2194 = vpack.c.bf16 %v2133, %v2132
      %v2195 = vpack.c.bf16 %v2135, %v2134
      %v2196 = vpack.c.bf16 %v2137, %v2136
      %v2197 = vpack.c.bf16 %v2139, %v2138
      %v2198 = vpack.c.bf16 %v2141, %v2140
      %v2199 = vpack.c.bf16 %v2143, %v2142
      %v2200 = vpack.c.bf16 %v2145, %v2144
      %v2201 = vpack.c.bf16 %v2147, %v2146
      %v2202 = vpack.c.bf16 %v2149, %v2148
      %v2203 = vpack.c.bf16 %v2151, %v2150
      %v2204 = vpack.c.bf16 %v2153, %v2152
      %v2205 = vpack.c.bf16 %v2155, %v2154
      %v2206 = vpack.c.bf16 %v2157, %v2156
      %v2207 = vpack.c.bf16 %v2159, %v2158
      %v2208 = vpack.c.bf16 %v2161, %v2160
      %v2209 = vpack.c.bf16 %v2163, %v2162
      %v2210 = vpack.c.bf16 %v2165, %v2164
      %v2211 = vpack.c.bf16 %v2167, %v2166
      %v2212 = vpack.c.bf16 %v2169, %v2168
      %v2213 = vpack.c.bf16 %v2171, %v2170
      %v2214 = vpack.c.bf16 %v2173, %v2172
      %v2215 = vpack.c.bf16 %v2175, %v2174
      %v2216 = vpack.c.bf16 %v2177, %v2176
      %v2217 = vpack.c.bf16 %v2179, %v2178
      %v2218 = vpack.c.bf16 %v2181, %v2180
      %v2219 = vpack.c.bf16 %v2183, %v2182
      %v2220 = vpack.c.bf16 %v2185, %v2184
      %v2221 = vpack.c.bf16 %v2187, %v2186
      %v2222 = vpack.c.bf16 %v2189, %v2188
      %v2223 = vpack.c.bf16 %v2191, %v2190
      %v2224 = vld [vmem:[%s10] sm:$0xf]
      %v2225 = vld [vmem:[%s10 + $0x4] sm:$0xf]
      %v2226 = vld [vmem:[%s11] sm:$0x1]
      %v2228 = vperm.slane %v2226, 0
      %v2232 = vunpack.c.l.b16 %v2224
      %v2233 = vunpack.c.l.b16 %v2225
      %v2234 = vpack.c.b16 %v2233, %v2232
      %vm2236 = vcmask 130048
      %v2238 = vsel %vm2236, %v2192, 0
      %v2241 = vsel %vm2236, %v2193, 0
      %v2244 = vsel %vm2236, %v2194, 0
      %v2247 = vsel %vm2236, %v2195, 0
      %v2250 = vsel %vm2236, %v2196, 0
      %v2253 = vsel %vm2236, %v2197, 0
      %v2256 = vsel %vm2236, %v2198, 0
      %v2259 = vsel %vm2236, %v2199, 0
      %v2262 = vsel %vm2236, %v2200, 0
      %v2265 = vsel %vm2236, %v2201, 0
      %v2268 = vsel %vm2236, %v2202, 0
      %v2271 = vsel %vm2236, %v2203, 0
      %v2274 = vsel %vm2236, %v2204, 0
      %v2277 = vsel %vm2236, %v2205, 0
      %v2280 = vsel %vm2236, %v2206, 0
      %v2283 = vsel %vm2236, %v2207, 0
      %v2286 = vsel %vm2236, %v2208, 0
      %v2289 = vsel %vm2236, %v2209, 0
      %v2292 = vsel %vm2236, %v2210, 0
      %v2295 = vsel %vm2236, %v2211, 0
      %v2298 = vsel %vm2236, %v2212, 0
      %v2301 = vsel %vm2236, %v2213, 0
      %v2304 = vsel %vm2236, %v2214, 0
      %v2307 = vsel %vm2236, %v2215, 0
      %v2310 = vsel %vm2236, %v2216, 0
      %v2313 = vsel %vm2236, %v2217, 0
      %v2316 = vsel %vm2236, %v2218, 0
      %v2319 = vsel %vm2236, %v2219, 0
      %v2322 = vsel %vm2236, %v2220, 0
      %v2325 = vsel %vm2236, %v2221, 0
      %v2328 = vsel %vm2236, %v2222, 0
      %v2331 = vsel %vm2236, %v2223, 0
      %2333 = vmatpush.bf16.msra.mxu0 0
      %2334 = vmatpush.bf16.msra.mxu0 0
      %2335 = vmatpush.bf16.msra.mxu0 0
      %2336 = vmatpush.bf16.msra.mxu0 0
      %2337 = vmatpush.bf16.msra.mxu0 0
      %2338 = vmatpush.bf16.msra.mxu0 0
      %2339 = vmatpush.bf16.msra.mxu0 0
      %2340 = vmatpush.bf16.msra.mxu0 %v2234
      %2341 = vmatmul.bf16.gmra.mxu0 %v2238
      %v2342 = vpop.f32.mrf.mxu0
      %v2343 = vadd.f32 %v2228, %v2342
      %v2344 = vpop.f32.mrf.mxu0
      %v2345 = vadd.f32 %v2228, %v2344
      %2346 = vmatmul.bf16.gmra.mxu0 %v2241
      %v2347 = vpop.f32.mrf.mxu0
      %v2348 = vadd.f32 %v2228, %v2347
      %v2349 = vpop.f32.mrf.mxu0
      %v2350 = vadd.f32 %v2228, %v2349
      %2351 = vmatmul.bf16.gmra.mxu0 %v2244
      %v2352 = vpop.f32.mrf.mxu0
      %v2353 = vadd.f32 %v2228, %v2352
      %v2354 = vpop.f32.mrf.mxu0
      %v2355 = vadd.f32 %v2228, %v2354
      %2356 = vmatmul.bf16.gmra.mxu0 %v2247
      %v2357 = vpop.f32.mrf.mxu0
      %v2358 = vadd.f32 %v2228, %v2357
      %v2359 = vpop.f32.mrf.mxu0
      %v2360 = vadd.f32 %v2228, %v2359
      %2361 = vmatmul.bf16.gmra.mxu0 %v2250
      %v2362 = vpop.f32.mrf.mxu0
      %v2363 = vadd.f32 %v2228, %v2362
      %v2364 = vpop.f32.mrf.mxu0
      %v2365 = vadd.f32 %v2228, %v2364
      %2366 = vmatmul.bf16.gmra.mxu0 %v2253
      %v2367 = vpop.f32.mrf.mxu0
      %v2368 = vadd.f32 %v2228, %v2367
      %v2369 = vpop.f32.mrf.mxu0
      %v2370 = vadd.f32 %v2228, %v2369
      %2371 = vmatmul.bf16.gmra.mxu0 %v2256
      %v2372 = vpop.f32.mrf.mxu0
      %v2373 = vadd.f32 %v2228, %v2372
      %v2374 = vpop.f32.mrf.mxu0
      %v2375 = vadd.f32 %v2228, %v2374
      %2376 = vmatmul.bf16.gmra.mxu0 %v2259
      %v2377 = vpop.f32.mrf.mxu0
      %v2378 = vadd.f32 %v2228, %v2377
      %v2379 = vpop.f32.mrf.mxu0
      %v2380 = vadd.f32 %v2228, %v2379
      %2381 = vmatmul.bf16.gmra.mxu0 %v2262
      %v2382 = vpop.f32.mrf.mxu0
      %v2383 = vadd.f32 %v2228, %v2382
      %v2384 = vpop.f32.mrf.mxu0
      %v2385 = vadd.f32 %v2228, %v2384
      %2386 = vmatmul.bf16.gmra.mxu0 %v2265
      %v2387 = vpop.f32.mrf.mxu0
      %v2388 = vadd.f32 %v2228, %v2387
      %v2389 = vpop.f32.mrf.mxu0
      %v2390 = vadd.f32 %v2228, %v2389
      %2391 = vmatmul.bf16.gmra.mxu0 %v2268
      %v2392 = vpop.f32.mrf.mxu0
      %v2393 = vadd.f32 %v2228, %v2392
      %v2394 = vpop.f32.mrf.mxu0
      %v2395 = vadd.f32 %v2228, %v2394
      %2396 = vmatmul.bf16.gmra.mxu0 %v2271
      %v2397 = vpop.f32.mrf.mxu0
      %v2398 = vadd.f32 %v2228, %v2397
      %v2399 = vpop.f32.mrf.mxu0
      %v2400 = vadd.f32 %v2228, %v2399
      %2401 = vmatmul.bf16.gmra.mxu0 %v2274
      %v2402 = vpop.f32.mrf.mxu0
      %v2403 = vadd.f32 %v2228, %v2402
      %v2404 = vpop.f32.mrf.mxu0
      %v2405 = vadd.f32 %v2228, %v2404
      %2406 = vmatmul.bf16.gmra.mxu0 %v2277
      %v2407 = vpop.f32.mrf.mxu0
      %v2408 = vadd.f32 %v2228, %v2407
      %v2409 = vpop.f32.mrf.mxu0
      %v2410 = vadd.f32 %v2228, %v2409
      %2411 = vmatmul.bf16.gmra.mxu0 %v2280
      %v2412 = vpop.f32.mrf.mxu0
      %v2413 = vadd.f32 %v2228, %v2412
      %v2414 = vpop.f32.mrf.mxu0
      %v2415 = vadd.f32 %v2228, %v2414
      %2416 = vmatmul.bf16.gmra.mxu0 %v2283
      %v2417 = vpop.f32.mrf.mxu0
      %v2418 = vadd.f32 %v2228, %v2417
      %v2419 = vpop.f32.mrf.mxu0
      %v2420 = vadd.f32 %v2228, %v2419
      %2421 = vmatmul.bf16.gmra.mxu0 %v2286
      %v2422 = vpop.f32.mrf.mxu0
      %v2423 = vadd.f32 %v2228, %v2422
      %v2424 = vpop.f32.mrf.mxu0
      %v2425 = vadd.f32 %v2228, %v2424
      %2426 = vmatmul.bf16.gmra.mxu0 %v2289
      %v2427 = vpop.f32.mrf.mxu0
      %v2428 = vadd.f32 %v2228, %v2427
      %v2429 = vpop.f32.mrf.mxu0
      %v2430 = vadd.f32 %v2228, %v2429
      %2431 = vmatmul.bf16.gmra.mxu0 %v2292
      %v2432 = vpop.f32.mrf.mxu0
      %v2433 = vadd.f32 %v2228, %v2432
      %v2434 = vpop.f32.mrf.mxu0
      %v2435 = vadd.f32 %v2228, %v2434
      %2436 = vmatmul.bf16.gmra.mxu0 %v2295
      %v2437 = vpop.f32.mrf.mxu0
      %v2438 = vadd.f32 %v2228, %v2437
      %v2439 = vpop.f32.mrf.mxu0
      %v2440 = vadd.f32 %v2228, %v2439
      %2441 = vmatmul.bf16.gmra.mxu0 %v2298
      %v2442 = vpop.f32.mrf.mxu0
      %v2443 = vadd.f32 %v2228, %v2442
      %v2444 = vpop.f32.mrf.mxu0
      %v2445 = vadd.f32 %v2228, %v2444
      %2446 = vmatmul.bf16.gmra.mxu0 %v2301
      %v2447 = vpop.f32.mrf.mxu0
      %v2448 = vadd.f32 %v2228, %v2447
      %v2449 = vpop.f32.mrf.mxu0
      %v2450 = vadd.f32 %v2228, %v2449
      %2451 = vmatmul.bf16.gmra.mxu0 %v2304
      %v2452 = vpop.f32.mrf.mxu0
      %v2453 = vadd.f32 %v2228, %v2452
      %v2454 = vpop.f32.mrf.mxu0
      %v2455 = vadd.f32 %v2228, %v2454
      %2456 = vmatmul.bf16.gmra.mxu0 %v2307
      %v2457 = vpop.f32.mrf.mxu0
      %v2458 = vadd.f32 %v2228, %v2457
      %v2459 = vpop.f32.mrf.mxu0
      %v2460 = vadd.f32 %v2228, %v2459
      %2461 = vmatmul.bf16.gmra.mxu0 %v2310
      %v2462 = vpop.f32.mrf.mxu0
      %v2463 = vadd.f32 %v2228, %v2462
      %v2464 = vpop.f32.mrf.mxu0
      %v2465 = vadd.f32 %v2228, %v2464
      %2466 = vmatmul.bf16.gmra.mxu0 %v2313
      %v2467 = vpop.f32.mrf.mxu0
      %v2468 = vadd.f32 %v2228, %v2467
      %v2469 = vpop.f32.mrf.mxu0
      %v2470 = vadd.f32 %v2228, %v2469
      %2471 = vmatmul.bf16.gmra.mxu0 %v2316
      %v2472 = vpop.f32.mrf.mxu0
      %v2473 = vadd.f32 %v2228, %v2472
      %v2474 = vpop.f32.mrf.mxu0
      %v2475 = vadd.f32 %v2228, %v2474
      %2476 = vmatmul.bf16.gmra.mxu0 %v2319
      %v2477 = vpop.f32.mrf.mxu0
      %v2478 = vadd.f32 %v2228, %v2477
      %v2479 = vpop.f32.mrf.mxu0
      %v2480 = vadd.f32 %v2228, %v2479
      %2481 = vmatmul.bf16.gmra.mxu0 %v2322
      %v2482 = vpop.f32.mrf.mxu0
      %v2483 = vadd.f32 %v2228, %v2482
      %v2484 = vpop.f32.mrf.mxu0
      %v2485 = vadd.f32 %v2228, %v2484
      %2486 = vmatmul.bf16.gmra.mxu0 %v2325
      %v2487 = vpop.f32.mrf.mxu0
      %v2488 = vadd.f32 %v2228, %v2487
      %v2489 = vpop.f32.mrf.mxu0
      %v2490 = vadd.f32 %v2228, %v2489
      %2491 = vmatmul.bf16.gmra.mxu0 %v2328
      %v2492 = vpop.f32.mrf.mxu0
      %v2493 = vadd.f32 %v2228, %v2492
      %v2494 = vpop.f32.mrf.mxu0
      %v2495 = vadd.f32 %v2228, %v2494
      %2496 = vmatmul.bf16.gmra.mxu0 %v2331
      %v2497 = vpop.f32.mrf.mxu0
      %v2498 = vadd.f32 %v2228, %v2497
      %v2499 = vpop.f32.mrf.mxu0
      %v2500 = vadd.f32 %v2228, %v2499
      %2501 = vdwg.mxu0
      %v2502 = vmax.f32 %v2343, 0.0
      %v2503 = vmax.f32 %v2345, 0.0
      %v2504 = vmax.f32 %v2348, 0.0
      %v2505 = vmax.f32 %v2350, 0.0
      %v2506 = vmax.f32 %v2353, 0.0
      %v2507 = vmax.f32 %v2355, 0.0
      %v2508 = vmax.f32 %v2358, 0.0
      %v2509 = vmax.f32 %v2360, 0.0
      %v2510 = vmax.f32 %v2363, 0.0
      %v2511 = vmax.f32 %v2365, 0.0
      %v2512 = vmax.f32 %v2368, 0.0
      %v2513 = vmax.f32 %v2370, 0.0
      %v2514 = vmax.f32 %v2373, 0.0
      %v2515 = vmax.f32 %v2375, 0.0
      %v2516 = vmax.f32 %v2378, 0.0
      %v2517 = vmax.f32 %v2380, 0.0
      %v2518 = vmax.f32 %v2383, 0.0
      %v2519 = vmax.f32 %v2385, 0.0
      %v2520 = vmax.f32 %v2388, 0.0
      %v2521 = vmax.f32 %v2390, 0.0
      %v2522 = vmax.f32 %v2393, 0.0
      %v2523 = vmax.f32 %v2395, 0.0
      %v2524 = vmax.f32 %v2398, 0.0
      %v2525 = vmax.f32 %v2400, 0.0
      %v2526 = vmax.f32 %v2403, 0.0
      %v2527 = vmax.f32 %v2405, 0.0
      %v2528 = vmax.f32 %v2408, 0.0
      %v2529 = vmax.f32 %v2410, 0.0
      %v2530 = vmax.f32 %v2413, 0.0
      %v2531 = vmax.f32 %v2415, 0.0
      %v2532 = vmax.f32 %v2418, 0.0
      %v2533 = vmax.f32 %v2420, 0.0
      %v2534 = vmax.f32 %v2423, 0.0
      %v2535 = vmax.f32 %v2425, 0.0
      %v2536 = vmax.f32 %v2428, 0.0
      %v2537 = vmax.f32 %v2430, 0.0
      %v2538 = vmax.f32 %v2433, 0.0
      %v2539 = vmax.f32 %v2435, 0.0
      %v2540 = vmax.f32 %v2438, 0.0
      %v2541 = vmax.f32 %v2440, 0.0
      %v2542 = vmax.f32 %v2443, 0.0
      %v2543 = vmax.f32 %v2445, 0.0
      %v2544 = vmax.f32 %v2448, 0.0
      %v2545 = vmax.f32 %v2450, 0.0
      %v2546 = vmax.f32 %v2453, 0.0
      %v2547 = vmax.f32 %v2455, 0.0
      %v2548 = vmax.f32 %v2458, 0.0
      %v2549 = vmax.f32 %v2460, 0.0
      %v2550 = vmax.f32 %v2463, 0.0
      %v2551 = vmax.f32 %v2465, 0.0
      %v2552 = vmax.f32 %v2468, 0.0
      %v2553 = vmax.f32 %v2470, 0.0
      %v2554 = vmax.f32 %v2473, 0.0
      %v2555 = vmax.f32 %v2475, 0.0
      %v2556 = vmax.f32 %v2478, 0.0
      %v2557 = vmax.f32 %v2480, 0.0
      %v2558 = vmax.f32 %v2483, 0.0
      %v2559 = vmax.f32 %v2485, 0.0
      %v2560 = vmax.f32 %v2488, 0.0
      %v2561 = vmax.f32 %v2490, 0.0
      %v2562 = vmax.f32 %v2493, 0.0
      %v2563 = vmax.f32 %v2495, 0.0
      %v2564 = vmax.f32 %v2498, 0.0
      %v2565 = vmax.f32 %v2500, 0.0
      %v2566 = vld [vmem:[%s640] sm:$0xf]
      %v2567 = vld [vmem:[%s640 + $0x4] sm:$0xf]
      %v2568 = vld [vmem:[%s640 + $0x8] sm:$0xf]
      %v2569 = vld [vmem:[%s640 + $0xc] sm:$0xf]
      %v2570 = vld [vmem:[%s640 + $0x10] sm:$0xf]
      %v2571 = vld [vmem:[%s640 + $0x14] sm:$0xf]
      %v2572 = vld [vmem:[%s640 + $0x18] sm:$0xf]
      %v2573 = vld [vmem:[%s640 + $0x1c] sm:$0xf]
      %v2574 = vld [vmem:[%s640 + $0x20] sm:$0xf]
      %v2575 = vld [vmem:[%s640 + $0x24] sm:$0xf]
      %v2576 = vld [vmem:[%s640 + $0x28] sm:$0xf]
      %v2577 = vld [vmem:[%s640 + $0x2c] sm:$0xf]
      %v2578 = vld [vmem:[%s640 + $0x30] sm:$0xf]
      %v2579 = vld [vmem:[%s640 + $0x34] sm:$0xf]
      %v2580 = vld [vmem:[%s640 + $0x38] sm:$0xf]
      %v2581 = vld [vmem:[%s640 + $0x3c] sm:$0xf]
      %v2582 = vld [vmem:[%s640 + $0x40] sm:$0xf]
      %v2583 = vld [vmem:[%s640 + $0x44] sm:$0xf]
      %v2584 = vld [vmem:[%s640 + $0x48] sm:$0xf]
      %v2585 = vld [vmem:[%s640 + $0x4c] sm:$0xf]
      %v2586 = vld [vmem:[%s640 + $0x50] sm:$0xf]
      %v2587 = vld [vmem:[%s640 + $0x54] sm:$0xf]
      %v2588 = vld [vmem:[%s640 + $0x58] sm:$0xf]
      %v2589 = vld [vmem:[%s640 + $0x5c] sm:$0xf]
      %v2590 = vld [vmem:[%s640 + $0x60] sm:$0xf]
      %v2591 = vld [vmem:[%s640 + $0x64] sm:$0xf]
      %v2592 = vld [vmem:[%s640 + $0x68] sm:$0xf]
      %v2593 = vld [vmem:[%s640 + $0x6c] sm:$0xf]
      %v2594 = vld [vmem:[%s640 + $0x70] sm:$0xf]
      %v2595 = vld [vmem:[%s640 + $0x74] sm:$0xf]
      %v2596 = vld [vmem:[%s640 + $0x78] sm:$0xf]
      %v2597 = vld [vmem:[%s640 + $0x7c] sm:$0xf]
      %v2598 = vld [vmem:[%s640 + $0x80] sm:$0xf]
      %v2599 = vld [vmem:[%s640 + $0x84] sm:$0xf]
      %v2600 = vld [vmem:[%s640 + $0x88] sm:$0xf]
      %v2601 = vld [vmem:[%s640 + $0x8c] sm:$0xf]
      %v2602 = vld [vmem:[%s640 + $0x90] sm:$0xf]
      %v2603 = vld [vmem:[%s640 + $0x94] sm:$0xf]
      %v2604 = vld [vmem:[%s640 + $0x98] sm:$0xf]
      %v2605 = vld [vmem:[%s640 + $0x9c] sm:$0xf]
      %v2606 = vld [vmem:[%s640 + $0xa0] sm:$0xf]
      %v2607 = vld [vmem:[%s640 + $0xa4] sm:$0xf]
      %v2608 = vld [vmem:[%s640 + $0xa8] sm:$0xf]
      %v2609 = vld [vmem:[%s640 + $0xac] sm:$0xf]
      %v2610 = vld [vmem:[%s640 + $0xb0] sm:$0xf]
      %v2611 = vld [vmem:[%s640 + $0xb4] sm:$0xf]
      %v2612 = vld [vmem:[%s640 + $0xb8] sm:$0xf]
      %v2613 = vld [vmem:[%s640 + $0xbc] sm:$0xf]
      %v2614 = vld [vmem:[%s640 + $0xc0] sm:$0xf]
      %v2615 = vld [vmem:[%s640 + $0xc4] sm:$0xf]
      %v2616 = vld [vmem:[%s640 + $0xc8] sm:$0xf]
      %v2617 = vld [vmem:[%s640 + $0xcc] sm:$0xf]
      %v2618 = vld [vmem:[%s640 + $0xd0] sm:$0xf]
      %v2619 = vld [vmem:[%s640 + $0xd4] sm:$0xf]
      %v2620 = vld [vmem:[%s640 + $0xd8] sm:$0xf]
      %v2621 = vld [vmem:[%s640 + $0xdc] sm:$0xf]
      %v2622 = vld [vmem:[%s640 + $0xe0] sm:$0xf]
      %v2623 = vld [vmem:[%s640 + $0xe4] sm:$0xf]
      %v2624 = vld [vmem:[%s640 + $0xe8] sm:$0xf]
      %v2625 = vld [vmem:[%s640 + $0xec] sm:$0xf]
      %v2626 = vld [vmem:[%s640 + $0xf0] sm:$0xf]
      %v2627 = vld [vmem:[%s640 + $0xf4] sm:$0xf]
      %v2628 = vld [vmem:[%s640 + $0xf8] sm:$0xf]
      %v2629 = vld [vmem:[%s640 + $0xfc] sm:$0xf]
      %v2630 = vunpack.c.l.bf16 %v2566
      %v2631 = vunpack.c.l.bf16 %v2567
      %v2632 = vunpack.c.l.bf16 %v2568
      %v2633 = vunpack.c.l.bf16 %v2569
      %v2634 = vunpack.c.l.bf16 %v2570
      %v2635 = vunpack.c.l.bf16 %v2571
      %v2636 = vunpack.c.l.bf16 %v2572
      %v2637 = vunpack.c.l.bf16 %v2573
      %v2638 = vunpack.c.l.bf16 %v2574
      %v2639 = vunpack.c.l.bf16 %v2575
      %v2640 = vunpack.c.l.bf16 %v2576
      %v2641 = vunpack.c.l.bf16 %v2577
      %v2642 = vunpack.c.l.bf16 %v2578
      %v2643 = vunpack.c.l.bf16 %v2579
      %v2644 = vunpack.c.l.bf16 %v2580
      %v2645 = vunpack.c.l.bf16 %v2581
      %v2646 = vunpack.c.l.bf16 %v2582
      %v2647 = vunpack.c.l.bf16 %v2583
      %v2648 = vunpack.c.l.bf16 %v2584
      %v2649 = vunpack.c.l.bf16 %v2585
      %v2650 = vunpack.c.l.bf16 %v2586
      %v2651 = vunpack.c.l.bf16 %v2587
      %v2652 = vunpack.c.l.bf16 %v2588
      %v2653 = vunpack.c.l.bf16 %v2589
      %v2654 = vunpack.c.l.bf16 %v2590
      %v2655 = vunpack.c.l.bf16 %v2591
      %v2656 = vunpack.c.l.bf16 %v2592
      %v2657 = vunpack.c.l.bf16 %v2593
      %v2658 = vunpack.c.l.bf16 %v2594
      %v2659 = vunpack.c.l.bf16 %v2595
      %v2660 = vunpack.c.l.bf16 %v2596
      %v2661 = vunpack.c.l.bf16 %v2597
      %v2662 = vunpack.c.l.bf16 %v2598
      %v2663 = vunpack.c.l.bf16 %v2599
      %v2664 = vunpack.c.l.bf16 %v2600
      %v2665 = vunpack.c.l.bf16 %v2601
      %v2666 = vunpack.c.l.bf16 %v2602
      %v2667 = vunpack.c.l.bf16 %v2603
      %v2668 = vunpack.c.l.bf16 %v2604
      %v2669 = vunpack.c.l.bf16 %v2605
      %v2670 = vunpack.c.l.bf16 %v2606
      %v2671 = vunpack.c.l.bf16 %v2607
      %v2672 = vunpack.c.l.bf16 %v2608
      %v2673 = vunpack.c.l.bf16 %v2609
      %v2674 = vunpack.c.l.bf16 %v2610
      %v2675 = vunpack.c.l.bf16 %v2611
      %v2676 = vunpack.c.l.bf16 %v2612
      %v2677 = vunpack.c.l.bf16 %v2613
      %v2678 = vunpack.c.l.bf16 %v2614
      %v2679 = vunpack.c.l.bf16 %v2615
      %v2680 = vunpack.c.l.bf16 %v2616
      %v2681 = vunpack.c.l.bf16 %v2617
      %v2682 = vunpack.c.l.bf16 %v2618
      %v2683 = vunpack.c.l.bf16 %v2619
      %v2684 = vunpack.c.l.bf16 %v2620
      %v2685 = vunpack.c.l.bf16 %v2621
      %v2686 = vunpack.c.l.bf16 %v2622
      %v2687 = vunpack.c.l.bf16 %v2623
      %v2688 = vunpack.c.l.bf16 %v2624
      %v2689 = vunpack.c.l.bf16 %v2625
      %v2690 = vunpack.c.l.bf16 %v2626
      %v2691 = vunpack.c.l.bf16 %v2627
      %v2692 = vunpack.c.l.bf16 %v2628
      %v2693 = vunpack.c.l.bf16 %v2629
      %v2694 = vld [vmem:[%s646] sm:$0xf]
      %v2695 = vld [vmem:[%s646 + $0x4] sm:$0xf]
      %v2696 = vld [vmem:[%s646 + $0x8] sm:$0xf]
      %v2697 = vld [vmem:[%s646 + $0xc] sm:$0xf]
      %v2698 = vld [vmem:[%s646 + $0x10] sm:$0xf]
      %v2699 = vld [vmem:[%s646 + $0x14] sm:$0xf]
      %v2700 = vld [vmem:[%s646 + $0x18] sm:$0xf]
      %v2701 = vld [vmem:[%s646 + $0x1c] sm:$0xf]
      %v2702 = vld [vmem:[%s646 + $0x20] sm:$0xf]
      %v2703 = vld [vmem:[%s646 + $0x24] sm:$0xf]
      %v2704 = vld [vmem:[%s646 + $0x28] sm:$0xf]
      %v2705 = vld [vmem:[%s646 + $0x2c] sm:$0xf]
      %v2706 = vld [vmem:[%s646 + $0x30] sm:$0xf]
      %v2707 = vld [vmem:[%s646 + $0x34] sm:$0xf]
      %v2708 = vld [vmem:[%s646 + $0x38] sm:$0xf]
      %v2709 = vld [vmem:[%s646 + $0x3c] sm:$0xf]
      %v2710 = vld [vmem:[%s646 + $0x40] sm:$0xf]
      %v2711 = vld [vmem:[%s646 + $0x44] sm:$0xf]
      %v2712 = vld [vmem:[%s646 + $0x48] sm:$0xf]
      %v2713 = vld [vmem:[%s646 + $0x4c] sm:$0xf]
      %v2714 = vld [vmem:[%s646 + $0x50] sm:$0xf]
      %v2715 = vld [vmem:[%s646 + $0x54] sm:$0xf]
      %v2716 = vld [vmem:[%s646 + $0x58] sm:$0xf]
      %v2717 = vld [vmem:[%s646 + $0x5c] sm:$0xf]
      %v2718 = vld [vmem:[%s646 + $0x60] sm:$0xf]
      %v2719 = vld [vmem:[%s646 + $0x64] sm:$0xf]
      %v2720 = vld [vmem:[%s646 + $0x68] sm:$0xf]
      %v2721 = vld [vmem:[%s646 + $0x6c] sm:$0xf]
      %v2722 = vld [vmem:[%s646 + $0x70] sm:$0xf]
      %v2723 = vld [vmem:[%s646 + $0x74] sm:$0xf]
      %v2724 = vld [vmem:[%s646 + $0x78] sm:$0xf]
      %v2725 = vld [vmem:[%s646 + $0x7c] sm:$0xf]
      %v2726 = vld [vmem:[%s646 + $0x80] sm:$0xf]
      %v2727 = vld [vmem:[%s646 + $0x84] sm:$0xf]
      %v2728 = vld [vmem:[%s646 + $0x88] sm:$0xf]
      %v2729 = vld [vmem:[%s646 + $0x8c] sm:$0xf]
      %v2730 = vld [vmem:[%s646 + $0x90] sm:$0xf]
      %v2731 = vld [vmem:[%s646 + $0x94] sm:$0xf]
      %v2732 = vld [vmem:[%s646 + $0x98] sm:$0xf]
      %v2733 = vld [vmem:[%s646 + $0x9c] sm:$0xf]
      %v2734 = vld [vmem:[%s646 + $0xa0] sm:$0xf]
      %v2735 = vld [vmem:[%s646 + $0xa4] sm:$0xf]
      %v2736 = vld [vmem:[%s646 + $0xa8] sm:$0xf]
      %v2737 = vld [vmem:[%s646 + $0xac] sm:$0xf]
      %v2738 = vld [vmem:[%s646 + $0xb0] sm:$0xf]
      %v2739 = vld [vmem:[%s646 + $0xb4] sm:$0xf]
      %v2740 = vld [vmem:[%s646 + $0xb8] sm:$0xf]
      %v2741 = vld [vmem:[%s646 + $0xbc] sm:$0xf]
      %v2742 = vld [vmem:[%s646 + $0xc0] sm:$0xf]
      %v2743 = vld [vmem:[%s646 + $0xc4] sm:$0xf]
      %v2744 = vld [vmem:[%s646 + $0xc8] sm:$0xf]
      %v2745 = vld [vmem:[%s646 + $0xcc] sm:$0xf]
      %v2746 = vld [vmem:[%s646 + $0xd0] sm:$0xf]
      %v2747 = vld [vmem:[%s646 + $0xd4] sm:$0xf]
      %v2748 = vld [vmem:[%s646 + $0xd8] sm:$0xf]
      %v2749 = vld [vmem:[%s646 + $0xdc] sm:$0xf]
      %v2750 = vld [vmem:[%s646 + $0xe0] sm:$0xf]
      %v2751 = vld [vmem:[%s646 + $0xe4] sm:$0xf]
      %v2752 = vld [vmem:[%s646 + $0xe8] sm:$0xf]
      %v2753 = vld [vmem:[%s646 + $0xec] sm:$0xf]
      %v2754 = vld [vmem:[%s646 + $0xf0] sm:$0xf]
      %v2755 = vld [vmem:[%s646 + $0xf4] sm:$0xf]
      %v2756 = vld [vmem:[%s646 + $0xf8] sm:$0xf]
      %v2757 = vld [vmem:[%s646 + $0xfc] sm:$0xf]
      %v2758 = vunpack.c.l.bf16 %v2694
      %v2759 = vunpack.c.l.bf16 %v2695
      %v2760 = vunpack.c.l.bf16 %v2696
      %v2761 = vunpack.c.l.bf16 %v2697
      %v2762 = vunpack.c.l.bf16 %v2698
      %v2763 = vunpack.c.l.bf16 %v2699
      %v2764 = vunpack.c.l.bf16 %v2700
      %v2765 = vunpack.c.l.bf16 %v2701
      %v2766 = vunpack.c.l.bf16 %v2702
      %v2767 = vunpack.c.l.bf16 %v2703
      %v2768 = vunpack.c.l.bf16 %v2704
      %v2769 = vunpack.c.l.bf16 %v2705
      %v2770 = vunpack.c.l.bf16 %v2706
      %v2771 = vunpack.c.l.bf16 %v2707
      %v2772 = vunpack.c.l.bf16 %v2708
      %v2773 = vunpack.c.l.bf16 %v2709
      %v2774 = vunpack.c.l.bf16 %v2710
      %v2775 = vunpack.c.l.bf16 %v2711
      %v2776 = vunpack.c.l.bf16 %v2712
      %v2777 = vunpack.c.l.bf16 %v2713
      %v2778 = vunpack.c.l.bf16 %v2714
      %v2779 = vunpack.c.l.bf16 %v2715
      %v2780 = vunpack.c.l.bf16 %v2716
      %v2781 = vunpack.c.l.bf16 %v2717
      %v2782 = vunpack.c.l.bf16 %v2718
      %v2783 = vunpack.c.l.bf16 %v2719
      %v2784 = vunpack.c.l.bf16 %v2720
      %v2785 = vunpack.c.l.bf16 %v2721
      %v2786 = vunpack.c.l.bf16 %v2722
      %v2787 = vunpack.c.l.bf16 %v2723
      %v2788 = vunpack.c.l.bf16 %v2724
      %v2789 = vunpack.c.l.bf16 %v2725
      %v2790 = vunpack.c.l.bf16 %v2726
      %v2791 = vunpack.c.l.bf16 %v2727
      %v2792 = vunpack.c.l.bf16 %v2728
      %v2793 = vunpack.c.l.bf16 %v2729
      %v2794 = vunpack.c.l.bf16 %v2730
      %v2795 = vunpack.c.l.bf16 %v2731
      %v2796 = vunpack.c.l.bf16 %v2732
      %v2797 = vunpack.c.l.bf16 %v2733
      %v2798 = vunpack.c.l.bf16 %v2734
      %v2799 = vunpack.c.l.bf16 %v2735
      %v2800 = vunpack.c.l.bf16 %v2736
      %v2801 = vunpack.c.l.bf16 %v2737
      %v2802 = vunpack.c.l.bf16 %v2738
      %v2803 = vunpack.c.l.bf16 %v2739
      %v2804 = vunpack.c.l.bf16 %v2740
      %v2805 = vunpack.c.l.bf16 %v2741
      %v2806 = vunpack.c.l.bf16 %v2742
      %v2807 = vunpack.c.l.bf16 %v2743
      %v2808 = vunpack.c.l.bf16 %v2744
      %v2809 = vunpack.c.l.bf16 %v2745
      %v2810 = vunpack.c.l.bf16 %v2746
      %v2811 = vunpack.c.l.bf16 %v2747
      %v2812 = vunpack.c.l.bf16 %v2748
      %v2813 = vunpack.c.l.bf16 %v2749
      %v2814 = vunpack.c.l.bf16 %v2750
      %v2815 = vunpack.c.l.bf16 %v2751
      %v2816 = vunpack.c.l.bf16 %v2752
      %v2817 = vunpack.c.l.bf16 %v2753
      %v2818 = vunpack.c.l.bf16 %v2754
      %v2819 = vunpack.c.l.bf16 %v2755
      %v2820 = vunpack.c.l.bf16 %v2756
      %v2821 = vunpack.c.l.bf16 %v2757
      %v2822 = vmul.f32 %v2630, %v2758
      %v2823 = vmul.f32 %v2631, %v2759
      %v2824 = vmul.f32 %v2632, %v2760
      %v2825 = vmul.f32 %v2633, %v2761
      %v2826 = vmul.f32 %v2634, %v2762
      %v2827 = vmul.f32 %v2635, %v2763
      %v2828 = vmul.f32 %v2636, %v2764
      %v2829 = vmul.f32 %v2637, %v2765
      %v2830 = vmul.f32 %v2638, %v2766
      %v2831 = vmul.f32 %v2639, %v2767
      %v2832 = vmul.f32 %v2640, %v2768
      %v2833 = vmul.f32 %v2641, %v2769
      %v2834 = vmul.f32 %v2642, %v2770
      %v2835 = vmul.f32 %v2643, %v2771
      %v2836 = vmul.f32 %v2644, %v2772
      %v2837 = vmul.f32 %v2645, %v2773
      %v2838 = vmul.f32 %v2646, %v2774
      %v2839 = vmul.f32 %v2647, %v2775
      %v2840 = vmul.f32 %v2648, %v2776
      %v2841 = vmul.f32 %v2649, %v2777
      %v2842 = vmul.f32 %v2650, %v2778
      %v2843 = vmul.f32 %v2651, %v2779
      %v2844 = vmul.f32 %v2652, %v2780
      %v2845 = vmul.f32 %v2653, %v2781
      %v2846 = vmul.f32 %v2654, %v2782
      %v2847 = vmul.f32 %v2655, %v2783
      %v2848 = vmul.f32 %v2656, %v2784
      %v2849 = vmul.f32 %v2657, %v2785
      %v2850 = vmul.f32 %v2658, %v2786
      %v2851 = vmul.f32 %v2659, %v2787
      %v2852 = vmul.f32 %v2660, %v2788
      %v2853 = vmul.f32 %v2661, %v2789
      %v2854 = vmul.f32 %v2662, %v2790
      %v2855 = vmul.f32 %v2663, %v2791
      %v2856 = vmul.f32 %v2664, %v2792
      %v2857 = vmul.f32 %v2665, %v2793
      %v2858 = vmul.f32 %v2666, %v2794
      %v2859 = vmul.f32 %v2667, %v2795
      %v2860 = vmul.f32 %v2668, %v2796
      %v2861 = vmul.f32 %v2669, %v2797
      %v2862 = vmul.f32 %v2670, %v2798
      %v2863 = vmul.f32 %v2671, %v2799
      %v2864 = vmul.f32 %v2672, %v2800
      %v2865 = vmul.f32 %v2673, %v2801
      %v2866 = vmul.f32 %v2674, %v2802
      %v2867 = vmul.f32 %v2675, %v2803
      %v2868 = vmul.f32 %v2676, %v2804
      %v2869 = vmul.f32 %v2677, %v2805
      %v2870 = vmul.f32 %v2678, %v2806
      %v2871 = vmul.f32 %v2679, %v2807
      %v2872 = vmul.f32 %v2680, %v2808
      %v2873 = vmul.f32 %v2681, %v2809
      %v2874 = vmul.f32 %v2682, %v2810
      %v2875 = vmul.f32 %v2683, %v2811
      %v2876 = vmul.f32 %v2684, %v2812
      %v2877 = vmul.f32 %v2685, %v2813
      %v2878 = vmul.f32 %v2686, %v2814
      %v2879 = vmul.f32 %v2687, %v2815
      %v2880 = vmul.f32 %v2688, %v2816
      %v2881 = vmul.f32 %v2689, %v2817
      %v2882 = vmul.f32 %v2690, %v2818
      %v2883 = vmul.f32 %v2691, %v2819
      %v2884 = vmul.f32 %v2692, %v2820
      %v2885 = vmul.f32 %v2693, %v2821
      %v2886 = vld [vmem:[%s12] sm:$0x1]
      %v2888 = vperm.slane %v2886, 0
      %v2890 = vmul.f32 %v2502, %v2888
      %v2891 = vmul.f32 %v2503, %v2888
      %v2892 = vmul.f32 %v2504, %v2888
      %v2893 = vmul.f32 %v2505, %v2888
      %v2894 = vmul.f32 %v2506, %v2888
      %v2895 = vmul.f32 %v2507, %v2888
      %v2896 = vmul.f32 %v2508, %v2888
      %v2897 = vmul.f32 %v2509, %v2888
      %v2898 = vmul.f32 %v2510, %v2888
      %v2899 = vmul.f32 %v2511, %v2888
      %v2900 = vmul.f32 %v2512, %v2888
      %v2901 = vmul.f32 %v2513, %v2888
      %v2902 = vmul.f32 %v2514, %v2888
      %v2903 = vmul.f32 %v2515, %v2888
      %v2904 = vmul.f32 %v2516, %v2888
      %v2905 = vmul.f32 %v2517, %v2888
      %v2906 = vmul.f32 %v2518, %v2888
      %v2907 = vmul.f32 %v2519, %v2888
      %v2908 = vmul.f32 %v2520, %v2888
      %v2909 = vmul.f32 %v2521, %v2888
      %v2910 = vmul.f32 %v2522, %v2888
      %v2911 = vmul.f32 %v2523, %v2888
      %v2912 = vmul.f32 %v2524, %v2888
      %v2913 = vmul.f32 %v2525, %v2888
      %v2914 = vmul.f32 %v2526, %v2888
      %v2915 = vmul.f32 %v2527, %v2888
      %v2916 = vmul.f32 %v2528, %v2888
      %v2917 = vmul.f32 %v2529, %v2888
      %v2918 = vmul.f32 %v2530, %v2888
      %v2919 = vmul.f32 %v2531, %v2888
      %v2920 = vmul.f32 %v2532, %v2888
      %v2921 = vmul.f32 %v2533, %v2888
      %v2922 = vmul.f32 %v2534, %v2888
      %v2923 = vmul.f32 %v2535, %v2888
      %v2924 = vmul.f32 %v2536, %v2888
      %v2925 = vmul.f32 %v2537, %v2888
      %v2926 = vmul.f32 %v2538, %v2888
      %v2927 = vmul.f32 %v2539, %v2888
      %v2928 = vmul.f32 %v2540, %v2888
      %v2929 = vmul.f32 %v2541, %v2888
      %v2930 = vmul.f32 %v2542, %v2888
      %v2931 = vmul.f32 %v2543, %v2888
      %v2932 = vmul.f32 %v2544, %v2888
      %v2933 = vmul.f32 %v2545, %v2888
      %v2934 = vmul.f32 %v2546, %v2888
      %v2935 = vmul.f32 %v2547, %v2888
      %v2936 = vmul.f32 %v2548, %v2888
      %v2937 = vmul.f32 %v2549, %v2888
      %v2938 = vmul.f32 %v2550, %v2888
      %v2939 = vmul.f32 %v2551, %v2888
      %v2940 = vmul.f32 %v2552, %v2888
      %v2941 = vmul.f32 %v2553, %v2888
      %v2942 = vmul.f32 %v2554, %v2888
      %v2943 = vmul.f32 %v2555, %v2888
      %v2944 = vmul.f32 %v2556, %v2888
      %v2945 = vmul.f32 %v2557, %v2888
      %v2946 = vmul.f32 %v2558, %v2888
      %v2947 = vmul.f32 %v2559, %v2888
      %v2948 = vmul.f32 %v2560, %v2888
      %v2949 = vmul.f32 %v2561, %v2888
      %v2950 = vmul.f32 %v2562, %v2888
      %v2951 = vmul.f32 %v2563, %v2888
      %v2952 = vmul.f32 %v2564, %v2888
      %v2953 = vmul.f32 %v2565, %v2888
      %vm2954 = vcmask 64512
      %v2955 = vsel %vm2954, %v2890, 0.0
      %2956 = vadd.xlane.f32.xlu0 %v2955
      %v2957 = vpop.xlane.xlu0 %2956
      %v2958 = vsel %vm2954, %v2891, 0.0
      %2959 = vadd.xlane.f32.xlu0 %v2958
      %v2960 = vpop.xlane.xlu0 %2959
      %v2961 = vsel %vm2954, %v2892, 0.0
      %2962 = vadd.xlane.f32.xlu0 %v2961
      %v2963 = vpop.xlane.xlu0 %2962
      %v2964 = vsel %vm2954, %v2893, 0.0
      %2965 = vadd.xlane.f32.xlu0 %v2964
      %v2966 = vpop.xlane.xlu0 %2965
      %v2967 = vsel %vm2954, %v2894, 0.0
      %2968 = vadd.xlane.f32.xlu0 %v2967
      %v2969 = vpop.xlane.xlu0 %2968
      %v2970 = vsel %vm2954, %v2895, 0.0
      %2971 = vadd.xlane.f32.xlu0 %v2970
      %v2972 = vpop.xlane.xlu0 %2971
      %v2973 = vsel %vm2954, %v2896, 0.0
      %2974 = vadd.xlane.f32.xlu0 %v2973
      %v2975 = vpop.xlane.xlu0 %2974
      %v2976 = vsel %vm2954, %v2897, 0.0
      %2977 = vadd.xlane.f32.xlu0 %v2976
      %v2978 = vpop.xlane.xlu0 %2977
      %v2979 = vsel %vm2954, %v2898, 0.0
      %2980 = vadd.xlane.f32.xlu0 %v2979
      %v2981 = vpop.xlane.xlu0 %2980
      %v2982 = vsel %vm2954, %v2899, 0.0
      %2983 = vadd.xlane.f32.xlu0 %v2982
      %v2984 = vpop.xlane.xlu0 %2983
      %v2985 = vsel %vm2954, %v2900, 0.0
      %2986 = vadd.xlane.f32.xlu0 %v2985
      %v2987 = vpop.xlane.xlu0 %2986
      %v2988 = vsel %vm2954, %v2901, 0.0
      %2989 = vadd.xlane.f32.xlu0 %v2988
      %v2990 = vpop.xlane.xlu0 %2989
      %v2991 = vsel %vm2954, %v2902, 0.0
      %2992 = vadd.xlane.f32.xlu0 %v2991
      %v2993 = vpop.xlane.xlu0 %2992
      %v2994 = vsel %vm2954, %v2903, 0.0
      %2995 = vadd.xlane.f32.xlu0 %v2994
      %v2996 = vpop.xlane.xlu0 %2995
      %v2997 = vsel %vm2954, %v2904, 0.0
      %2998 = vadd.xlane.f32.xlu0 %v2997
      %v2999 = vpop.xlane.xlu0 %2998
      %v3000 = vsel %vm2954, %v2905, 0.0
      %3001 = vadd.xlane.f32.xlu0 %v3000
      %v3002 = vpop.xlane.xlu0 %3001
      %v3003 = vsel %vm2954, %v2906, 0.0
      %3004 = vadd.xlane.f32.xlu0 %v3003
      %v3005 = vpop.xlane.xlu0 %3004
      %v3006 = vsel %vm2954, %v2907, 0.0
      %3007 = vadd.xlane.f32.xlu0 %v3006
      %v3008 = vpop.xlane.xlu0 %3007
      %v3009 = vsel %vm2954, %v2908, 0.0
      %3010 = vadd.xlane.f32.xlu0 %v3009
      %v3011 = vpop.xlane.xlu0 %3010
      %v3012 = vsel %vm2954, %v2909, 0.0
      %3013 = vadd.xlane.f32.xlu0 %v3012
      %v3014 = vpop.xlane.xlu0 %3013
      %v3015 = vsel %vm2954, %v2910, 0.0
      %3016 = vadd.xlane.f32.xlu0 %v3015
      %v3017 = vpop.xlane.xlu0 %3016
      %v3018 = vsel %vm2954, %v2911, 0.0
      %3019 = vadd.xlane.f32.xlu0 %v3018
      %v3020 = vpop.xlane.xlu0 %3019
      %v3021 = vsel %vm2954, %v2912, 0.0
      %3022 = vadd.xlane.f32.xlu0 %v3021
      %v3023 = vpop.xlane.xlu0 %3022
      %v3024 = vsel %vm2954, %v2913, 0.0
      %3025 = vadd.xlane.f32.xlu0 %v3024
      %v3026 = vpop.xlane.xlu0 %3025
      %v3027 = vsel %vm2954, %v2914, 0.0
      %3028 = vadd.xlane.f32.xlu0 %v3027
      %v3029 = vpop.xlane.xlu0 %3028
      %v3030 = vsel %vm2954, %v2915, 0.0
      %3031 = vadd.xlane.f32.xlu0 %v3030
      %v3032 = vpop.xlane.xlu0 %3031
      %v3033 = vsel %vm2954, %v2916, 0.0
      %3034 = vadd.xlane.f32.xlu0 %v3033
      %v3035 = vpop.xlane.xlu0 %3034
      %v3036 = vsel %vm2954, %v2917, 0.0
      %3037 = vadd.xlane.f32.xlu0 %v3036
      %v3038 = vpop.xlane.xlu0 %3037
      %v3039 = vsel %vm2954, %v2918, 0.0
      %3040 = vadd.xlane.f32.xlu0 %v3039
      %v3041 = vpop.xlane.xlu0 %3040
      %v3042 = vsel %vm2954, %v2919, 0.0
      %3043 = vadd.xlane.f32.xlu0 %v3042
      %v3044 = vpop.xlane.xlu0 %3043
      %v3045 = vsel %vm2954, %v2920, 0.0
      %3046 = vadd.xlane.f32.xlu0 %v3045
      %v3047 = vpop.xlane.xlu0 %3046
      %v3048 = vsel %vm2954, %v2921, 0.0
      %3049 = vadd.xlane.f32.xlu0 %v3048
      %v3050 = vpop.xlane.xlu0 %3049
      %v3051 = vsel %vm2954, %v2922, 0.0
      %3052 = vadd.xlane.f32.xlu0 %v3051
      %v3053 = vpop.xlane.xlu0 %3052
      %v3054 = vsel %vm2954, %v2923, 0.0
      %3055 = vadd.xlane.f32.xlu0 %v3054
      %v3056 = vpop.xlane.xlu0 %3055
      %v3057 = vsel %vm2954, %v2924, 0.0
      %3058 = vadd.xlane.f32.xlu0 %v3057
      %v3059 = vpop.xlane.xlu0 %3058
      %v3060 = vsel %vm2954, %v2925, 0.0
      %3061 = vadd.xlane.f32.xlu0 %v3060
      %v3062 = vpop.xlane.xlu0 %3061
      %v3063 = vsel %vm2954, %v2926, 0.0
      %3064 = vadd.xlane.f32.xlu0 %v3063
      %v3065 = vpop.xlane.xlu0 %3064
      %v3066 = vsel %vm2954, %v2927, 0.0
      %3067 = vadd.xlane.f32.xlu0 %v3066
      %v3068 = vpop.xlane.xlu0 %3067
      %v3069 = vsel %vm2954, %v2928, 0.0
      %3070 = vadd.xlane.f32.xlu0 %v3069
      %v3071 = vpop.xlane.xlu0 %3070
      %v3072 = vsel %vm2954, %v2929, 0.0
      %3073 = vadd.xlane.f32.xlu0 %v3072
      %v3074 = vpop.xlane.xlu0 %3073
      %v3075 = vsel %vm2954, %v2930, 0.0
      %3076 = vadd.xlane.f32.xlu0 %v3075
      %v3077 = vpop.xlane.xlu0 %3076
      %v3078 = vsel %vm2954, %v2931, 0.0
      %3079 = vadd.xlane.f32.xlu0 %v3078
      %v3080 = vpop.xlane.xlu0 %3079
      %v3081 = vsel %vm2954, %v2932, 0.0
      %3082 = vadd.xlane.f32.xlu0 %v3081
      %v3083 = vpop.xlane.xlu0 %3082
      %v3084 = vsel %vm2954, %v2933, 0.0
      %3085 = vadd.xlane.f32.xlu0 %v3084
      %v3086 = vpop.xlane.xlu0 %3085
      %v3087 = vsel %vm2954, %v2934, 0.0
      %3088 = vadd.xlane.f32.xlu0 %v3087
      %v3089 = vpop.xlane.xlu0 %3088
      %v3090 = vsel %vm2954, %v2935, 0.0
      %3091 = vadd.xlane.f32.xlu0 %v3090
      %v3092 = vpop.xlane.xlu0 %3091
      %v3093 = vsel %vm2954, %v2936, 0.0
      %3094 = vadd.xlane.f32.xlu0 %v3093
      %v3095 = vpop.xlane.xlu0 %3094
      %v3096 = vsel %vm2954, %v2937, 0.0
      %3097 = vadd.xlane.f32.xlu0 %v3096
      %v3098 = vpop.xlane.xlu0 %3097
      %v3099 = vsel %vm2954, %v2938, 0.0
      %3100 = vadd.xlane.f32.xlu0 %v3099
      %v3101 = vpop.xlane.xlu0 %3100
      %v3102 = vsel %vm2954, %v2939, 0.0
      %3103 = vadd.xlane.f32.xlu0 %v3102
      %v3104 = vpop.xlane.xlu0 %3103
      %v3105 = vsel %vm2954, %v2940, 0.0
      %3106 = vadd.xlane.f32.xlu0 %v3105
      %v3107 = vpop.xlane.xlu0 %3106
      %v3108 = vsel %vm2954, %v2941, 0.0
      %3109 = vadd.xlane.f32.xlu0 %v3108
      %v3110 = vpop.xlane.xlu0 %3109
      %v3111 = vsel %vm2954, %v2942, 0.0
      %3112 = vadd.xlane.f32.xlu0 %v3111
      %v3113 = vpop.xlane.xlu0 %3112
      %v3114 = vsel %vm2954, %v2943, 0.0
      %3115 = vadd.xlane.f32.xlu0 %v3114
      %v3116 = vpop.xlane.xlu0 %3115
      %v3117 = vsel %vm2954, %v2944, 0.0
      %3118 = vadd.xlane.f32.xlu0 %v3117
      %v3119 = vpop.xlane.xlu0 %3118
      %v3120 = vsel %vm2954, %v2945, 0.0
      %3121 = vadd.xlane.f32.xlu0 %v3120
      %v3122 = vpop.xlane.xlu0 %3121
      %v3123 = vsel %vm2954, %v2946, 0.0
      %3124 = vadd.xlane.f32.xlu0 %v3123
      %v3125 = vpop.xlane.xlu0 %3124
      %v3126 = vsel %vm2954, %v2947, 0.0
      %3127 = vadd.xlane.f32.xlu0 %v3126
      %v3128 = vpop.xlane.xlu0 %3127
      %v3129 = vsel %vm2954, %v2948, 0.0
      %3130 = vadd.xlane.f32.xlu0 %v3129
      %v3131 = vpop.xlane.xlu0 %3130
      %v3132 = vsel %vm2954, %v2949, 0.0
      %3133 = vadd.xlane.f32.xlu0 %v3132
      %v3134 = vpop.xlane.xlu0 %3133
      %v3135 = vsel %vm2954, %v2950, 0.0
      %3136 = vadd.xlane.f32.xlu0 %v3135
      %v3137 = vpop.xlane.xlu0 %3136
      %v3138 = vsel %vm2954, %v2951, 0.0
      %3139 = vadd.xlane.f32.xlu0 %v3138
      %v3140 = vpop.xlane.xlu0 %3139
      %v3141 = vsel %vm2954, %v2952, 0.0
      %3142 = vadd.xlane.f32.xlu0 %v3141
      %v3143 = vpop.xlane.xlu0 %3142
      %v3144 = vsel %vm2954, %v2953, 0.0
      %3145 = vadd.xlane.f32.xlu0 %v3144
      %v3146 = vpop.xlane.xlu0 %3145
      %v3147 = vld [vmem:[%s13] sm:$0x1]
      %v3149 = vperm.slane %v3147, 0
      %v3151 = vmul.f32 %v2822, %v3149
      %v3152 = vmul.f32 %v2823, %v3149
      %v3153 = vmul.f32 %v2824, %v3149
      %v3154 = vmul.f32 %v2825, %v3149
      %v3155 = vmul.f32 %v2826, %v3149
      %v3156 = vmul.f32 %v2827, %v3149
      %v3157 = vmul.f32 %v2828, %v3149
      %v3158 = vmul.f32 %v2829, %v3149
      %v3159 = vmul.f32 %v2830, %v3149
      %v3160 = vmul.f32 %v2831, %v3149
      %v3161 = vmul.f32 %v2832, %v3149
      %v3162 = vmul.f32 %v2833, %v3149
      %v3163 = vmul.f32 %v2834, %v3149
      %v3164 = vmul.f32 %v2835, %v3149
      %v3165 = vmul.f32 %v2836, %v3149
      %v3166 = vmul.f32 %v2837, %v3149
      %v3167 = vmul.f32 %v2838, %v3149
      %v3168 = vmul.f32 %v2839, %v3149
      %v3169 = vmul.f32 %v2840, %v3149
      %v3170 = vmul.f32 %v2841, %v3149
      %v3171 = vmul.f32 %v2842, %v3149
      %v3172 = vmul.f32 %v2843, %v3149
      %v3173 = vmul.f32 %v2844, %v3149
      %v3174 = vmul.f32 %v2845, %v3149
      %v3175 = vmul.f32 %v2846, %v3149
      %v3176 = vmul.f32 %v2847, %v3149
      %v3177 = vmul.f32 %v2848, %v3149
      %v3178 = vmul.f32 %v2849, %v3149
      %v3179 = vmul.f32 %v2850, %v3149
      %v3180 = vmul.f32 %v2851, %v3149
      %v3181 = vmul.f32 %v2852, %v3149
      %v3182 = vmul.f32 %v2853, %v3149
      %v3183 = vmul.f32 %v2854, %v3149
      %v3184 = vmul.f32 %v2855, %v3149
      %v3185 = vmul.f32 %v2856, %v3149
      %v3186 = vmul.f32 %v2857, %v3149
      %v3187 = vmul.f32 %v2858, %v3149
      %v3188 = vmul.f32 %v2859, %v3149
      %v3189 = vmul.f32 %v2860, %v3149
      %v3190 = vmul.f32 %v2861, %v3149
      %v3191 = vmul.f32 %v2862, %v3149
      %v3192 = vmul.f32 %v2863, %v3149
      %v3193 = vmul.f32 %v2864, %v3149
      %v3194 = vmul.f32 %v2865, %v3149
      %v3195 = vmul.f32 %v2866, %v3149
      %v3196 = vmul.f32 %v2867, %v3149
      %v3197 = vmul.f32 %v2868, %v3149
      %v3198 = vmul.f32 %v2869, %v3149
      %v3199 = vmul.f32 %v2870, %v3149
      %v3200 = vmul.f32 %v2871, %v3149
      %v3201 = vmul.f32 %v2872, %v3149
      %v3202 = vmul.f32 %v2873, %v3149
      %v3203 = vmul.f32 %v2874, %v3149
      %v3204 = vmul.f32 %v2875, %v3149
      %v3205 = vmul.f32 %v2876, %v3149
      %v3206 = vmul.f32 %v2877, %v3149
      %v3207 = vmul.f32 %v2878, %v3149
      %v3208 = vmul.f32 %v2879, %v3149
      %v3209 = vmul.f32 %v2880, %v3149
      %v3210 = vmul.f32 %v2881, %v3149
      %v3211 = vmul.f32 %v2882, %v3149
      %v3212 = vmul.f32 %v2883, %v3149
      %v3213 = vmul.f32 %v2884, %v3149
      %v3214 = vmul.f32 %v2885, %v3149
      %v3215 = vsel %vm2954, %v3151, 0.0
      %3216 = vadd.xlane.f32.xlu0 %v3215
      %v3217 = vpop.xlane.xlu0 %3216
      %v3218 = vsel %vm2954, %v3152, 0.0
      %3219 = vadd.xlane.f32.xlu0 %v3218
      %v3220 = vpop.xlane.xlu0 %3219
      %v3221 = vsel %vm2954, %v3153, 0.0
      %3222 = vadd.xlane.f32.xlu0 %v3221
      %v3223 = vpop.xlane.xlu0 %3222
      %v3224 = vsel %vm2954, %v3154, 0.0
      %3225 = vadd.xlane.f32.xlu0 %v3224
      %v3226 = vpop.xlane.xlu0 %3225
      %v3227 = vsel %vm2954, %v3155, 0.0
      %3228 = vadd.xlane.f32.xlu0 %v3227
      %v3229 = vpop.xlane.xlu0 %3228
      %v3230 = vsel %vm2954, %v3156, 0.0
      %3231 = vadd.xlane.f32.xlu0 %v3230
      %v3232 = vpop.xlane.xlu0 %3231
      %v3233 = vsel %vm2954, %v3157, 0.0
      %3234 = vadd.xlane.f32.xlu0 %v3233
      %v3235 = vpop.xlane.xlu0 %3234
      %v3236 = vsel %vm2954, %v3158, 0.0
      %3237 = vadd.xlane.f32.xlu0 %v3236
      %v3238 = vpop.xlane.xlu0 %3237
      %v3239 = vsel %vm2954, %v3159, 0.0
      %3240 = vadd.xlane.f32.xlu0 %v3239
      %v3241 = vpop.xlane.xlu0 %3240
      %v3242 = vsel %vm2954, %v3160, 0.0
      %3243 = vadd.xlane.f32.xlu0 %v3242
      %v3244 = vpop.xlane.xlu0 %3243
      %v3245 = vsel %vm2954, %v3161, 0.0
      %3246 = vadd.xlane.f32.xlu0 %v3245
      %v3247 = vpop.xlane.xlu0 %3246
      %v3248 = vsel %vm2954, %v3162, 0.0
      %3249 = vadd.xlane.f32.xlu0 %v3248
      %v3250 = vpop.xlane.xlu0 %3249
      %v3251 = vsel %vm2954, %v3163, 0.0
      %3252 = vadd.xlane.f32.xlu0 %v3251
      %v3253 = vpop.xlane.xlu0 %3252
      %v3254 = vsel %vm2954, %v3164, 0.0
      %3255 = vadd.xlane.f32.xlu0 %v3254
      %v3256 = vpop.xlane.xlu0 %3255
      %v3257 = vsel %vm2954, %v3165, 0.0
      %3258 = vadd.xlane.f32.xlu0 %v3257
      %v3259 = vpop.xlane.xlu0 %3258
      %v3260 = vsel %vm2954, %v3166, 0.0
      %3261 = vadd.xlane.f32.xlu0 %v3260
      %v3262 = vpop.xlane.xlu0 %3261
      %v3263 = vsel %vm2954, %v3167, 0.0
      %3264 = vadd.xlane.f32.xlu0 %v3263
      %v3265 = vpop.xlane.xlu0 %3264
      %v3266 = vsel %vm2954, %v3168, 0.0
      %3267 = vadd.xlane.f32.xlu0 %v3266
      %v3268 = vpop.xlane.xlu0 %3267
      %v3269 = vsel %vm2954, %v3169, 0.0
      %3270 = vadd.xlane.f32.xlu0 %v3269
      %v3271 = vpop.xlane.xlu0 %3270
      %v3272 = vsel %vm2954, %v3170, 0.0
      %3273 = vadd.xlane.f32.xlu0 %v3272
      %v3274 = vpop.xlane.xlu0 %3273
      %v3275 = vsel %vm2954, %v3171, 0.0
      %3276 = vadd.xlane.f32.xlu0 %v3275
      %v3277 = vpop.xlane.xlu0 %3276
      %v3278 = vsel %vm2954, %v3172, 0.0
      %3279 = vadd.xlane.f32.xlu0 %v3278
      %v3280 = vpop.xlane.xlu0 %3279
      %v3281 = vsel %vm2954, %v3173, 0.0
      %3282 = vadd.xlane.f32.xlu0 %v3281
      %v3283 = vpop.xlane.xlu0 %3282
      %v3284 = vsel %vm2954, %v3174, 0.0
      %3285 = vadd.xlane.f32.xlu0 %v3284
      %v3286 = vpop.xlane.xlu0 %3285
      %v3287 = vsel %vm2954, %v3175, 0.0
      %3288 = vadd.xlane.f32.xlu0 %v3287
      %v3289 = vpop.xlane.xlu0 %3288
      %v3290 = vsel %vm2954, %v3176, 0.0
      %3291 = vadd.xlane.f32.xlu0 %v3290
      %v3292 = vpop.xlane.xlu0 %3291
      %v3293 = vsel %vm2954, %v3177, 0.0
      %3294 = vadd.xlane.f32.xlu0 %v3293
      %v3295 = vpop.xlane.xlu0 %3294
      %v3296 = vsel %vm2954, %v3178, 0.0
      %3297 = vadd.xlane.f32.xlu0 %v3296
      %v3298 = vpop.xlane.xlu0 %3297
      %v3299 = vsel %vm2954, %v3179, 0.0
      %3300 = vadd.xlane.f32.xlu0 %v3299
      %v3301 = vpop.xlane.xlu0 %3300
      %v3302 = vsel %vm2954, %v3180, 0.0
      %3303 = vadd.xlane.f32.xlu0 %v3302
      %v3304 = vpop.xlane.xlu0 %3303
      %v3305 = vsel %vm2954, %v3181, 0.0
      %3306 = vadd.xlane.f32.xlu0 %v3305
      %v3307 = vpop.xlane.xlu0 %3306
      %v3308 = vsel %vm2954, %v3182, 0.0
      %3309 = vadd.xlane.f32.xlu0 %v3308
      %v3310 = vpop.xlane.xlu0 %3309
      %v3311 = vsel %vm2954, %v3183, 0.0
      %3312 = vadd.xlane.f32.xlu0 %v3311
      %v3313 = vpop.xlane.xlu0 %3312
      %v3314 = vsel %vm2954, %v3184, 0.0
      %3315 = vadd.xlane.f32.xlu0 %v3314
      %v3316 = vpop.xlane.xlu0 %3315
      %v3317 = vsel %vm2954, %v3185, 0.0
      %3318 = vadd.xlane.f32.xlu0 %v3317
      %v3319 = vpop.xlane.xlu0 %3318
      %v3320 = vsel %vm2954, %v3186, 0.0
      %3321 = vadd.xlane.f32.xlu0 %v3320
      %v3322 = vpop.xlane.xlu0 %3321
      %v3323 = vsel %vm2954, %v3187, 0.0
      %3324 = vadd.xlane.f32.xlu0 %v3323
      %v3325 = vpop.xlane.xlu0 %3324
      %v3326 = vsel %vm2954, %v3188, 0.0
      %3327 = vadd.xlane.f32.xlu0 %v3326
      %v3328 = vpop.xlane.xlu0 %3327
      %v3329 = vsel %vm2954, %v3189, 0.0
      %3330 = vadd.xlane.f32.xlu0 %v3329
      %v3331 = vpop.xlane.xlu0 %3330
      %v3332 = vsel %vm2954, %v3190, 0.0
      %3333 = vadd.xlane.f32.xlu0 %v3332
      %v3334 = vpop.xlane.xlu0 %3333
      %v3335 = vsel %vm2954, %v3191, 0.0
      %3336 = vadd.xlane.f32.xlu0 %v3335
      %v3337 = vpop.xlane.xlu0 %3336
      %v3338 = vsel %vm2954, %v3192, 0.0
      %3339 = vadd.xlane.f32.xlu0 %v3338
      %v3340 = vpop.xlane.xlu0 %3339
      %v3341 = vsel %vm2954, %v3193, 0.0
      %3342 = vadd.xlane.f32.xlu0 %v3341
      %v3343 = vpop.xlane.xlu0 %3342
      %v3344 = vsel %vm2954, %v3194, 0.0
      %3345 = vadd.xlane.f32.xlu0 %v3344
      %v3346 = vpop.xlane.xlu0 %3345
      %v3347 = vsel %vm2954, %v3195, 0.0
      %3348 = vadd.xlane.f32.xlu0 %v3347
      %v3349 = vpop.xlane.xlu0 %3348
      %v3350 = vsel %vm2954, %v3196, 0.0
      %3351 = vadd.xlane.f32.xlu0 %v3350
      %v3352 = vpop.xlane.xlu0 %3351
      %v3353 = vsel %vm2954, %v3197, 0.0
      %3354 = vadd.xlane.f32.xlu0 %v3353
      %v3355 = vpop.xlane.xlu0 %3354
      %v3356 = vsel %vm2954, %v3198, 0.0
      %3357 = vadd.xlane.f32.xlu0 %v3356
      %v3358 = vpop.xlane.xlu0 %3357
      %v3359 = vsel %vm2954, %v3199, 0.0
      %3360 = vadd.xlane.f32.xlu0 %v3359
      %v3361 = vpop.xlane.xlu0 %3360
      %v3362 = vsel %vm2954, %v3200, 0.0
      %3363 = vadd.xlane.f32.xlu0 %v3362
      %v3364 = vpop.xlane.xlu0 %3363
      %v3365 = vsel %vm2954, %v3201, 0.0
      %3366 = vadd.xlane.f32.xlu0 %v3365
      %v3367 = vpop.xlane.xlu0 %3366
      %v3368 = vsel %vm2954, %v3202, 0.0
      %3369 = vadd.xlane.f32.xlu0 %v3368
      %v3370 = vpop.xlane.xlu0 %3369
      %v3371 = vsel %vm2954, %v3203, 0.0
      %3372 = vadd.xlane.f32.xlu0 %v3371
      %v3373 = vpop.xlane.xlu0 %3372
      %v3374 = vsel %vm2954, %v3204, 0.0
      %3375 = vadd.xlane.f32.xlu0 %v3374
      %v3376 = vpop.xlane.xlu0 %3375
      %v3377 = vsel %vm2954, %v3205, 0.0
      %3378 = vadd.xlane.f32.xlu0 %v3377
      %v3379 = vpop.xlane.xlu0 %3378
      %v3380 = vsel %vm2954, %v3206, 0.0
      %3381 = vadd.xlane.f32.xlu0 %v3380
      %v3382 = vpop.xlane.xlu0 %3381
      %v3383 = vsel %vm2954, %v3207, 0.0
      %3384 = vadd.xlane.f32.xlu0 %v3383
      %v3385 = vpop.xlane.xlu0 %3384
      %v3386 = vsel %vm2954, %v3208, 0.0
      %3387 = vadd.xlane.f32.xlu0 %v3386
      %v3388 = vpop.xlane.xlu0 %3387
      %v3389 = vsel %vm2954, %v3209, 0.0
      %3390 = vadd.xlane.f32.xlu0 %v3389
      %v3391 = vpop.xlane.xlu0 %3390
      %v3392 = vsel %vm2954, %v3210, 0.0
      %3393 = vadd.xlane.f32.xlu0 %v3392
      %v3394 = vpop.xlane.xlu0 %3393
      %v3395 = vsel %vm2954, %v3211, 0.0
      %3396 = vadd.xlane.f32.xlu0 %v3395
      %v3397 = vpop.xlane.xlu0 %3396
      %v3398 = vsel %vm2954, %v3212, 0.0
      %3399 = vadd.xlane.f32.xlu0 %v3398
      %v3400 = vpop.xlane.xlu0 %3399
      %v3401 = vsel %vm2954, %v3213, 0.0
      %3402 = vadd.xlane.f32.xlu0 %v3401
      %v3403 = vpop.xlane.xlu0 %3402
      %v3404 = vsel %vm2954, %v3214, 0.0
      %3405 = vadd.xlane.f32.xlu0 %v3404
      %v3406 = vpop.xlane.xlu0 %3405
      %v3407 = vadd.f32 %v2957, %v3217
      %v3408 = vadd.f32 %v2960, %v3220
      %v3409 = vadd.f32 %v2963, %v3223
      %v3410 = vadd.f32 %v2966, %v3226
      %v3411 = vadd.f32 %v2969, %v3229
      %v3412 = vadd.f32 %v2972, %v3232
      %v3413 = vadd.f32 %v2975, %v3235
      %v3414 = vadd.f32 %v2978, %v3238
      %v3415 = vadd.f32 %v2981, %v3241
      %v3416 = vadd.f32 %v2984, %v3244
      %v3417 = vadd.f32 %v2987, %v3247
      %v3418 = vadd.f32 %v2990, %v3250
      %v3419 = vadd.f32 %v2993, %v3253
      %v3420 = vadd.f32 %v2996, %v3256
      %v3421 = vadd.f32 %v2999, %v3259
      %v3422 = vadd.f32 %v3002, %v3262
      %v3423 = vadd.f32 %v3005, %v3265
      %v3424 = vadd.f32 %v3008, %v3268
      %v3425 = vadd.f32 %v3011, %v3271
      %v3426 = vadd.f32 %v3014, %v3274
      %v3427 = vadd.f32 %v3017, %v3277
      %v3428 = vadd.f32 %v3020, %v3280
      %v3429 = vadd.f32 %v3023, %v3283
      %v3430 = vadd.f32 %v3026, %v3286
      %v3431 = vadd.f32 %v3029, %v3289
      %v3432 = vadd.f32 %v3032, %v3292
      %v3433 = vadd.f32 %v3035, %v3295
      %v3434 = vadd.f32 %v3038, %v3298
      %v3435 = vadd.f32 %v3041, %v3301
      %v3436 = vadd.f32 %v3044, %v3304
      %v3437 = vadd.f32 %v3047, %v3307
      %v3438 = vadd.f32 %v3050, %v3310
      %v3439 = vadd.f32 %v3053, %v3313
      %v3440 = vadd.f32 %v3056, %v3316
      %v3441 = vadd.f32 %v3059, %v3319
      %v3442 = vadd.f32 %v3062, %v3322
      %v3443 = vadd.f32 %v3065, %v3325
      %v3444 = vadd.f32 %v3068, %v3328
      %v3445 = vadd.f32 %v3071, %v3331
      %v3446 = vadd.f32 %v3074, %v3334
      %v3447 = vadd.f32 %v3077, %v3337
      %v3448 = vadd.f32 %v3080, %v3340
      %v3449 = vadd.f32 %v3083, %v3343
      %v3450 = vadd.f32 %v3086, %v3346
      %v3451 = vadd.f32 %v3089, %v3349
      %v3452 = vadd.f32 %v3092, %v3352
      %v3453 = vadd.f32 %v3095, %v3355
      %v3454 = vadd.f32 %v3098, %v3358
      %v3455 = vadd.f32 %v3101, %v3361
      %v3456 = vadd.f32 %v3104, %v3364
      %v3457 = vadd.f32 %v3107, %v3367
      %v3458 = vadd.f32 %v3110, %v3370
      %v3459 = vadd.f32 %v3113, %v3373
      %v3460 = vadd.f32 %v3116, %v3376
      %v3461 = vadd.f32 %v3119, %v3379
      %v3462 = vadd.f32 %v3122, %v3382
      %v3463 = vadd.f32 %v3125, %v3385
      %v3464 = vadd.f32 %v3128, %v3388
      %v3465 = vadd.f32 %v3131, %v3391
      %v3466 = vadd.f32 %v3134, %v3394
      %v3467 = vadd.f32 %v3137, %v3397
      %v3468 = vadd.f32 %v3140, %v3400
      %v3469 = vadd.f32 %v3143, %v3403
      %v3470 = vadd.f32 %v3146, %v3406
      %v3471 = vld [vmem:[%s652] sm:$0xf]
      %v3472 = vld [vmem:[%s652 + $0x4] sm:$0xf]
      %v3473 = vld [vmem:[%s652 + $0x8] sm:$0xf]
      %v3474 = vld [vmem:[%s652 + $0xc] sm:$0xf]
      %v3475 = vld [vmem:[%s652 + $0x10] sm:$0xf]
      %v3476 = vld [vmem:[%s652 + $0x14] sm:$0xf]
      %v3477 = vld [vmem:[%s652 + $0x18] sm:$0xf]
      %v3478 = vld [vmem:[%s652 + $0x1c] sm:$0xf]
      %v3479 = vld [vmem:[%s652 + $0x20] sm:$0xf]
      %v3480 = vld [vmem:[%s652 + $0x24] sm:$0xf]
      %v3481 = vld [vmem:[%s652 + $0x28] sm:$0xf]
      %v3482 = vld [vmem:[%s652 + $0x2c] sm:$0xf]
      %v3483 = vld [vmem:[%s652 + $0x30] sm:$0xf]
      %v3484 = vld [vmem:[%s652 + $0x34] sm:$0xf]
      %v3485 = vld [vmem:[%s652 + $0x38] sm:$0xf]
      %v3486 = vld [vmem:[%s652 + $0x3c] sm:$0xf]
      %v3487 = vld [vmem:[%s652 + $0x40] sm:$0xf]
      %v3488 = vld [vmem:[%s652 + $0x44] sm:$0xf]
      %v3489 = vld [vmem:[%s652 + $0x48] sm:$0xf]
      %v3490 = vld [vmem:[%s652 + $0x4c] sm:$0xf]
      %v3491 = vld [vmem:[%s652 + $0x50] sm:$0xf]
      %v3492 = vld [vmem:[%s652 + $0x54] sm:$0xf]
      %v3493 = vld [vmem:[%s652 + $0x58] sm:$0xf]
      %v3494 = vld [vmem:[%s652 + $0x5c] sm:$0xf]
      %v3495 = vld [vmem:[%s652 + $0x60] sm:$0xf]
      %v3496 = vld [vmem:[%s652 + $0x64] sm:$0xf]
      %v3497 = vld [vmem:[%s652 + $0x68] sm:$0xf]
      %v3498 = vld [vmem:[%s652 + $0x6c] sm:$0xf]
      %v3499 = vld [vmem:[%s652 + $0x70] sm:$0xf]
      %v3500 = vld [vmem:[%s652 + $0x74] sm:$0xf]
      %v3501 = vld [vmem:[%s652 + $0x78] sm:$0xf]
      %v3502 = vld [vmem:[%s652 + $0x7c] sm:$0xf]
      %v3503 = vld [vmem:[%s652 + $0x80] sm:$0xf]
      %v3504 = vld [vmem:[%s652 + $0x84] sm:$0xf]
      %v3505 = vld [vmem:[%s652 + $0x88] sm:$0xf]
      %v3506 = vld [vmem:[%s652 + $0x8c] sm:$0xf]
      %v3507 = vld [vmem:[%s652 + $0x90] sm:$0xf]
      %v3508 = vld [vmem:[%s652 + $0x94] sm:$0xf]
      %v3509 = vld [vmem:[%s652 + $0x98] sm:$0xf]
      %v3510 = vld [vmem:[%s652 + $0x9c] sm:$0xf]
      %v3511 = vld [vmem:[%s652 + $0xa0] sm:$0xf]
      %v3512 = vld [vmem:[%s652 + $0xa4] sm:$0xf]
      %v3513 = vld [vmem:[%s652 + $0xa8] sm:$0xf]
      %v3514 = vld [vmem:[%s652 + $0xac] sm:$0xf]
      %v3515 = vld [vmem:[%s652 + $0xb0] sm:$0xf]
      %v3516 = vld [vmem:[%s652 + $0xb4] sm:$0xf]
      %v3517 = vld [vmem:[%s652 + $0xb8] sm:$0xf]
      %v3518 = vld [vmem:[%s652 + $0xbc] sm:$0xf]
      %v3519 = vld [vmem:[%s652 + $0xc0] sm:$0xf]
      %v3520 = vld [vmem:[%s652 + $0xc4] sm:$0xf]
      %v3521 = vld [vmem:[%s652 + $0xc8] sm:$0xf]
      %v3522 = vld [vmem:[%s652 + $0xcc] sm:$0xf]
      %v3523 = vld [vmem:[%s652 + $0xd0] sm:$0xf]
      %v3524 = vld [vmem:[%s652 + $0xd4] sm:$0xf]
      %v3525 = vld [vmem:[%s652 + $0xd8] sm:$0xf]
      %v3526 = vld [vmem:[%s652 + $0xdc] sm:$0xf]
      %v3527 = vld [vmem:[%s652 + $0xe0] sm:$0xf]
      %v3528 = vld [vmem:[%s652 + $0xe4] sm:$0xf]
      %v3529 = vld [vmem:[%s652 + $0xe8] sm:$0xf]
      %v3530 = vld [vmem:[%s652 + $0xec] sm:$0xf]
      %v3531 = vld [vmem:[%s652 + $0xf0] sm:$0xf]
      %v3532 = vld [vmem:[%s652 + $0xf4] sm:$0xf]
      %v3533 = vld [vmem:[%s652 + $0xf8] sm:$0xf]
      %v3534 = vld [vmem:[%s652 + $0xfc] sm:$0xf]
      %v3535 = vunpack.c.l.bf16 %v3471
      %v3536 = vunpack.c.l.bf16 %v3472
      %v3537 = vunpack.c.l.bf16 %v3473
      %v3538 = vunpack.c.l.bf16 %v3474
      %v3539 = vunpack.c.l.bf16 %v3475
      %v3540 = vunpack.c.l.bf16 %v3476
      %v3541 = vunpack.c.l.bf16 %v3477
      %v3542 = vunpack.c.l.bf16 %v3478
      %v3543 = vunpack.c.l.bf16 %v3479
      %v3544 = vunpack.c.l.bf16 %v3480
      %v3545 = vunpack.c.l.bf16 %v3481
      %v3546 = vunpack.c.l.bf16 %v3482
      %v3547 = vunpack.c.l.bf16 %v3483
      %v3548 = vunpack.c.l.bf16 %v3484
      %v3549 = vunpack.c.l.bf16 %v3485
      %v3550 = vunpack.c.l.bf16 %v3486
      %v3551 = vunpack.c.l.bf16 %v3487
      %v3552 = vunpack.c.l.bf16 %v3488
      %v3553 = vunpack.c.l.bf16 %v3489
      %v3554 = vunpack.c.l.bf16 %v3490
      %v3555 = vunpack.c.l.bf16 %v3491
      %v3556 = vunpack.c.l.bf16 %v3492
      %v3557 = vunpack.c.l.bf16 %v3493
      %v3558 = vunpack.c.l.bf16 %v3494
      %v3559 = vunpack.c.l.bf16 %v3495
      %v3560 = vunpack.c.l.bf16 %v3496
      %v3561 = vunpack.c.l.bf16 %v3497
      %v3562 = vunpack.c.l.bf16 %v3498
      %v3563 = vunpack.c.l.bf16 %v3499
      %v3564 = vunpack.c.l.bf16 %v3500
      %v3565 = vunpack.c.l.bf16 %v3501
      %v3566 = vunpack.c.l.bf16 %v3502
      %v3567 = vunpack.c.l.bf16 %v3503
      %v3568 = vunpack.c.l.bf16 %v3504
      %v3569 = vunpack.c.l.bf16 %v3505
      %v3570 = vunpack.c.l.bf16 %v3506
      %v3571 = vunpack.c.l.bf16 %v3507
      %v3572 = vunpack.c.l.bf16 %v3508
      %v3573 = vunpack.c.l.bf16 %v3509
      %v3574 = vunpack.c.l.bf16 %v3510
      %v3575 = vunpack.c.l.bf16 %v3511
      %v3576 = vunpack.c.l.bf16 %v3512
      %v3577 = vunpack.c.l.bf16 %v3513
      %v3578 = vunpack.c.l.bf16 %v3514
      %v3579 = vunpack.c.l.bf16 %v3515
      %v3580 = vunpack.c.l.bf16 %v3516
      %v3581 = vunpack.c.l.bf16 %v3517
      %v3582 = vunpack.c.l.bf16 %v3518
      %v3583 = vunpack.c.l.bf16 %v3519
      %v3584 = vunpack.c.l.bf16 %v3520
      %v3585 = vunpack.c.l.bf16 %v3521
      %v3586 = vunpack.c.l.bf16 %v3522
      %v3587 = vunpack.c.l.bf16 %v3523
      %v3588 = vunpack.c.l.bf16 %v3524
      %v3589 = vunpack.c.l.bf16 %v3525
      %v3590 = vunpack.c.l.bf16 %v3526
      %v3591 = vunpack.c.l.bf16 %v3527
      %v3592 = vunpack.c.l.bf16 %v3528
      %v3593 = vunpack.c.l.bf16 %v3529
      %v3594 = vunpack.c.l.bf16 %v3530
      %v3595 = vunpack.c.l.bf16 %v3531
      %v3596 = vunpack.c.l.bf16 %v3532
      %v3597 = vunpack.c.l.bf16 %v3533
      %v3598 = vunpack.c.l.bf16 %v3534
      %v3599 = vld [vmem:[%s14] sm:$0x1]
      %v3601 = vperm.slane %v3599, 0
      %v3603 = vmul.f32 %v3535, %v3601
      %v3604 = vmul.f32 %v3536, %v3601
      %v3605 = vmul.f32 %v3537, %v3601
      %v3606 = vmul.f32 %v3538, %v3601
      %v3607 = vmul.f32 %v3539, %v3601
      %v3608 = vmul.f32 %v3540, %v3601
      %v3609 = vmul.f32 %v3541, %v3601
      %v3610 = vmul.f32 %v3542, %v3601
      %v3611 = vmul.f32 %v3543, %v3601
      %v3612 = vmul.f32 %v3544, %v3601
      %v3613 = vmul.f32 %v3545, %v3601
      %v3614 = vmul.f32 %v3546, %v3601
      %v3615 = vmul.f32 %v3547, %v3601
      %v3616 = vmul.f32 %v3548, %v3601
      %v3617 = vmul.f32 %v3549, %v3601
      %v3618 = vmul.f32 %v3550, %v3601
      %v3619 = vmul.f32 %v3551, %v3601
      %v3620 = vmul.f32 %v3552, %v3601
      %v3621 = vmul.f32 %v3553, %v3601
      %v3622 = vmul.f32 %v3554, %v3601
      %v3623 = vmul.f32 %v3555, %v3601
      %v3624 = vmul.f32 %v3556, %v3601
      %v3625 = vmul.f32 %v3557, %v3601
      %v3626 = vmul.f32 %v3558, %v3601
      %v3627 = vmul.f32 %v3559, %v3601
      %v3628 = vmul.f32 %v3560, %v3601
      %v3629 = vmul.f32 %v3561, %v3601
      %v3630 = vmul.f32 %v3562, %v3601
      %v3631 = vmul.f32 %v3563, %v3601
      %v3632 = vmul.f32 %v3564, %v3601
      %v3633 = vmul.f32 %v3565, %v3601
      %v3634 = vmul.f32 %v3566, %v3601
      %v3635 = vmul.f32 %v3567, %v3601
      %v3636 = vmul.f32 %v3568, %v3601
      %v3637 = vmul.f32 %v3569, %v3601
      %v3638 = vmul.f32 %v3570, %v3601
      %v3639 = vmul.f32 %v3571, %v3601
      %v3640 = vmul.f32 %v3572, %v3601
      %v3641 = vmul.f32 %v3573, %v3601
      %v3642 = vmul.f32 %v3574, %v3601
      %v3643 = vmul.f32 %v3575, %v3601
      %v3644 = vmul.f32 %v3576, %v3601
      %v3645 = vmul.f32 %v3577, %v3601
      %v3646 = vmul.f32 %v3578, %v3601
      %v3647 = vmul.f32 %v3579, %v3601
      %v3648 = vmul.f32 %v3580, %v3601
      %v3649 = vmul.f32 %v3581, %v3601
      %v3650 = vmul.f32 %v3582, %v3601
      %v3651 = vmul.f32 %v3583, %v3601
      %v3652 = vmul.f32 %v3584, %v3601
      %v3653 = vmul.f32 %v3585, %v3601
      %v3654 = vmul.f32 %v3586, %v3601
      %v3655 = vmul.f32 %v3587, %v3601
      %v3656 = vmul.f32 %v3588, %v3601
      %v3657 = vmul.f32 %v3589, %v3601
      %v3658 = vmul.f32 %v3590, %v3601
      %v3659 = vmul.f32 %v3591, %v3601
      %v3660 = vmul.f32 %v3592, %v3601
      %v3661 = vmul.f32 %v3593, %v3601
      %v3662 = vmul.f32 %v3594, %v3601
      %v3663 = vmul.f32 %v3595, %v3601
      %v3664 = vmul.f32 %v3596, %v3601
      %v3665 = vmul.f32 %v3597, %v3601
      %v3666 = vmul.f32 %v3598, %v3601
      %v3667 = vsel %vm976, %v3603, 0.0
      %3668 = vadd.xlane.f32.xlu0 %v3667
      %v3669 = vpop.xlane.xlu0 %3668
      %v3670 = vsel %vm976, %v3604, 0.0
      %3671 = vadd.xlane.f32.xlu0 %v3670
      %v3672 = vpop.xlane.xlu0 %3671
      %v3673 = vsel %vm976, %v3605, 0.0
      %3674 = vadd.xlane.f32.xlu0 %v3673
      %v3675 = vpop.xlane.xlu0 %3674
      %v3676 = vsel %vm976, %v3606, 0.0
      %3677 = vadd.xlane.f32.xlu0 %v3676
      %v3678 = vpop.xlane.xlu0 %3677
      %v3679 = vsel %vm976, %v3607, 0.0
      %3680 = vadd.xlane.f32.xlu0 %v3679
      %v3681 = vpop.xlane.xlu0 %3680
      %v3682 = vsel %vm976, %v3608, 0.0
      %3683 = vadd.xlane.f32.xlu0 %v3682
      %v3684 = vpop.xlane.xlu0 %3683
      %v3685 = vsel %vm976, %v3609, 0.0
      %3686 = vadd.xlane.f32.xlu0 %v3685
      %v3687 = vpop.xlane.xlu0 %3686
      %v3688 = vsel %vm976, %v3610, 0.0
      %3689 = vadd.xlane.f32.xlu0 %v3688
      %v3690 = vpop.xlane.xlu0 %3689
      %v3691 = vsel %vm976, %v3611, 0.0
      %3692 = vadd.xlane.f32.xlu0 %v3691
      %v3693 = vpop.xlane.xlu0 %3692
      %v3694 = vsel %vm976, %v3612, 0.0
      %3695 = vadd.xlane.f32.xlu0 %v3694
      %v3696 = vpop.xlane.xlu0 %3695
      %v3697 = vsel %vm976, %v3613, 0.0
      %3698 = vadd.xlane.f32.xlu0 %v3697
      %v3699 = vpop.xlane.xlu0 %3698
      %v3700 = vsel %vm976, %v3614, 0.0
      %3701 = vadd.xlane.f32.xlu0 %v3700
      %v3702 = vpop.xlane.xlu0 %3701
      %v3703 = vsel %vm976, %v3615, 0.0
      %3704 = vadd.xlane.f32.xlu0 %v3703
      %v3705 = vpop.xlane.xlu0 %3704
      %v3706 = vsel %vm976, %v3616, 0.0
      %3707 = vadd.xlane.f32.xlu0 %v3706
      %v3708 = vpop.xlane.xlu0 %3707
      %v3709 = vsel %vm976, %v3617, 0.0
      %3710 = vadd.xlane.f32.xlu0 %v3709
      %v3711 = vpop.xlane.xlu0 %3710
      %v3712 = vsel %vm976, %v3618, 0.0
      %3713 = vadd.xlane.f32.xlu0 %v3712
      %v3714 = vpop.xlane.xlu0 %3713
      %v3715 = vsel %vm976, %v3619, 0.0
      %3716 = vadd.xlane.f32.xlu0 %v3715
      %v3717 = vpop.xlane.xlu0 %3716
      %v3718 = vsel %vm976, %v3620, 0.0
      %3719 = vadd.xlane.f32.xlu0 %v3718
      %v3720 = vpop.xlane.xlu0 %3719
      %v3721 = vsel %vm976, %v3621, 0.0
      %3722 = vadd.xlane.f32.xlu0 %v3721
      %v3723 = vpop.xlane.xlu0 %3722
      %v3724 = vsel %vm976, %v3622, 0.0
      %3725 = vadd.xlane.f32.xlu0 %v3724
      %v3726 = vpop.xlane.xlu0 %3725
      %v3727 = vsel %vm976, %v3623, 0.0
      %3728 = vadd.xlane.f32.xlu0 %v3727
      %v3729 = vpop.xlane.xlu0 %3728
      %v3730 = vsel %vm976, %v3624, 0.0
      %3731 = vadd.xlane.f32.xlu0 %v3730
      %v3732 = vpop.xlane.xlu0 %3731
      %v3733 = vsel %vm976, %v3625, 0.0
      %3734 = vadd.xlane.f32.xlu0 %v3733
      %v3735 = vpop.xlane.xlu0 %3734
      %v3736 = vsel %vm976, %v3626, 0.0
      %3737 = vadd.xlane.f32.xlu0 %v3736
      %v3738 = vpop.xlane.xlu0 %3737
      %v3739 = vsel %vm976, %v3627, 0.0
      %3740 = vadd.xlane.f32.xlu0 %v3739
      %v3741 = vpop.xlane.xlu0 %3740
      %v3742 = vsel %vm976, %v3628, 0.0
      %3743 = vadd.xlane.f32.xlu0 %v3742
      %v3744 = vpop.xlane.xlu0 %3743
      %v3745 = vsel %vm976, %v3629, 0.0
      %3746 = vadd.xlane.f32.xlu0 %v3745
      %v3747 = vpop.xlane.xlu0 %3746
      %v3748 = vsel %vm976, %v3630, 0.0
      %3749 = vadd.xlane.f32.xlu0 %v3748
      %v3750 = vpop.xlane.xlu0 %3749
      %v3751 = vsel %vm976, %v3631, 0.0
      %3752 = vadd.xlane.f32.xlu0 %v3751
      %v3753 = vpop.xlane.xlu0 %3752
      %v3754 = vsel %vm976, %v3632, 0.0
      %3755 = vadd.xlane.f32.xlu0 %v3754
      %v3756 = vpop.xlane.xlu0 %3755
      %v3757 = vsel %vm976, %v3633, 0.0
      %3758 = vadd.xlane.f32.xlu0 %v3757
      %v3759 = vpop.xlane.xlu0 %3758
      %v3760 = vsel %vm976, %v3634, 0.0
      %3761 = vadd.xlane.f32.xlu0 %v3760
      %v3762 = vpop.xlane.xlu0 %3761
      %v3763 = vsel %vm976, %v3635, 0.0
      %3764 = vadd.xlane.f32.xlu0 %v3763
      %v3765 = vpop.xlane.xlu0 %3764
      %v3766 = vsel %vm976, %v3636, 0.0
      %3767 = vadd.xlane.f32.xlu0 %v3766
      %v3768 = vpop.xlane.xlu0 %3767
      %v3769 = vsel %vm976, %v3637, 0.0
      %3770 = vadd.xlane.f32.xlu0 %v3769
      %v3771 = vpop.xlane.xlu0 %3770
      %v3772 = vsel %vm976, %v3638, 0.0
      %3773 = vadd.xlane.f32.xlu0 %v3772
      %v3774 = vpop.xlane.xlu0 %3773
      %v3775 = vsel %vm976, %v3639, 0.0
      %3776 = vadd.xlane.f32.xlu0 %v3775
      %v3777 = vpop.xlane.xlu0 %3776
      %v3778 = vsel %vm976, %v3640, 0.0
      %3779 = vadd.xlane.f32.xlu0 %v3778
      %v3780 = vpop.xlane.xlu0 %3779
      %v3781 = vsel %vm976, %v3641, 0.0
      %3782 = vadd.xlane.f32.xlu0 %v3781
      %v3783 = vpop.xlane.xlu0 %3782
      %v3784 = vsel %vm976, %v3642, 0.0
      %3785 = vadd.xlane.f32.xlu0 %v3784
      %v3786 = vpop.xlane.xlu0 %3785
      %v3787 = vsel %vm976, %v3643, 0.0
      %3788 = vadd.xlane.f32.xlu0 %v3787
      %v3789 = vpop.xlane.xlu0 %3788
      %v3790 = vsel %vm976, %v3644, 0.0
      %3791 = vadd.xlane.f32.xlu0 %v3790
      %v3792 = vpop.xlane.xlu0 %3791
      %v3793 = vsel %vm976, %v3645, 0.0
      %3794 = vadd.xlane.f32.xlu0 %v3793
      %v3795 = vpop.xlane.xlu0 %3794
      %v3796 = vsel %vm976, %v3646, 0.0
      %3797 = vadd.xlane.f32.xlu0 %v3796
      %v3798 = vpop.xlane.xlu0 %3797
      %v3799 = vsel %vm976, %v3647, 0.0
      %3800 = vadd.xlane.f32.xlu0 %v3799
      %v3801 = vpop.xlane.xlu0 %3800
      %v3802 = vsel %vm976, %v3648, 0.0
      %3803 = vadd.xlane.f32.xlu0 %v3802
      %v3804 = vpop.xlane.xlu0 %3803
      %v3805 = vsel %vm976, %v3649, 0.0
      %3806 = vadd.xlane.f32.xlu0 %v3805
      %v3807 = vpop.xlane.xlu0 %3806
      %v3808 = vsel %vm976, %v3650, 0.0
      %3809 = vadd.xlane.f32.xlu0 %v3808
      %v3810 = vpop.xlane.xlu0 %3809
      %v3811 = vsel %vm976, %v3651, 0.0
      %3812 = vadd.xlane.f32.xlu0 %v3811
      %v3813 = vpop.xlane.xlu0 %3812
      %v3814 = vsel %vm976, %v3652, 0.0
      %3815 = vadd.xlane.f32.xlu0 %v3814
      %v3816 = vpop.xlane.xlu0 %3815
      %v3817 = vsel %vm976, %v3653, 0.0
      %3818 = vadd.xlane.f32.xlu0 %v3817
      %v3819 = vpop.xlane.xlu0 %3818
      %v3820 = vsel %vm976, %v3654, 0.0
      %3821 = vadd.xlane.f32.xlu0 %v3820
      %v3822 = vpop.xlane.xlu0 %3821
      %v3823 = vsel %vm976, %v3655, 0.0
      %3824 = vadd.xlane.f32.xlu0 %v3823
      %v3825 = vpop.xlane.xlu0 %3824
      %v3826 = vsel %vm976, %v3656, 0.0
      %3827 = vadd.xlane.f32.xlu0 %v3826
      %v3828 = vpop.xlane.xlu0 %3827
      %v3829 = vsel %vm976, %v3657, 0.0
      %3830 = vadd.xlane.f32.xlu0 %v3829
      %v3831 = vpop.xlane.xlu0 %3830
      %v3832 = vsel %vm976, %v3658, 0.0
      %3833 = vadd.xlane.f32.xlu0 %v3832
      %v3834 = vpop.xlane.xlu0 %3833
      %v3835 = vsel %vm976, %v3659, 0.0
      %3836 = vadd.xlane.f32.xlu0 %v3835
      %v3837 = vpop.xlane.xlu0 %3836
      %v3838 = vsel %vm976, %v3660, 0.0
      %3839 = vadd.xlane.f32.xlu0 %v3838
      %v3840 = vpop.xlane.xlu0 %3839
      %v3841 = vsel %vm976, %v3661, 0.0
      %3842 = vadd.xlane.f32.xlu0 %v3841
      %v3843 = vpop.xlane.xlu0 %3842
      %v3844 = vsel %vm976, %v3662, 0.0
      %3845 = vadd.xlane.f32.xlu0 %v3844
      %v3846 = vpop.xlane.xlu0 %3845
      %v3847 = vsel %vm976, %v3663, 0.0
      %3848 = vadd.xlane.f32.xlu0 %v3847
      %v3849 = vpop.xlane.xlu0 %3848
      %v3850 = vsel %vm976, %v3664, 0.0
      %3851 = vadd.xlane.f32.xlu0 %v3850
      %v3852 = vpop.xlane.xlu0 %3851
      %v3853 = vsel %vm976, %v3665, 0.0
      %3854 = vadd.xlane.f32.xlu0 %v3853
      %v3855 = vpop.xlane.xlu0 %3854
      %v3856 = vsel %vm976, %v3666, 0.0
      %3857 = vadd.xlane.f32.xlu0 %v3856
      %v3858 = vpop.xlane.xlu0 %3857
      %v3859 = vadd.f32 %v3407, %v3669
      %v3860 = vadd.f32 %v3408, %v3672
      %v3861 = vadd.f32 %v3409, %v3675
      %v3862 = vadd.f32 %v3410, %v3678
      %v3863 = vadd.f32 %v3411, %v3681
      %v3864 = vadd.f32 %v3412, %v3684
      %v3865 = vadd.f32 %v3413, %v3687
      %v3866 = vadd.f32 %v3414, %v3690
      %v3867 = vadd.f32 %v3415, %v3693
      %v3868 = vadd.f32 %v3416, %v3696
      %v3869 = vadd.f32 %v3417, %v3699
      %v3870 = vadd.f32 %v3418, %v3702
      %v3871 = vadd.f32 %v3419, %v3705
      %v3872 = vadd.f32 %v3420, %v3708
      %v3873 = vadd.f32 %v3421, %v3711
      %v3874 = vadd.f32 %v3422, %v3714
      %v3875 = vadd.f32 %v3423, %v3717
      %v3876 = vadd.f32 %v3424, %v3720
      %v3877 = vadd.f32 %v3425, %v3723
      %v3878 = vadd.f32 %v3426, %v3726
      %v3879 = vadd.f32 %v3427, %v3729
      %v3880 = vadd.f32 %v3428, %v3732
      %v3881 = vadd.f32 %v3429, %v3735
      %v3882 = vadd.f32 %v3430, %v3738
      %v3883 = vadd.f32 %v3431, %v3741
      %v3884 = vadd.f32 %v3432, %v3744
      %v3885 = vadd.f32 %v3433, %v3747
      %v3886 = vadd.f32 %v3434, %v3750
      %v3887 = vadd.f32 %v3435, %v3753
      %v3888 = vadd.f32 %v3436, %v3756
      %v3889 = vadd.f32 %v3437, %v3759
      %v3890 = vadd.f32 %v3438, %v3762
      %v3891 = vadd.f32 %v3439, %v3765
      %v3892 = vadd.f32 %v3440, %v3768
      %v3893 = vadd.f32 %v3441, %v3771
      %v3894 = vadd.f32 %v3442, %v3774
      %v3895 = vadd.f32 %v3443, %v3777
      %v3896 = vadd.f32 %v3444, %v3780
      %v3897 = vadd.f32 %v3445, %v3783
      %v3898 = vadd.f32 %v3446, %v3786
      %v3899 = vadd.f32 %v3447, %v3789
      %v3900 = vadd.f32 %v3448, %v3792
      %v3901 = vadd.f32 %v3449, %v3795
      %v3902 = vadd.f32 %v3450, %v3798
      %v3903 = vadd.f32 %v3451, %v3801
      %v3904 = vadd.f32 %v3452, %v3804
      %v3905 = vadd.f32 %v3453, %v3807
      %v3906 = vadd.f32 %v3454, %v3810
      %v3907 = vadd.f32 %v3455, %v3813
      %v3908 = vadd.f32 %v3456, %v3816
      %v3909 = vadd.f32 %v3457, %v3819
      %v3910 = vadd.f32 %v3458, %v3822
      %v3911 = vadd.f32 %v3459, %v3825
      %v3912 = vadd.f32 %v3460, %v3828
      %v3913 = vadd.f32 %v3461, %v3831
      %v3914 = vadd.f32 %v3462, %v3834
      %v3915 = vadd.f32 %v3463, %v3837
      %v3916 = vadd.f32 %v3464, %v3840
      %v3917 = vadd.f32 %v3465, %v3843
      %v3918 = vadd.f32 %v3466, %v3846
      %v3919 = vadd.f32 %v3467, %v3849
      %v3920 = vadd.f32 %v3468, %v3852
      %v3921 = vadd.f32 %v3469, %v3855
      %v3922 = vadd.f32 %v3470, %v3858
      %v3923 = vld [vmem:[%s659] sm:$0xff]
      %v3924 = vld [vmem:[%s659 + $0x8] sm:$0xf]
      %v3925 = vld [vmem:[%s659 + $0xc] sm:$0xff]
      %v3926 = vld [vmem:[%s659 + $0x14] sm:$0xf]
      %v3927 = vld [vmem:[%s659 + $0x18] sm:$0xff]
      %v3928 = vld [vmem:[%s659 + $0x20] sm:$0xf]
      %v3929 = vld [vmem:[%s659 + $0x24] sm:$0xff]
      %v3930 = vld [vmem:[%s659 + $0x2c] sm:$0xf]
      %v3931 = vld [vmem:[%s659 + $0x30] sm:$0xff]
      %v3932 = vld [vmem:[%s659 + $0x38] sm:$0xf]
      %v3933 = vld [vmem:[%s659 + $0x3c] sm:$0xff]
      %v3934 = vld [vmem:[%s659 + $0x44] sm:$0xf]
      %v3935 = vld [vmem:[%s659 + $0x48] sm:$0xff]
      %v3936 = vld [vmem:[%s659 + $0x50] sm:$0xf]
      %v3937 = vld [vmem:[%s659 + $0x54] sm:$0xff]
      %v3938 = vld [vmem:[%s659 + $0x5c] sm:$0xf]
      %v3939 = vld [vmem:[%s659 + $0x60] sm:$0xff]
      %v3940 = vld [vmem:[%s659 + $0x68] sm:$0xf]
      %v3941 = vld [vmem:[%s659 + $0x6c] sm:$0xff]
      %v3942 = vld [vmem:[%s659 + $0x74] sm:$0xf]
      %v3943 = vld [vmem:[%s659 + $0x78] sm:$0xff]
      %v3944 = vld [vmem:[%s659 + $0x80] sm:$0xf]
      %v3945 = vld [vmem:[%s659 + $0x84] sm:$0xff]
      %v3946 = vld [vmem:[%s659 + $0x8c] sm:$0xf]
      %v3947 = vld [vmem:[%s659 + $0x90] sm:$0xff]
      %v3948 = vld [vmem:[%s659 + $0x98] sm:$0xf]
      %v3949 = vld [vmem:[%s659 + $0x9c] sm:$0xff]
      %v3950 = vld [vmem:[%s659 + $0xa4] sm:$0xf]
      %v3951 = vld [vmem:[%s659 + $0xa8] sm:$0xff]
      %v3952 = vld [vmem:[%s659 + $0xb0] sm:$0xf]
      %v3953 = vld [vmem:[%s659 + $0xb4] sm:$0xff]
      %v3954 = vld [vmem:[%s659 + $0xbc] sm:$0xf]
      %v3955 = vld [vmem:[%s659 + $0xc0] sm:$0xff]
      %v3956 = vld [vmem:[%s659 + $0xc8] sm:$0xf]
      %v3957 = vld [vmem:[%s659 + $0xcc] sm:$0xff]
      %v3958 = vld [vmem:[%s659 + $0xd4] sm:$0xf]
      %v3959 = vld [vmem:[%s659 + $0xd8] sm:$0xff]
      %v3960 = vld [vmem:[%s659 + $0xe0] sm:$0xf]
      %v3961 = vld [vmem:[%s659 + $0xe4] sm:$0xff]
      %v3962 = vld [vmem:[%s659 + $0xec] sm:$0xf]
      %v3963 = vld [vmem:[%s659 + $0xf0] sm:$0xff]
      %v3964 = vld [vmem:[%s659 + $0xf8] sm:$0xf]
      %v3965 = vld [vmem:[%s659 + $0xfc] sm:$0xff]
      %v3966 = vld [vmem:[%s659 + $0x104] sm:$0xf]
      %v3967 = vld [vmem:[%s659 + $0x108] sm:$0xff]
      %v3968 = vld [vmem:[%s659 + $0x110] sm:$0xf]
      %v3969 = vld [vmem:[%s659 + $0x114] sm:$0xff]
      %v3970 = vld [vmem:[%s659 + $0x11c] sm:$0xf]
      %v3971 = vld [vmem:[%s659 + $0x120] sm:$0xff]
      %v3972 = vld [vmem:[%s659 + $0x128] sm:$0xf]
      %v3973 = vld [vmem:[%s659 + $0x12c] sm:$0xff]
      %v3974 = vld [vmem:[%s659 + $0x134] sm:$0xf]
      %v3975 = vld [vmem:[%s659 + $0x138] sm:$0xff]
      %v3976 = vld [vmem:[%s659 + $0x140] sm:$0xf]
      %v3977 = vld [vmem:[%s659 + $0x144] sm:$0xff]
      %v3978 = vld [vmem:[%s659 + $0x14c] sm:$0xf]
      %v3979 = vld [vmem:[%s659 + $0x150] sm:$0xff]
      %v3980 = vld [vmem:[%s659 + $0x158] sm:$0xf]
      %v3981 = vld [vmem:[%s659 + $0x15c] sm:$0xff]
      %v3982 = vld [vmem:[%s659 + $0x164] sm:$0xf]
      %v3983 = vld [vmem:[%s659 + $0x168] sm:$0xff]
      %v3984 = vld [vmem:[%s659 + $0x170] sm:$0xf]
      %v3985 = vld [vmem:[%s659 + $0x174] sm:$0xff]
      %v3986 = vld [vmem:[%s659 + $0x17c] sm:$0xf]
      %v3987 = vld [vmem:[%s659 + $0x180] sm:$0xff]
      %v3988 = vld [vmem:[%s659 + $0x188] sm:$0xf]
      %v3989 = vld [vmem:[%s659 + $0x18c] sm:$0xff]
      %v3990 = vld [vmem:[%s659 + $0x194] sm:$0xf]
      %v3991 = vld [vmem:[%s659 + $0x198] sm:$0xff]
      %v3992 = vld [vmem:[%s659 + $0x1a0] sm:$0xf]
      %v3993 = vld [vmem:[%s659 + $0x1a4] sm:$0xff]
      %v3994 = vld [vmem:[%s659 + $0x1ac] sm:$0xf]
      %v3995 = vld [vmem:[%s659 + $0x1b0] sm:$0xff]
      %v3996 = vld [vmem:[%s659 + $0x1b8] sm:$0xf]
      %v3997 = vld [vmem:[%s659 + $0x1bc] sm:$0xff]
      %v3998 = vld [vmem:[%s659 + $0x1c4] sm:$0xf]
      %v3999 = vld [vmem:[%s659 + $0x1c8] sm:$0xff]
      %v4000 = vld [vmem:[%s659 + $0x1d0] sm:$0xf]
      %v4001 = vld [vmem:[%s659 + $0x1d4] sm:$0xff]
      %v4002 = vld [vmem:[%s659 + $0x1dc] sm:$0xf]
      %v4003 = vld [vmem:[%s659 + $0x1e0] sm:$0xff]
      %v4004 = vld [vmem:[%s659 + $0x1e8] sm:$0xf]
      %v4005 = vld [vmem:[%s659 + $0x1ec] sm:$0xff]
      %v4006 = vld [vmem:[%s659 + $0x1f4] sm:$0xf]
      %v4007 = vld [vmem:[%s659 + $0x1f8] sm:$0xff]
      %v4008 = vld [vmem:[%s659 + $0x200] sm:$0xf]
      %v4009 = vld [vmem:[%s659 + $0x204] sm:$0xff]
      %v4010 = vld [vmem:[%s659 + $0x20c] sm:$0xf]
      %v4011 = vld [vmem:[%s659 + $0x210] sm:$0xff]
      %v4012 = vld [vmem:[%s659 + $0x218] sm:$0xf]
      %v4013 = vld [vmem:[%s659 + $0x21c] sm:$0xff]
      %v4014 = vld [vmem:[%s659 + $0x224] sm:$0xf]
      %v4015 = vld [vmem:[%s659 + $0x228] sm:$0xff]
      %v4016 = vld [vmem:[%s659 + $0x230] sm:$0xf]
      %v4017 = vld [vmem:[%s659 + $0x234] sm:$0xff]
      %v4018 = vld [vmem:[%s659 + $0x23c] sm:$0xf]
      %v4019 = vld [vmem:[%s659 + $0x240] sm:$0xff]
      %v4020 = vld [vmem:[%s659 + $0x248] sm:$0xf]
      %v4021 = vld [vmem:[%s659 + $0x24c] sm:$0xff]
      %v4022 = vld [vmem:[%s659 + $0x254] sm:$0xf]
      %v4023 = vld [vmem:[%s659 + $0x258] sm:$0xff]
      %v4024 = vld [vmem:[%s659 + $0x260] sm:$0xf]
      %v4025 = vld [vmem:[%s659 + $0x264] sm:$0xff]
      %v4026 = vld [vmem:[%s659 + $0x26c] sm:$0xf]
      %v4027 = vld [vmem:[%s659 + $0x270] sm:$0xff]
      %v4028 = vld [vmem:[%s659 + $0x278] sm:$0xf]
      %v4029 = vld [vmem:[%s659 + $0x27c] sm:$0xff]
      %v4030 = vld [vmem:[%s659 + $0x284] sm:$0xf]
      %v4031 = vld [vmem:[%s659 + $0x288] sm:$0xff]
      %v4032 = vld [vmem:[%s659 + $0x290] sm:$0xf]
      %v4033 = vld [vmem:[%s659 + $0x294] sm:$0xff]
      %v4034 = vld [vmem:[%s659 + $0x29c] sm:$0xf]
      %v4035 = vld [vmem:[%s659 + $0x2a0] sm:$0xff]
      %v4036 = vld [vmem:[%s659 + $0x2a8] sm:$0xf]
      %v4037 = vld [vmem:[%s659 + $0x2ac] sm:$0xff]
      %v4038 = vld [vmem:[%s659 + $0x2b4] sm:$0xf]
      %v4039 = vld [vmem:[%s659 + $0x2b8] sm:$0xff]
      %v4040 = vld [vmem:[%s659 + $0x2c0] sm:$0xf]
      %v4041 = vld [vmem:[%s659 + $0x2c4] sm:$0xff]
      %v4042 = vld [vmem:[%s659 + $0x2cc] sm:$0xf]
      %v4043 = vld [vmem:[%s659 + $0x2d0] sm:$0xff]
      %v4044 = vld [vmem:[%s659 + $0x2d8] sm:$0xf]
      %v4045 = vld [vmem:[%s659 + $0x2dc] sm:$0xff]
      %v4046 = vld [vmem:[%s659 + $0x2e4] sm:$0xf]
      %v4047 = vld [vmem:[%s659 + $0x2e8] sm:$0xff]
      %v4048 = vld [vmem:[%s659 + $0x2f0] sm:$0xf]
      %v4049 = vld [vmem:[%s659 + $0x2f4] sm:$0xff]
      %v4050 = vld [vmem:[%s659 + $0x2fc] sm:$0xf]
      %v4051 = vunpack.c.l.bf16 %v3923
      %v4052 = vunpack.c.h.bf16 %v3923
      %v4053 = vunpack.c.l.bf16 %v3924
      %v4054 = vunpack.c.l.bf16 %v3925
      %v4055 = vunpack.c.h.bf16 %v3925
      %v4056 = vunpack.c.l.bf16 %v3926
      %v4057 = vunpack.c.l.bf16 %v3927
      %v4058 = vunpack.c.h.bf16 %v3927
      %v4059 = vunpack.c.l.bf16 %v3928
      %v4060 = vunpack.c.l.bf16 %v3929
      %v4061 = vunpack.c.h.bf16 %v3929
      %v4062 = vunpack.c.l.bf16 %v3930
      %v4063 = vunpack.c.l.bf16 %v3931
      %v4064 = vunpack.c.h.bf16 %v3931
      %v4065 = vunpack.c.l.bf16 %v3932
      %v4066 = vunpack.c.l.bf16 %v3933
      %v4067 = vunpack.c.h.bf16 %v3933
      %v4068 = vunpack.c.l.bf16 %v3934
      %v4069 = vunpack.c.l.bf16 %v3935
      %v4070 = vunpack.c.h.bf16 %v3935
      %v4071 = vunpack.c.l.bf16 %v3936
      %v4072 = vunpack.c.l.bf16 %v3937
      %v4073 = vunpack.c.h.bf16 %v3937
      %v4074 = vunpack.c.l.bf16 %v3938
      %v4075 = vunpack.c.l.bf16 %v3939
      %v4076 = vunpack.c.h.bf16 %v3939
      %v4077 = vunpack.c.l.bf16 %v3940
      %v4078 = vunpack.c.l.bf16 %v3941
      %v4079 = vunpack.c.h.bf16 %v3941
      %v4080 = vunpack.c.l.bf16 %v3942
      %v4081 = vunpack.c.l.bf16 %v3943
      %v4082 = vunpack.c.h.bf16 %v3943
      %v4083 = vunpack.c.l.bf16 %v3944
      %v4084 = vunpack.c.l.bf16 %v3945
      %v4085 = vunpack.c.h.bf16 %v3945
      %v4086 = vunpack.c.l.bf16 %v3946
      %v4087 = vunpack.c.l.bf16 %v3947
      %v4088 = vunpack.c.h.bf16 %v3947
      %v4089 = vunpack.c.l.bf16 %v3948
      %v4090 = vunpack.c.l.bf16 %v3949
      %v4091 = vunpack.c.h.bf16 %v3949
      %v4092 = vunpack.c.l.bf16 %v3950
      %v4093 = vunpack.c.l.bf16 %v3951
      %v4094 = vunpack.c.h.bf16 %v3951
      %v4095 = vunpack.c.l.bf16 %v3952
      %v4096 = vunpack.c.l.bf16 %v3953
      %v4097 = vunpack.c.h.bf16 %v3953
      %v4098 = vunpack.c.l.bf16 %v3954
      %v4099 = vunpack.c.l.bf16 %v3955
      %v4100 = vunpack.c.h.bf16 %v3955
      %v4101 = vunpack.c.l.bf16 %v3956
      %v4102 = vunpack.c.l.bf16 %v3957
      %v4103 = vunpack.c.h.bf16 %v3957
      %v4104 = vunpack.c.l.bf16 %v3958
      %v4105 = vunpack.c.l.bf16 %v3959
      %v4106 = vunpack.c.h.bf16 %v3959
      %v4107 = vunpack.c.l.bf16 %v3960
      %v4108 = vunpack.c.l.bf16 %v3961
      %v4109 = vunpack.c.h.bf16 %v3961
      %v4110 = vunpack.c.l.bf16 %v3962
      %v4111 = vunpack.c.l.bf16 %v3963
      %v4112 = vunpack.c.h.bf16 %v3963
      %v4113 = vunpack.c.l.bf16 %v3964
      %v4114 = vunpack.c.l.bf16 %v3965
      %v4115 = vunpack.c.h.bf16 %v3965
      %v4116 = vunpack.c.l.bf16 %v3966
      %v4117 = vunpack.c.l.bf16 %v3967
      %v4118 = vunpack.c.h.bf16 %v3967
      %v4119 = vunpack.c.l.bf16 %v3968
      %v4120 = vunpack.c.l.bf16 %v3969
      %v4121 = vunpack.c.h.bf16 %v3969
      %v4122 = vunpack.c.l.bf16 %v3970
      %v4123 = vunpack.c.l.bf16 %v3971
      %v4124 = vunpack.c.h.bf16 %v3971
      %v4125 = vunpack.c.l.bf16 %v3972
      %v4126 = vunpack.c.l.bf16 %v3973
      %v4127 = vunpack.c.h.bf16 %v3973
      %v4128 = vunpack.c.l.bf16 %v3974
      %v4129 = vunpack.c.l.bf16 %v3975
      %v4130 = vunpack.c.h.bf16 %v3975
      %v4131 = vunpack.c.l.bf16 %v3976
      %v4132 = vunpack.c.l.bf16 %v3977
      %v4133 = vunpack.c.h.bf16 %v3977
      %v4134 = vunpack.c.l.bf16 %v3978
      %v4135 = vunpack.c.l.bf16 %v3979
      %v4136 = vunpack.c.h.bf16 %v3979
      %v4137 = vunpack.c.l.bf16 %v3980
      %v4138 = vunpack.c.l.bf16 %v3981
      %v4139 = vunpack.c.h.bf16 %v3981
      %v4140 = vunpack.c.l.bf16 %v3982
      %v4141 = vunpack.c.l.bf16 %v3983
      %v4142 = vunpack.c.h.bf16 %v3983
      %v4143 = vunpack.c.l.bf16 %v3984
      %v4144 = vunpack.c.l.bf16 %v3985
      %v4145 = vunpack.c.h.bf16 %v3985
      %v4146 = vunpack.c.l.bf16 %v3986
      %v4147 = vunpack.c.l.bf16 %v3987
      %v4148 = vunpack.c.h.bf16 %v3987
      %v4149 = vunpack.c.l.bf16 %v3988
      %v4150 = vunpack.c.l.bf16 %v3989
      %v4151 = vunpack.c.h.bf16 %v3989
      %v4152 = vunpack.c.l.bf16 %v3990
      %v4153 = vunpack.c.l.bf16 %v3991
      %v4154 = vunpack.c.h.bf16 %v3991
      %v4155 = vunpack.c.l.bf16 %v3992
      %v4156 = vunpack.c.l.bf16 %v3993
      %v4157 = vunpack.c.h.bf16 %v3993
      %v4158 = vunpack.c.l.bf16 %v3994
      %v4159 = vunpack.c.l.bf16 %v3995
      %v4160 = vunpack.c.h.bf16 %v3995
      %v4161 = vunpack.c.l.bf16 %v3996
      %v4162 = vunpack.c.l.bf16 %v3997
      %v4163 = vunpack.c.h.bf16 %v3997
      %v4164 = vunpack.c.l.bf16 %v3998
      %v4165 = vunpack.c.l.bf16 %v3999
      %v4166 = vunpack.c.h.bf16 %v3999
      %v4167 = vunpack.c.l.bf16 %v4000
      %v4168 = vunpack.c.l.bf16 %v4001
      %v4169 = vunpack.c.h.bf16 %v4001
      %v4170 = vunpack.c.l.bf16 %v4002
      %v4171 = vunpack.c.l.bf16 %v4003
      %v4172 = vunpack.c.h.bf16 %v4003
      %v4173 = vunpack.c.l.bf16 %v4004
      %v4174 = vunpack.c.l.bf16 %v4005
      %v4175 = vunpack.c.h.bf16 %v4005
      %v4176 = vunpack.c.l.bf16 %v4006
      %v4177 = vunpack.c.l.bf16 %v4007
      %v4178 = vunpack.c.h.bf16 %v4007
      %v4179 = vunpack.c.l.bf16 %v4008
      %v4180 = vunpack.c.l.bf16 %v4009
      %v4181 = vunpack.c.h.bf16 %v4009
      %v4182 = vunpack.c.l.bf16 %v4010
      %v4183 = vunpack.c.l.bf16 %v4011
      %v4184 = vunpack.c.h.bf16 %v4011
      %v4185 = vunpack.c.l.bf16 %v4012
      %v4186 = vunpack.c.l.bf16 %v4013
      %v4187 = vunpack.c.h.bf16 %v4013
      %v4188 = vunpack.c.l.bf16 %v4014
      %v4189 = vunpack.c.l.bf16 %v4015
      %v4190 = vunpack.c.h.bf16 %v4015
      %v4191 = vunpack.c.l.bf16 %v4016
      %v4192 = vunpack.c.l.bf16 %v4017
      %v4193 = vunpack.c.h.bf16 %v4017
      %v4194 = vunpack.c.l.bf16 %v4018
      %v4195 = vunpack.c.l.bf16 %v4019
      %v4196 = vunpack.c.h.bf16 %v4019
      %v4197 = vunpack.c.l.bf16 %v4020
      %v4198 = vunpack.c.l.bf16 %v4021
      %v4199 = vunpack.c.h.bf16 %v4021
      %v4200 = vunpack.c.l.bf16 %v4022
      %v4201 = vunpack.c.l.bf16 %v4023
      %v4202 = vunpack.c.h.bf16 %v4023
      %v4203 = vunpack.c.l.bf16 %v4024
      %v4204 = vunpack.c.l.bf16 %v4025
      %v4205 = vunpack.c.h.bf16 %v4025
      %v4206 = vunpack.c.l.bf16 %v4026
      %v4207 = vunpack.c.l.bf16 %v4027
      %v4208 = vunpack.c.h.bf16 %v4027
      %v4209 = vunpack.c.l.bf16 %v4028
      %v4210 = vunpack.c.l.bf16 %v4029
      %v4211 = vunpack.c.h.bf16 %v4029
      %v4212 = vunpack.c.l.bf16 %v4030
      %v4213 = vunpack.c.l.bf16 %v4031
      %v4214 = vunpack.c.h.bf16 %v4031
      %v4215 = vunpack.c.l.bf16 %v4032
      %v4216 = vunpack.c.l.bf16 %v4033
      %v4217 = vunpack.c.h.bf16 %v4033
      %v4218 = vunpack.c.l.bf16 %v4034
      %v4219 = vunpack.c.l.bf16 %v4035
      %v4220 = vunpack.c.h.bf16 %v4035
      %v4221 = vunpack.c.l.bf16 %v4036
      %v4222 = vunpack.c.l.bf16 %v4037
      %v4223 = vunpack.c.h.bf16 %v4037
      %v4224 = vunpack.c.l.bf16 %v4038
      %v4225 = vunpack.c.l.bf16 %v4039
      %v4226 = vunpack.c.h.bf16 %v4039
      %v4227 = vunpack.c.l.bf16 %v4040
      %v4228 = vunpack.c.l.bf16 %v4041
      %v4229 = vunpack.c.h.bf16 %v4041
      %v4230 = vunpack.c.l.bf16 %v4042
      %v4231 = vunpack.c.l.bf16 %v4043
      %v4232 = vunpack.c.h.bf16 %v4043
      %v4233 = vunpack.c.l.bf16 %v4044
      %v4234 = vunpack.c.l.bf16 %v4045
      %v4235 = vunpack.c.h.bf16 %v4045
      %v4236 = vunpack.c.l.bf16 %v4046
      %v4237 = vunpack.c.l.bf16 %v4047
      %v4238 = vunpack.c.h.bf16 %v4047
      %v4239 = vunpack.c.l.bf16 %v4048
      %v4240 = vunpack.c.l.bf16 %v4049
      %v4241 = vunpack.c.h.bf16 %v4049
      %v4242 = vunpack.c.l.bf16 %v4050
      %v4243 = vld [vmem:[%s15] sm:$0x7]
      %v4245 = vperm.slane %v4243, 0
      %v4246 = vperm.slane %v4243, 1
      %v4247 = vperm.slane %v4243, 2
      %v4251 = vmul.f32 %v4051, %v4245
      %v4252 = vmul.f32 %v4052, %v4246
      %v4253 = vmul.f32 %v4053, %v4247
      %v4254 = vmul.f32 %v4054, %v4245
      %v4255 = vmul.f32 %v4055, %v4246
      %v4256 = vmul.f32 %v4056, %v4247
      %v4257 = vmul.f32 %v4057, %v4245
      %v4258 = vmul.f32 %v4058, %v4246
      %v4259 = vmul.f32 %v4059, %v4247
      %v4260 = vmul.f32 %v4060, %v4245
      %v4261 = vmul.f32 %v4061, %v4246
      %v4262 = vmul.f32 %v4062, %v4247
      %v4263 = vmul.f32 %v4063, %v4245
      %v4264 = vmul.f32 %v4064, %v4246
      %v4265 = vmul.f32 %v4065, %v4247
      %v4266 = vmul.f32 %v4066, %v4245
      %v4267 = vmul.f32 %v4067, %v4246
      %v4268 = vmul.f32 %v4068, %v4247
      %v4269 = vmul.f32 %v4069, %v4245
      %v4270 = vmul.f32 %v4070, %v4246
      %v4271 = vmul.f32 %v4071, %v4247
      %v4272 = vmul.f32 %v4072, %v4245
      %v4273 = vmul.f32 %v4073, %v4246
      %v4274 = vmul.f32 %v4074, %v4247
      %v4275 = vmul.f32 %v4075, %v4245
      %v4276 = vmul.f32 %v4076, %v4246
      %v4277 = vmul.f32 %v4077, %v4247
      %v4278 = vmul.f32 %v4078, %v4245
      %v4279 = vmul.f32 %v4079, %v4246
      %v4280 = vmul.f32 %v4080, %v4247
      %v4281 = vmul.f32 %v4081, %v4245
      %v4282 = vmul.f32 %v4082, %v4246
      %v4283 = vmul.f32 %v4083, %v4247
      %v4284 = vmul.f32 %v4084, %v4245
      %v4285 = vmul.f32 %v4085, %v4246
      %v4286 = vmul.f32 %v4086, %v4247
      %v4287 = vmul.f32 %v4087, %v4245
      %v4288 = vmul.f32 %v4088, %v4246
      %v4289 = vmul.f32 %v4089, %v4247
      %v4290 = vmul.f32 %v4090, %v4245
      %v4291 = vmul.f32 %v4091, %v4246
      %v4292 = vmul.f32 %v4092, %v4247
      %v4293 = vmul.f32 %v4093, %v4245
      %v4294 = vmul.f32 %v4094, %v4246
      %v4295 = vmul.f32 %v4095, %v4247
      %v4296 = vmul.f32 %v4096, %v4245
      %v4297 = vmul.f32 %v4097, %v4246
      %v4298 = vmul.f32 %v4098, %v4247
      %v4299 = vmul.f32 %v4099, %v4245
      %v4300 = vmul.f32 %v4100, %v4246
      %v4301 = vmul.f32 %v4101, %v4247
      %v4302 = vmul.f32 %v4102, %v4245
      %v4303 = vmul.f32 %v4103, %v4246
      %v4304 = vmul.f32 %v4104, %v4247
      %v4305 = vmul.f32 %v4105, %v4245
      %v4306 = vmul.f32 %v4106, %v4246
      %v4307 = vmul.f32 %v4107, %v4247
      %v4308 = vmul.f32 %v4108, %v4245
      %v4309 = vmul.f32 %v4109, %v4246
      %v4310 = vmul.f32 %v4110, %v4247
      %v4311 = vmul.f32 %v4111, %v4245
      %v4312 = vmul.f32 %v4112, %v4246
      %v4313 = vmul.f32 %v4113, %v4247
      %v4314 = vmul.f32 %v4114, %v4245
      %v4315 = vmul.f32 %v4115, %v4246
      %v4316 = vmul.f32 %v4116, %v4247
      %v4317 = vmul.f32 %v4117, %v4245
      %v4318 = vmul.f32 %v4118, %v4246
      %v4319 = vmul.f32 %v4119, %v4247
      %v4320 = vmul.f32 %v4120, %v4245
      %v4321 = vmul.f32 %v4121, %v4246
      %v4322 = vmul.f32 %v4122, %v4247
      %v4323 = vmul.f32 %v4123, %v4245
      %v4324 = vmul.f32 %v4124, %v4246
      %v4325 = vmul.f32 %v4125, %v4247
      %v4326 = vmul.f32 %v4126, %v4245
      %v4327 = vmul.f32 %v4127, %v4246
      %v4328 = vmul.f32 %v4128, %v4247
      %v4329 = vmul.f32 %v4129, %v4245
      %v4330 = vmul.f32 %v4130, %v4246
      %v4331 = vmul.f32 %v4131, %v4247
      %v4332 = vmul.f32 %v4132, %v4245
      %v4333 = vmul.f32 %v4133, %v4246
      %v4334 = vmul.f32 %v4134, %v4247
      %v4335 = vmul.f32 %v4135, %v4245
      %v4336 = vmul.f32 %v4136, %v4246
      %v4337 = vmul.f32 %v4137, %v4247
      %v4338 = vmul.f32 %v4138, %v4245
      %v4339 = vmul.f32 %v4139, %v4246
      %v4340 = vmul.f32 %v4140, %v4247
      %v4341 = vmul.f32 %v4141, %v4245
      %v4342 = vmul.f32 %v4142, %v4246
      %v4343 = vmul.f32 %v4143, %v4247
      %v4344 = vmul.f32 %v4144, %v4245
      %v4345 = vmul.f32 %v4145, %v4246
      %v4346 = vmul.f32 %v4146, %v4247
      %v4347 = vmul.f32 %v4147, %v4245
      %v4348 = vmul.f32 %v4148, %v4246
      %v4349 = vmul.f32 %v4149, %v4247
      %v4350 = vmul.f32 %v4150, %v4245
      %v4351 = vmul.f32 %v4151, %v4246
      %v4352 = vmul.f32 %v4152, %v4247
      %v4353 = vmul.f32 %v4153, %v4245
      %v4354 = vmul.f32 %v4154, %v4246
      %v4355 = vmul.f32 %v4155, %v4247
      %v4356 = vmul.f32 %v4156, %v4245
      %v4357 = vmul.f32 %v4157, %v4246
      %v4358 = vmul.f32 %v4158, %v4247
      %v4359 = vmul.f32 %v4159, %v4245
      %v4360 = vmul.f32 %v4160, %v4246
      %v4361 = vmul.f32 %v4161, %v4247
      %v4362 = vmul.f32 %v4162, %v4245
      %v4363 = vmul.f32 %v4163, %v4246
      %v4364 = vmul.f32 %v4164, %v4247
      %v4365 = vmul.f32 %v4165, %v4245
      %v4366 = vmul.f32 %v4166, %v4246
      %v4367 = vmul.f32 %v4167, %v4247
      %v4368 = vmul.f32 %v4168, %v4245
      %v4369 = vmul.f32 %v4169, %v4246
      %v4370 = vmul.f32 %v4170, %v4247
      %v4371 = vmul.f32 %v4171, %v4245
      %v4372 = vmul.f32 %v4172, %v4246
      %v4373 = vmul.f32 %v4173, %v4247
      %v4374 = vmul.f32 %v4174, %v4245
      %v4375 = vmul.f32 %v4175, %v4246
      %v4376 = vmul.f32 %v4176, %v4247
      %v4377 = vmul.f32 %v4177, %v4245
      %v4378 = vmul.f32 %v4178, %v4246
      %v4379 = vmul.f32 %v4179, %v4247
      %v4380 = vmul.f32 %v4180, %v4245
      %v4381 = vmul.f32 %v4181, %v4246
      %v4382 = vmul.f32 %v4182, %v4247
      %v4383 = vmul.f32 %v4183, %v4245
      %v4384 = vmul.f32 %v4184, %v4246
      %v4385 = vmul.f32 %v4185, %v4247
      %v4386 = vmul.f32 %v4186, %v4245
      %v4387 = vmul.f32 %v4187, %v4246
      %v4388 = vmul.f32 %v4188, %v4247
      %v4389 = vmul.f32 %v4189, %v4245
      %v4390 = vmul.f32 %v4190, %v4246
      %v4391 = vmul.f32 %v4191, %v4247
      %v4392 = vmul.f32 %v4192, %v4245
      %v4393 = vmul.f32 %v4193, %v4246
      %v4394 = vmul.f32 %v4194, %v4247
      %v4395 = vmul.f32 %v4195, %v4245
      %v4396 = vmul.f32 %v4196, %v4246
      %v4397 = vmul.f32 %v4197, %v4247
      %v4398 = vmul.f32 %v4198, %v4245
      %v4399 = vmul.f32 %v4199, %v4246
      %v4400 = vmul.f32 %v4200, %v4247
      %v4401 = vmul.f32 %v4201, %v4245
      %v4402 = vmul.f32 %v4202, %v4246
      %v4403 = vmul.f32 %v4203, %v4247
      %v4404 = vmul.f32 %v4204, %v4245
      %v4405 = vmul.f32 %v4205, %v4246
      %v4406 = vmul.f32 %v4206, %v4247
      %v4407 = vmul.f32 %v4207, %v4245
      %v4408 = vmul.f32 %v4208, %v4246
      %v4409 = vmul.f32 %v4209, %v4247
      %v4410 = vmul.f32 %v4210, %v4245
      %v4411 = vmul.f32 %v4211, %v4246
      %v4412 = vmul.f32 %v4212, %v4247
      %v4413 = vmul.f32 %v4213, %v4245
      %v4414 = vmul.f32 %v4214, %v4246
      %v4415 = vmul.f32 %v4215, %v4247
      %v4416 = vmul.f32 %v4216, %v4245
      %v4417 = vmul.f32 %v4217, %v4246
      %v4418 = vmul.f32 %v4218, %v4247
      %v4419 = vmul.f32 %v4219, %v4245
      %v4420 = vmul.f32 %v4220, %v4246
      %v4421 = vmul.f32 %v4221, %v4247
      %v4422 = vmul.f32 %v4222, %v4245
      %v4423 = vmul.f32 %v4223, %v4246
      %v4424 = vmul.f32 %v4224, %v4247
      %v4425 = vmul.f32 %v4225, %v4245
      %v4426 = vmul.f32 %v4226, %v4246
      %v4427 = vmul.f32 %v4227, %v4247
      %v4428 = vmul.f32 %v4228, %v4245
      %v4429 = vmul.f32 %v4229, %v4246
      %v4430 = vmul.f32 %v4230, %v4247
      %v4431 = vmul.f32 %v4231, %v4245
      %v4432 = vmul.f32 %v4232, %v4246
      %v4433 = vmul.f32 %v4233, %v4247
      %v4434 = vmul.f32 %v4234, %v4245
      %v4435 = vmul.f32 %v4235, %v4246
      %v4436 = vmul.f32 %v4236, %v4247
      %v4437 = vmul.f32 %v4237, %v4245
      %v4438 = vmul.f32 %v4238, %v4246
      %v4439 = vmul.f32 %v4239, %v4247
      %v4440 = vmul.f32 %v4240, %v4245
      %v4441 = vmul.f32 %v4241, %v4246
      %v4442 = vmul.f32 %v4242, %v4247
      %v4443 = vadd.f32 %v4251, %v4252
      %vm4444 = vcmask 15360
      %v4445 = vsel %vm4444, %v4253, 0.0
      %v4446 = vadd.f32 %v4443, %v4445
      %4447 = vadd.xlane.f32.xlu0 %v4446
      %v4448 = vpop.xlane.xlu0 %4447
      %v4449 = vadd.f32 %v4254, %v4255
      %v4450 = vsel %vm4444, %v4256, 0.0
      %v4451 = vadd.f32 %v4449, %v4450
      %4452 = vadd.xlane.f32.xlu0 %v4451
      %v4453 = vpop.xlane.xlu0 %4452
      %v4454 = vadd.f32 %v4257, %v4258
      %v4455 = vsel %vm4444, %v4259, 0.0
      %v4456 = vadd.f32 %v4454, %v4455
      %4457 = vadd.xlane.f32.xlu0 %v4456
      %v4458 = vpop.xlane.xlu0 %4457
      %v4459 = vadd.f32 %v4260, %v4261
      %v4460 = vsel %vm4444, %v4262, 0.0
      %v4461 = vadd.f32 %v4459, %v4460
      %4462 = vadd.xlane.f32.xlu0 %v4461
      %v4463 = vpop.xlane.xlu0 %4462
      %v4464 = vadd.f32 %v4263, %v4264
      %v4465 = vsel %vm4444, %v4265, 0.0
      %v4466 = vadd.f32 %v4464, %v4465
      %4467 = vadd.xlane.f32.xlu0 %v4466
      %v4468 = vpop.xlane.xlu0 %4467
      %v4469 = vadd.f32 %v4266, %v4267
      %v4470 = vsel %vm4444, %v4268, 0.0
      %v4471 = vadd.f32 %v4469, %v4470
      %4472 = vadd.xlane.f32.xlu0 %v4471
      %v4473 = vpop.xlane.xlu0 %4472
      %v4474 = vadd.f32 %v4269, %v4270
      %v4475 = vsel %vm4444, %v4271, 0.0
      %v4476 = vadd.f32 %v4474, %v4475
      %4477 = vadd.xlane.f32.xlu0 %v4476
      %v4478 = vpop.xlane.xlu0 %4477
      %v4479 = vadd.f32 %v4272, %v4273
      %v4480 = vsel %vm4444, %v4274, 0.0
      %v4481 = vadd.f32 %v4479, %v4480
      %4482 = vadd.xlane.f32.xlu0 %v4481
      %v4483 = vpop.xlane.xlu0 %4482
      %v4484 = vadd.f32 %v4275, %v4276
      %v4485 = vsel %vm4444, %v4277, 0.0
      %v4486 = vadd.f32 %v4484, %v4485
      %4487 = vadd.xlane.f32.xlu0 %v4486
      %v4488 = vpop.xlane.xlu0 %4487
      %v4489 = vadd.f32 %v4278, %v4279
      %v4490 = vsel %vm4444, %v4280, 0.0
      %v4491 = vadd.f32 %v4489, %v4490
      %4492 = vadd.xlane.f32.xlu0 %v4491
      %v4493 = vpop.xlane.xlu0 %4492
      %v4494 = vadd.f32 %v4281, %v4282
      %v4495 = vsel %vm4444, %v4283, 0.0
      %v4496 = vadd.f32 %v4494, %v4495
      %4497 = vadd.xlane.f32.xlu0 %v4496
      %v4498 = vpop.xlane.xlu0 %4497
      %v4499 = vadd.f32 %v4284, %v4285
      %v4500 = vsel %vm4444, %v4286, 0.0
      %v4501 = vadd.f32 %v4499, %v4500
      %4502 = vadd.xlane.f32.xlu0 %v4501
      %v4503 = vpop.xlane.xlu0 %4502
      %v4504 = vadd.f32 %v4287, %v4288
      %v4505 = vsel %vm4444, %v4289, 0.0
      %v4506 = vadd.f32 %v4504, %v4505
      %4507 = vadd.xlane.f32.xlu0 %v4506
      %v4508 = vpop.xlane.xlu0 %4507
      %v4509 = vadd.f32 %v4290, %v4291
      %v4510 = vsel %vm4444, %v4292, 0.0
      %v4511 = vadd.f32 %v4509, %v4510
      %4512 = vadd.xlane.f32.xlu0 %v4511
      %v4513 = vpop.xlane.xlu0 %4512
      %v4514 = vadd.f32 %v4293, %v4294
      %v4515 = vsel %vm4444, %v4295, 0.0
      %v4516 = vadd.f32 %v4514, %v4515
      %4517 = vadd.xlane.f32.xlu0 %v4516
      %v4518 = vpop.xlane.xlu0 %4517
      %v4519 = vadd.f32 %v4296, %v4297
      %v4520 = vsel %vm4444, %v4298, 0.0
      %v4521 = vadd.f32 %v4519, %v4520
      %4522 = vadd.xlane.f32.xlu0 %v4521
      %v4523 = vpop.xlane.xlu0 %4522
      %v4524 = vadd.f32 %v4299, %v4300
      %v4525 = vsel %vm4444, %v4301, 0.0
      %v4526 = vadd.f32 %v4524, %v4525
      %4527 = vadd.xlane.f32.xlu0 %v4526
      %v4528 = vpop.xlane.xlu0 %4527
      %v4529 = vadd.f32 %v4302, %v4303
      %v4530 = vsel %vm4444, %v4304, 0.0
      %v4531 = vadd.f32 %v4529, %v4530
      %4532 = vadd.xlane.f32.xlu0 %v4531
      %v4533 = vpop.xlane.xlu0 %4532
      %v4534 = vadd.f32 %v4305, %v4306
      %v4535 = vsel %vm4444, %v4307, 0.0
      %v4536 = vadd.f32 %v4534, %v4535
      %4537 = vadd.xlane.f32.xlu0 %v4536
      %v4538 = vpop.xlane.xlu0 %4537
      %v4539 = vadd.f32 %v4308, %v4309
      %v4540 = vsel %vm4444, %v4310, 0.0
      %v4541 = vadd.f32 %v4539, %v4540
      %4542 = vadd.xlane.f32.xlu0 %v4541
      %v4543 = vpop.xlane.xlu0 %4542
      %v4544 = vadd.f32 %v4311, %v4312
      %v4545 = vsel %vm4444, %v4313, 0.0
      %v4546 = vadd.f32 %v4544, %v4545
      %4547 = vadd.xlane.f32.xlu0 %v4546
      %v4548 = vpop.xlane.xlu0 %4547
      %v4549 = vadd.f32 %v4314, %v4315
      %v4550 = vsel %vm4444, %v4316, 0.0
      %v4551 = vadd.f32 %v4549, %v4550
      %4552 = vadd.xlane.f32.xlu0 %v4551
      %v4553 = vpop.xlane.xlu0 %4552
      %v4554 = vadd.f32 %v4317, %v4318
      %v4555 = vsel %vm4444, %v4319, 0.0
      %v4556 = vadd.f32 %v4554, %v4555
      %4557 = vadd.xlane.f32.xlu0 %v4556
      %v4558 = vpop.xlane.xlu0 %4557
      %v4559 = vadd.f32 %v4320, %v4321
      %v4560 = vsel %vm4444, %v4322, 0.0
      %v4561 = vadd.f32 %v4559, %v4560
      %4562 = vadd.xlane.f32.xlu0 %v4561
      %v4563 = vpop.xlane.xlu0 %4562
      %v4564 = vadd.f32 %v4323, %v4324
      %v4565 = vsel %vm4444, %v4325, 0.0
      %v4566 = vadd.f32 %v4564, %v4565
      %4567 = vadd.xlane.f32.xlu0 %v4566
      %v4568 = vpop.xlane.xlu0 %4567
      %v4569 = vadd.f32 %v4326, %v4327
      %v4570 = vsel %vm4444, %v4328, 0.0
      %v4571 = vadd.f32 %v4569, %v4570
      %4572 = vadd.xlane.f32.xlu0 %v4571
      %v4573 = vpop.xlane.xlu0 %4572
      %v4574 = vadd.f32 %v4329, %v4330
      %v4575 = vsel %vm4444, %v4331, 0.0
      %v4576 = vadd.f32 %v4574, %v4575
      %4577 = vadd.xlane.f32.xlu0 %v4576
      %v4578 = vpop.xlane.xlu0 %4577
      %v4579 = vadd.f32 %v4332, %v4333
      %v4580 = vsel %vm4444, %v4334, 0.0
      %v4581 = vadd.f32 %v4579, %v4580
      %4582 = vadd.xlane.f32.xlu0 %v4581
      %v4583 = vpop.xlane.xlu0 %4582
      %v4584 = vadd.f32 %v4335, %v4336
      %v4585 = vsel %vm4444, %v4337, 0.0
      %v4586 = vadd.f32 %v4584, %v4585
      %4587 = vadd.xlane.f32.xlu0 %v4586
      %v4588 = vpop.xlane.xlu0 %4587
      %v4589 = vadd.f32 %v4338, %v4339
      %v4590 = vsel %vm4444, %v4340, 0.0
      %v4591 = vadd.f32 %v4589, %v4590
      %4592 = vadd.xlane.f32.xlu0 %v4591
      %v4593 = vpop.xlane.xlu0 %4592
      %v4594 = vadd.f32 %v4341, %v4342
      %v4595 = vsel %vm4444, %v4343, 0.0
      %v4596 = vadd.f32 %v4594, %v4595
      %4597 = vadd.xlane.f32.xlu0 %v4596
      %v4598 = vpop.xlane.xlu0 %4597
      %v4599 = vadd.f32 %v4344, %v4345
      %v4600 = vsel %vm4444, %v4346, 0.0
      %v4601 = vadd.f32 %v4599, %v4600
      %4602 = vadd.xlane.f32.xlu0 %v4601
      %v4603 = vpop.xlane.xlu0 %4602
      %v4604 = vadd.f32 %v4347, %v4348
      %v4605 = vsel %vm4444, %v4349, 0.0
      %v4606 = vadd.f32 %v4604, %v4605
      %4607 = vadd.xlane.f32.xlu0 %v4606
      %v4608 = vpop.xlane.xlu0 %4607
      %v4609 = vadd.f32 %v4350, %v4351
      %v4610 = vsel %vm4444, %v4352, 0.0
      %v4611 = vadd.f32 %v4609, %v4610
      %4612 = vadd.xlane.f32.xlu0 %v4611
      %v4613 = vpop.xlane.xlu0 %4612
      %v4614 = vadd.f32 %v4353, %v4354
      %v4615 = vsel %vm4444, %v4355, 0.0
      %v4616 = vadd.f32 %v4614, %v4615
      %4617 = vadd.xlane.f32.xlu0 %v4616
      %v4618 = vpop.xlane.xlu0 %4617
      %v4619 = vadd.f32 %v4356, %v4357
      %v4620 = vsel %vm4444, %v4358, 0.0
      %v4621 = vadd.f32 %v4619, %v4620
      %4622 = vadd.xlane.f32.xlu0 %v4621
      %v4623 = vpop.xlane.xlu0 %4622
      %v4624 = vadd.f32 %v4359, %v4360
      %v4625 = vsel %vm4444, %v4361, 0.0
      %v4626 = vadd.f32 %v4624, %v4625
      %4627 = vadd.xlane.f32.xlu0 %v4626
      %v4628 = vpop.xlane.xlu0 %4627
      %v4629 = vadd.f32 %v4362, %v4363
      %v4630 = vsel %vm4444, %v4364, 0.0
      %v4631 = vadd.f32 %v4629, %v4630
      %4632 = vadd.xlane.f32.xlu0 %v4631
      %v4633 = vpop.xlane.xlu0 %4632
      %v4634 = vadd.f32 %v4365, %v4366
      %v4635 = vsel %vm4444, %v4367, 0.0
      %v4636 = vadd.f32 %v4634, %v4635
      %4637 = vadd.xlane.f32.xlu0 %v4636
      %v4638 = vpop.xlane.xlu0 %4637
      %v4639 = vadd.f32 %v4368, %v4369
      %v4640 = vsel %vm4444, %v4370, 0.0
      %v4641 = vadd.f32 %v4639, %v4640
      %4642 = vadd.xlane.f32.xlu0 %v4641
      %v4643 = vpop.xlane.xlu0 %4642
      %v4644 = vadd.f32 %v4371, %v4372
      %v4645 = vsel %vm4444, %v4373, 0.0
      %v4646 = vadd.f32 %v4644, %v4645
      %4647 = vadd.xlane.f32.xlu0 %v4646
      %v4648 = vpop.xlane.xlu0 %4647
      %v4649 = vadd.f32 %v4374, %v4375
      %v4650 = vsel %vm4444, %v4376, 0.0
      %v4651 = vadd.f32 %v4649, %v4650
      %4652 = vadd.xlane.f32.xlu0 %v4651
      %v4653 = vpop.xlane.xlu0 %4652
      %v4654 = vadd.f32 %v4377, %v4378
      %v4655 = vsel %vm4444, %v4379, 0.0
      %v4656 = vadd.f32 %v4654, %v4655
      %4657 = vadd.xlane.f32.xlu0 %v4656
      %v4658 = vpop.xlane.xlu0 %4657
      %v4659 = vadd.f32 %v4380, %v4381
      %v4660 = vsel %vm4444, %v4382, 0.0
      %v4661 = vadd.f32 %v4659, %v4660
      %4662 = vadd.xlane.f32.xlu0 %v4661
      %v4663 = vpop.xlane.xlu0 %4662
      %v4664 = vadd.f32 %v4383, %v4384
      %v4665 = vsel %vm4444, %v4385, 0.0
      %v4666 = vadd.f32 %v4664, %v4665
      %4667 = vadd.xlane.f32.xlu0 %v4666
      %v4668 = vpop.xlane.xlu0 %4667
      %v4669 = vadd.f32 %v4386, %v4387
      %v4670 = vsel %vm4444, %v4388, 0.0
      %v4671 = vadd.f32 %v4669, %v4670
      %4672 = vadd.xlane.f32.xlu0 %v4671
      %v4673 = vpop.xlane.xlu0 %4672
      %v4674 = vadd.f32 %v4389, %v4390
      %v4675 = vsel %vm4444, %v4391, 0.0
      %v4676 = vadd.f32 %v4674, %v4675
      %4677 = vadd.xlane.f32.xlu0 %v4676
      %v4678 = vpop.xlane.xlu0 %4677
      %v4679 = vadd.f32 %v4392, %v4393
      %v4680 = vsel %vm4444, %v4394, 0.0
      %v4681 = vadd.f32 %v4679, %v4680
      %4682 = vadd.xlane.f32.xlu0 %v4681
      %v4683 = vpop.xlane.xlu0 %4682
      %v4684 = vadd.f32 %v4395, %v4396
      %v4685 = vsel %vm4444, %v4397, 0.0
      %v4686 = vadd.f32 %v4684, %v4685
      %4687 = vadd.xlane.f32.xlu0 %v4686
      %v4688 = vpop.xlane.xlu0 %4687
      %v4689 = vadd.f32 %v4398, %v4399
      %v4690 = vsel %vm4444, %v4400, 0.0
      %v4691 = vadd.f32 %v4689, %v4690
      %4692 = vadd.xlane.f32.xlu0 %v4691
      %v4693 = vpop.xlane.xlu0 %4692
      %v4694 = vadd.f32 %v4401, %v4402
      %v4695 = vsel %vm4444, %v4403, 0.0
      %v4696 = vadd.f32 %v4694, %v4695
      %4697 = vadd.xlane.f32.xlu0 %v4696
      %v4698 = vpop.xlane.xlu0 %4697
      %v4699 = vadd.f32 %v4404, %v4405
      %v4700 = vsel %vm4444, %v4406, 0.0
      %v4701 = vadd.f32 %v4699, %v4700
      %4702 = vadd.xlane.f32.xlu0 %v4701
      %v4703 = vpop.xlane.xlu0 %4702
      %v4704 = vadd.f32 %v4407, %v4408
      %v4705 = vsel %vm4444, %v4409, 0.0
      %v4706 = vadd.f32 %v4704, %v4705
      %4707 = vadd.xlane.f32.xlu0 %v4706
      %v4708 = vpop.xlane.xlu0 %4707
      %v4709 = vadd.f32 %v4410, %v4411
      %v4710 = vsel %vm4444, %v4412, 0.0
      %v4711 = vadd.f32 %v4709, %v4710
      %4712 = vadd.xlane.f32.xlu0 %v4711
      %v4713 = vpop.xlane.xlu0 %4712
      %v4714 = vadd.f32 %v4413, %v4414
      %v4715 = vsel %vm4444, %v4415, 0.0
      %v4716 = vadd.f32 %v4714, %v4715
      %4717 = vadd.xlane.f32.xlu0 %v4716
      %v4718 = vpop.xlane.xlu0 %4717
      %v4719 = vadd.f32 %v4416, %v4417
      %v4720 = vsel %vm4444, %v4418, 0.0
      %v4721 = vadd.f32 %v4719, %v4720
      %4722 = vadd.xlane.f32.xlu0 %v4721
      %v4723 = vpop.xlane.xlu0 %4722
      %v4724 = vadd.f32 %v4419, %v4420
      %v4725 = vsel %vm4444, %v4421, 0.0
      %v4726 = vadd.f32 %v4724, %v4725
      %4727 = vadd.xlane.f32.xlu0 %v4726
      %v4728 = vpop.xlane.xlu0 %4727
      %v4729 = vadd.f32 %v4422, %v4423
      %v4730 = vsel %vm4444, %v4424, 0.0
      %v4731 = vadd.f32 %v4729, %v4730
      %4732 = vadd.xlane.f32.xlu0 %v4731
      %v4733 = vpop.xlane.xlu0 %4732
      %v4734 = vadd.f32 %v4425, %v4426
      %v4735 = vsel %vm4444, %v4427, 0.0
      %v4736 = vadd.f32 %v4734, %v4735
      %4737 = vadd.xlane.f32.xlu0 %v4736
      %v4738 = vpop.xlane.xlu0 %4737
      %v4739 = vadd.f32 %v4428, %v4429
      %v4740 = vsel %vm4444, %v4430, 0.0
      %v4741 = vadd.f32 %v4739, %v4740
      %4742 = vadd.xlane.f32.xlu0 %v4741
      %v4743 = vpop.xlane.xlu0 %4742
      %v4744 = vadd.f32 %v4431, %v4432
      %v4745 = vsel %vm4444, %v4433, 0.0
      %v4746 = vadd.f32 %v4744, %v4745
      %4747 = vadd.xlane.f32.xlu0 %v4746
      %v4748 = vpop.xlane.xlu0 %4747
      %v4749 = vadd.f32 %v4434, %v4435
      %v4750 = vsel %vm4444, %v4436, 0.0
      %v4751 = vadd.f32 %v4749, %v4750
      %4752 = vadd.xlane.f32.xlu0 %v4751
      %v4753 = vpop.xlane.xlu0 %4752
      %v4754 = vadd.f32 %v4437, %v4438
      %v4755 = vsel %vm4444, %v4439, 0.0
      %v4756 = vadd.f32 %v4754, %v4755
      %4757 = vadd.xlane.f32.xlu0 %v4756
      %v4758 = vpop.xlane.xlu0 %4757
      %v4759 = vadd.f32 %v4440, %v4441
      %v4760 = vsel %vm4444, %v4442, 0.0
      %v4761 = vadd.f32 %v4759, %v4760
      %4762 = vadd.xlane.f32.xlu0 %v4761
      %v4763 = vpop.xlane.xlu0 %4762
      %v4764 = vadd.f32 %v3859, %v4448
      %v4765 = vadd.f32 %v3860, %v4453
      %v4766 = vadd.f32 %v3861, %v4458
      %v4767 = vadd.f32 %v3862, %v4463
      %v4768 = vadd.f32 %v3863, %v4468
      %v4769 = vadd.f32 %v3864, %v4473
      %v4770 = vadd.f32 %v3865, %v4478
      %v4771 = vadd.f32 %v3866, %v4483
      %v4772 = vadd.f32 %v3867, %v4488
      %v4773 = vadd.f32 %v3868, %v4493
      %v4774 = vadd.f32 %v3869, %v4498
      %v4775 = vadd.f32 %v3870, %v4503
      %v4776 = vadd.f32 %v3871, %v4508
      %v4777 = vadd.f32 %v3872, %v4513
      %v4778 = vadd.f32 %v3873, %v4518
      %v4779 = vadd.f32 %v3874, %v4523
      %v4780 = vadd.f32 %v3875, %v4528
      %v4781 = vadd.f32 %v3876, %v4533
      %v4782 = vadd.f32 %v3877, %v4538
      %v4783 = vadd.f32 %v3878, %v4543
      %v4784 = vadd.f32 %v3879, %v4548
      %v4785 = vadd.f32 %v3880, %v4553
      %v4786 = vadd.f32 %v3881, %v4558
      %v4787 = vadd.f32 %v3882, %v4563
      %v4788 = vadd.f32 %v3883, %v4568
      %v4789 = vadd.f32 %v3884, %v4573
      %v4790 = vadd.f32 %v3885, %v4578
      %v4791 = vadd.f32 %v3886, %v4583
      %v4792 = vadd.f32 %v3887, %v4588
      %v4793 = vadd.f32 %v3888, %v4593
      %v4794 = vadd.f32 %v3889, %v4598
      %v4795 = vadd.f32 %v3890, %v4603
      %v4796 = vadd.f32 %v3891, %v4608
      %v4797 = vadd.f32 %v3892, %v4613
      %v4798 = vadd.f32 %v3893, %v4618
      %v4799 = vadd.f32 %v3894, %v4623
      %v4800 = vadd.f32 %v3895, %v4628
      %v4801 = vadd.f32 %v3896, %v4633
      %v4802 = vadd.f32 %v3897, %v4638
      %v4803 = vadd.f32 %v3898, %v4643
      %v4804 = vadd.f32 %v3899, %v4648
      %v4805 = vadd.f32 %v3900, %v4653
      %v4806 = vadd.f32 %v3901, %v4658
      %v4807 = vadd.f32 %v3902, %v4663
      %v4808 = vadd.f32 %v3903, %v4668
      %v4809 = vadd.f32 %v3904, %v4673
      %v4810 = vadd.f32 %v3905, %v4678
      %v4811 = vadd.f32 %v3906, %v4683
      %v4812 = vadd.f32 %v3907, %v4688
      %v4813 = vadd.f32 %v3908, %v4693
      %v4814 = vadd.f32 %v3909, %v4698
      %v4815 = vadd.f32 %v3910, %v4703
      %v4816 = vadd.f32 %v3911, %v4708
      %v4817 = vadd.f32 %v3912, %v4713
      %v4818 = vadd.f32 %v3913, %v4718
      %v4819 = vadd.f32 %v3914, %v4723
      %v4820 = vadd.f32 %v3915, %v4728
      %v4821 = vadd.f32 %v3916, %v4733
      %v4822 = vadd.f32 %v3917, %v4738
      %v4823 = vadd.f32 %v3918, %v4743
      %v4824 = vadd.f32 %v3919, %v4748
      %v4825 = vadd.f32 %v3920, %v4753
      %v4826 = vadd.f32 %v3921, %v4758
      %v4827 = vadd.f32 %v3922, %v4763
      %v4828 = vld [vmem:[#allocation2] sm:$0x1]
      %v4830 = vperm.slane %v4828, 0
      %v4832 = vadd.f32 %v4764, %v4830
      %v4833 = vadd.f32 %v4765, %v4830
      %v4834 = vadd.f32 %v4766, %v4830
      %v4835 = vadd.f32 %v4767, %v4830
      %v4836 = vadd.f32 %v4768, %v4830
      %v4837 = vadd.f32 %v4769, %v4830
      %v4838 = vadd.f32 %v4770, %v4830
      %v4839 = vadd.f32 %v4771, %v4830
      %v4840 = vadd.f32 %v4772, %v4830
      %v4841 = vadd.f32 %v4773, %v4830
      %v4842 = vadd.f32 %v4774, %v4830
      %v4843 = vadd.f32 %v4775, %v4830
      %v4844 = vadd.f32 %v4776, %v4830
      %v4845 = vadd.f32 %v4777, %v4830
      %v4846 = vadd.f32 %v4778, %v4830
      %v4847 = vadd.f32 %v4779, %v4830
      %v4848 = vadd.f32 %v4780, %v4830
      %v4849 = vadd.f32 %v4781, %v4830
      %v4850 = vadd.f32 %v4782, %v4830
      %v4851 = vadd.f32 %v4783, %v4830
      %v4852 = vadd.f32 %v4784, %v4830
      %v4853 = vadd.f32 %v4785, %v4830
      %v4854 = vadd.f32 %v4786, %v4830
      %v4855 = vadd.f32 %v4787, %v4830
      %v4856 = vadd.f32 %v4788, %v4830
      %v4857 = vadd.f32 %v4789, %v4830
      %v4858 = vadd.f32 %v4790, %v4830
      %v4859 = vadd.f32 %v4791, %v4830
      %v4860 = vadd.f32 %v4792, %v4830
      %v4861 = vadd.f32 %v4793, %v4830
      %v4862 = vadd.f32 %v4794, %v4830
      %v4863 = vadd.f32 %v4795, %v4830
      %v4864 = vadd.f32 %v4796, %v4830
      %v4865 = vadd.f32 %v4797, %v4830
      %v4866 = vadd.f32 %v4798, %v4830
      %v4867 = vadd.f32 %v4799, %v4830
      %v4868 = vadd.f32 %v4800, %v4830
      %v4869 = vadd.f32 %v4801, %v4830
      %v4870 = vadd.f32 %v4802, %v4830
      %v4871 = vadd.f32 %v4803, %v4830
      %v4872 = vadd.f32 %v4804, %v4830
      %v4873 = vadd.f32 %v4805, %v4830
      %v4874 = vadd.f32 %v4806, %v4830
      %v4875 = vadd.f32 %v4807, %v4830
      %v4876 = vadd.f32 %v4808, %v4830
      %v4877 = vadd.f32 %v4809, %v4830
      %v4878 = vadd.f32 %v4810, %v4830
      %v4879 = vadd.f32 %v4811, %v4830
      %v4880 = vadd.f32 %v4812, %v4830
      %v4881 = vadd.f32 %v4813, %v4830
      %v4882 = vadd.f32 %v4814, %v4830
      %v4883 = vadd.f32 %v4815, %v4830
      %v4884 = vadd.f32 %v4816, %v4830
      %v4885 = vadd.f32 %v4817, %v4830
      %v4886 = vadd.f32 %v4818, %v4830
      %v4887 = vadd.f32 %v4819, %v4830
      %v4888 = vadd.f32 %v4820, %v4830
      %v4889 = vadd.f32 %v4821, %v4830
      %v4890 = vadd.f32 %v4822, %v4830
      %v4891 = vadd.f32 %v4823, %v4830
      %v4892 = vadd.f32 %v4824, %v4830
      %v4893 = vadd.f32 %v4825, %v4830
      %v4894 = vadd.f32 %v4826, %v4830
      %v4895 = vadd.f32 %v4827, %v4830
      %v4896 = vxor.u32 %v4832, 2147483648
      %v4897 = vxor.u32 %v4833, 2147483648
      %v4898 = vxor.u32 %v4834, 2147483648
      %v4899 = vxor.u32 %v4835, 2147483648
      %v4900 = vxor.u32 %v4836, 2147483648
      %v4901 = vxor.u32 %v4837, 2147483648
      %v4902 = vxor.u32 %v4838, 2147483648
      %v4903 = vxor.u32 %v4839, 2147483648
      %v4904 = vxor.u32 %v4840, 2147483648
      %v4905 = vxor.u32 %v4841, 2147483648
      %v4906 = vxor.u32 %v4842, 2147483648
      %v4907 = vxor.u32 %v4843, 2147483648
      %v4908 = vxor.u32 %v4844, 2147483648
      %v4909 = vxor.u32 %v4845, 2147483648
      %v4910 = vxor.u32 %v4846, 2147483648
      %v4911 = vxor.u32 %v4847, 2147483648
      %v4912 = vxor.u32 %v4848, 2147483648
      %v4913 = vxor.u32 %v4849, 2147483648
      %v4914 = vxor.u32 %v4850, 2147483648
      %v4915 = vxor.u32 %v4851, 2147483648
      %v4916 = vxor.u32 %v4852, 2147483648
      %v4917 = vxor.u32 %v4853, 2147483648
      %v4918 = vxor.u32 %v4854, 2147483648
      %v4919 = vxor.u32 %v4855, 2147483648
      %v4920 = vxor.u32 %v4856, 2147483648
      %v4921 = vxor.u32 %v4857, 2147483648
      %v4922 = vxor.u32 %v4858, 2147483648
      %v4923 = vxor.u32 %v4859, 2147483648
      %v4924 = vxor.u32 %v4860, 2147483648
      %v4925 = vxor.u32 %v4861, 2147483648
      %v4926 = vxor.u32 %v4862, 2147483648
      %v4927 = vxor.u32 %v4863, 2147483648
      %v4928 = vxor.u32 %v4864, 2147483648
      %v4929 = vxor.u32 %v4865, 2147483648
      %v4930 = vxor.u32 %v4866, 2147483648
      %v4931 = vxor.u32 %v4867, 2147483648
      %v4932 = vxor.u32 %v4868, 2147483648
      %v4933 = vxor.u32 %v4869, 2147483648
      %v4934 = vxor.u32 %v4870, 2147483648
      %v4935 = vxor.u32 %v4871, 2147483648
      %v4936 = vxor.u32 %v4872, 2147483648
      %v4937 = vxor.u32 %v4873, 2147483648
      %v4938 = vxor.u32 %v4874, 2147483648
      %v4939 = vxor.u32 %v4875, 2147483648
      %v4940 = vxor.u32 %v4876, 2147483648
      %v4941 = vxor.u32 %v4877, 2147483648
      %v4942 = vxor.u32 %v4878, 2147483648
      %v4943 = vxor.u32 %v4879, 2147483648
      %v4944 = vxor.u32 %v4880, 2147483648
      %v4945 = vxor.u32 %v4881, 2147483648
      %v4946 = vxor.u32 %v4882, 2147483648
      %v4947 = vxor.u32 %v4883, 2147483648
      %v4948 = vxor.u32 %v4884, 2147483648
      %v4949 = vxor.u32 %v4885, 2147483648
      %v4950 = vxor.u32 %v4886, 2147483648
      %v4951 = vxor.u32 %v4887, 2147483648
      %v4952 = vxor.u32 %v4888, 2147483648
      %v4953 = vxor.u32 %v4889, 2147483648
      %v4954 = vxor.u32 %v4890, 2147483648
      %v4955 = vxor.u32 %v4891, 2147483648
      %v4956 = vxor.u32 %v4892, 2147483648
      %v4957 = vxor.u32 %v4893, 2147483648
      %v4958 = vxor.u32 %v4894, 2147483648
      %v4959 = vxor.u32 %v4895, 2147483648
      %v4960 = vmul.f32 %v4896, 1.442695
      %v4961 = vpow.pop %v4960
      %v4962 = vmul.f32 %v4897, 1.442695
      %v4963 = vpow.pop %v4962
      %v4964 = vmul.f32 %v4898, 1.442695
      %v4965 = vpow.pop %v4964
      %v4966 = vmul.f32 %v4899, 1.442695
      %v4967 = vpow.pop %v4966
      %v4968 = vmul.f32 %v4900, 1.442695
      %v4969 = vpow.pop %v4968
      %v4970 = vmul.f32 %v4901, 1.442695
      %v4971 = vpow.pop %v4970
      %v4972 = vmul.f32 %v4902, 1.442695
      %v4973 = vpow.pop %v4972
      %v4974 = vmul.f32 %v4903, 1.442695
      %v4975 = vpow.pop %v4974
      %v4976 = vmul.f32 %v4904, 1.442695
      %v4977 = vpow.pop %v4976
      %v4978 = vmul.f32 %v4905, 1.442695
      %v4979 = vpow.pop %v4978
      %v4980 = vmul.f32 %v4906, 1.442695
      %v4981 = vpow.pop %v4980
      %v4982 = vmul.f32 %v4907, 1.442695
      %v4983 = vpow.pop %v4982
      %v4984 = vmul.f32 %v4908, 1.442695
      %v4985 = vpow.pop %v4984
      %v4986 = vmul.f32 %v4909, 1.442695
      %v4987 = vpow.pop %v4986
      %v4988 = vmul.f32 %v4910, 1.442695
      %v4989 = vpow.pop %v4988
      %v4990 = vmul.f32 %v4911, 1.442695
      %v4991 = vpow.pop %v4990
      %v4992 = vmul.f32 %v4912, 1.442695
      %v4993 = vpow.pop %v4992
      %v4994 = vmul.f32 %v4913, 1.442695
      %v4995 = vpow.pop %v4994
      %v4996 = vmul.f32 %v4914, 1.442695
      %v4997 = vpow.pop %v4996
      %v4998 = vmul.f32 %v4915, 1.442695
      %v4999 = vpow.pop %v4998
      %v5000 = vmul.f32 %v4916, 1.442695
      %v5001 = vpow.pop %v5000
      %v5002 = vmul.f32 %v4917, 1.442695
      %v5003 = vpow.pop %v5002
      %v5004 = vmul.f32 %v4918, 1.442695
      %v5005 = vpow.pop %v5004
      %v5006 = vmul.f32 %v4919, 1.442695
      %v5007 = vpow.pop %v5006
      %v5008 = vmul.f32 %v4920, 1.442695
      %v5009 = vpow.pop %v5008
      %v5010 = vmul.f32 %v4921, 1.442695
      %v5011 = vpow.pop %v5010
      %v5012 = vmul.f32 %v4922, 1.442695
      %v5013 = vpow.pop %v5012
      %v5014 = vmul.f32 %v4923, 1.442695
      %v5015 = vpow.pop %v5014
      %v5016 = vmul.f32 %v4924, 1.442695
      %v5017 = vpow.pop %v5016
      %v5018 = vmul.f32 %v4925, 1.442695
      %v5019 = vpow.pop %v5018
      %v5020 = vmul.f32 %v4926, 1.442695
      %v5021 = vpow.pop %v5020
      %v5022 = vmul.f32 %v4927, 1.442695
      %v5023 = vpow.pop %v5022
      %v5024 = vmul.f32 %v4928, 1.442695
      %v5025 = vpow.pop %v5024
      %v5026 = vmul.f32 %v4929, 1.442695
      %v5027 = vpow.pop %v5026
      %v5028 = vmul.f32 %v4930, 1.442695
      %v5029 = vpow.pop %v5028
      %v5030 = vmul.f32 %v4931, 1.442695
      %v5031 = vpow.pop %v5030
      %v5032 = vmul.f32 %v4932, 1.442695
      %v5033 = vpow.pop %v5032
      %v5034 = vmul.f32 %v4933, 1.442695
      %v5035 = vpow.pop %v5034
      %v5036 = vmul.f32 %v4934, 1.442695
      %v5037 = vpow.pop %v5036
      %v5038 = vmul.f32 %v4935, 1.442695
      %v5039 = vpow.pop %v5038
      %v5040 = vmul.f32 %v4936, 1.442695
      %v5041 = vpow.pop %v5040
      %v5042 = vmul.f32 %v4937, 1.442695
      %v5043 = vpow.pop %v5042
      %v5044 = vmul.f32 %v4938, 1.442695
      %v5045 = vpow.pop %v5044
      %v5046 = vmul.f32 %v4939, 1.442695
      %v5047 = vpow.pop %v5046
      %v5048 = vmul.f32 %v4940, 1.442695
      %v5049 = vpow.pop %v5048
      %v5050 = vmul.f32 %v4941, 1.442695
      %v5051 = vpow.pop %v5050
      %v5052 = vmul.f32 %v4942, 1.442695
      %v5053 = vpow.pop %v5052
      %v5054 = vmul.f32 %v4943, 1.442695
      %v5055 = vpow.pop %v5054
      %v5056 = vmul.f32 %v4944, 1.442695
      %v5057 = vpow.pop %v5056
      %v5058 = vmul.f32 %v4945, 1.442695
      %v5059 = vpow.pop %v5058
      %v5060 = vmul.f32 %v4946, 1.442695
      %v5061 = vpow.pop %v5060
      %v5062 = vmul.f32 %v4947, 1.442695
      %v5063 = vpow.pop %v5062
      %v5064 = vmul.f32 %v4948, 1.442695
      %v5065 = vpow.pop %v5064
      %v5066 = vmul.f32 %v4949, 1.442695
      %v5067 = vpow.pop %v5066
      %v5068 = vmul.f32 %v4950, 1.442695
      %v5069 = vpow.pop %v5068
      %v5070 = vmul.f32 %v4951, 1.442695
      %v5071 = vpow.pop %v5070
      %v5072 = vmul.f32 %v4952, 1.442695
      %v5073 = vpow.pop %v5072
      %v5074 = vmul.f32 %v4953, 1.442695
      %v5075 = vpow.pop %v5074
      %v5076 = vmul.f32 %v4954, 1.442695
      %v5077 = vpow.pop %v5076
      %v5078 = vmul.f32 %v4955, 1.442695
      %v5079 = vpow.pop %v5078
      %v5080 = vmul.f32 %v4956, 1.442695
      %v5081 = vpow.pop %v5080
      %v5082 = vmul.f32 %v4957, 1.442695
      %v5083 = vpow.pop %v5082
      %v5084 = vmul.f32 %v4958, 1.442695
      %v5085 = vpow.pop %v5084
      %v5086 = vmul.f32 %v4959, 1.442695
      %v5087 = vpow.pop %v5086
      %v5088 = vadd.f32 %v4961, 1.0
      %v5089 = vadd.f32 %v4963, 1.0
      %v5090 = vadd.f32 %v4965, 1.0
      %v5091 = vadd.f32 %v4967, 1.0
      %v5092 = vadd.f32 %v4969, 1.0
      %v5093 = vadd.f32 %v4971, 1.0
      %v5094 = vadd.f32 %v4973, 1.0
      %v5095 = vadd.f32 %v4975, 1.0
      %v5096 = vadd.f32 %v4977, 1.0
      %v5097 = vadd.f32 %v4979, 1.0
      %v5098 = vadd.f32 %v4981, 1.0
      %v5099 = vadd.f32 %v4983, 1.0
      %v5100 = vadd.f32 %v4985, 1.0
      %v5101 = vadd.f32 %v4987, 1.0
      %v5102 = vadd.f32 %v4989, 1.0
      %v5103 = vadd.f32 %v4991, 1.0
      %v5104 = vadd.f32 %v4993, 1.0
      %v5105 = vadd.f32 %v4995, 1.0
      %v5106 = vadd.f32 %v4997, 1.0
      %v5107 = vadd.f32 %v4999, 1.0
      %v5108 = vadd.f32 %v5001, 1.0
      %v5109 = vadd.f32 %v5003, 1.0
      %v5110 = vadd.f32 %v5005, 1.0
      %v5111 = vadd.f32 %v5007, 1.0
      %v5112 = vadd.f32 %v5009, 1.0
      %v5113 = vadd.f32 %v5011, 1.0
      %v5114 = vadd.f32 %v5013, 1.0
      %v5115 = vadd.f32 %v5015, 1.0
      %v5116 = vadd.f32 %v5017, 1.0
      %v5117 = vadd.f32 %v5019, 1.0
      %v5118 = vadd.f32 %v5021, 1.0
      %v5119 = vadd.f32 %v5023, 1.0
      %v5120 = vadd.f32 %v5025, 1.0
      %v5121 = vadd.f32 %v5027, 1.0
      %v5122 = vadd.f32 %v5029, 1.0
      %v5123 = vadd.f32 %v5031, 1.0
      %v5124 = vadd.f32 %v5033, 1.0
      %v5125 = vadd.f32 %v5035, 1.0
      %v5126 = vadd.f32 %v5037, 1.0
      %v5127 = vadd.f32 %v5039, 1.0
      %v5128 = vadd.f32 %v5041, 1.0
      %v5129 = vadd.f32 %v5043, 1.0
      %v5130 = vadd.f32 %v5045, 1.0
      %v5131 = vadd.f32 %v5047, 1.0
      %v5132 = vadd.f32 %v5049, 1.0
      %v5133 = vadd.f32 %v5051, 1.0
      %v5134 = vadd.f32 %v5053, 1.0
      %v5135 = vadd.f32 %v5055, 1.0
      %v5136 = vadd.f32 %v5057, 1.0
      %v5137 = vadd.f32 %v5059, 1.0
      %v5138 = vadd.f32 %v5061, 1.0
      %v5139 = vadd.f32 %v5063, 1.0
      %v5140 = vadd.f32 %v5065, 1.0
      %v5141 = vadd.f32 %v5067, 1.0
      %v5142 = vadd.f32 %v5069, 1.0
      %v5143 = vadd.f32 %v5071, 1.0
      %v5144 = vadd.f32 %v5073, 1.0
      %v5145 = vadd.f32 %v5075, 1.0
      %v5146 = vadd.f32 %v5077, 1.0
      %v5147 = vadd.f32 %v5079, 1.0
      %v5148 = vadd.f32 %v5081, 1.0
      %v5149 = vadd.f32 %v5083, 1.0
      %v5150 = vadd.f32 %v5085, 1.0
      %v5151 = vadd.f32 %v5087, 1.0
      %v5152 = vrcp.pop %v5088
      %v5153 = vmul.f32 %v5088, %v5152
      %v5154 = vsub.f32 1.0, %v5153
      %v5155 = vmul.f32 %v5152, %v5154
      %v5156 = vadd.f32 %v5152, %v5155
      %vm5157 = vweird.f32 %v5088
      %vm5158 = vweird.f32 %v5152
      %vm5159 = vmor %vm5157, %vm5158
      %v5160 = vsel %vm5159, %v5152, %v5156
      %v5161 = vand.u32 2147483647, %v5088
      %vm5162 = vcmp.eq.f32.partialorder %v5161, 8.507059e+37
      %v5163 = vand.u32 %v5088, 2147483648
      %v5164 = vor.u32 1.1754944e-38, %v5163
      %v5165 = vsel %vm5162, %v5164, %v5160
      %v5166 = vmul.f32 1.0, %v5165
      %v5167 = vrcp.pop %v5089
      %v5168 = vmul.f32 %v5089, %v5167
      %v5169 = vsub.f32 1.0, %v5168
      %v5170 = vmul.f32 %v5167, %v5169
      %v5171 = vadd.f32 %v5167, %v5170
      %vm5172 = vweird.f32 %v5089
      %vm5173 = vweird.f32 %v5167
      %vm5174 = vmor %vm5172, %vm5173
      %v5175 = vsel %vm5174, %v5167, %v5171
      %v5176 = vand.u32 2147483647, %v5089
      %vm5177 = vcmp.eq.f32.partialorder %v5176, 8.507059e+37
      %v5178 = vand.u32 %v5089, 2147483648
      %v5179 = vor.u32 1.1754944e-38, %v5178
      %v5180 = vsel %vm5177, %v5179, %v5175
      %v5181 = vmul.f32 1.0, %v5180
      %v5182 = vrcp.pop %v5090
      %v5183 = vmul.f32 %v5090, %v5182
      %v5184 = vsub.f32 1.0, %v5183
      %v5185 = vmul.f32 %v5182, %v5184
      %v5186 = vadd.f32 %v5182, %v5185
      %vm5187 = vweird.f32 %v5090
      %vm5188 = vweird.f32 %v5182
      %vm5189 = vmor %vm5187, %vm5188
      %v5190 = vsel %vm5189, %v5182, %v5186
      %v5191 = vand.u32 2147483647, %v5090
      %vm5192 = vcmp.eq.f32.partialorder %v5191, 8.507059e+37
      %v5193 = vand.u32 %v5090, 2147483648
      %v5194 = vor.u32 1.1754944e-38, %v5193
      %v5195 = vsel %vm5192, %v5194, %v5190
      %v5196 = vmul.f32 1.0, %v5195
      %v5197 = vrcp.pop %v5091
      %v5198 = vmul.f32 %v5091, %v5197
      %v5199 = vsub.f32 1.0, %v5198
      %v5200 = vmul.f32 %v5197, %v5199
      %v5201 = vadd.f32 %v5197, %v5200
      %vm5202 = vweird.f32 %v5091
      %vm5203 = vweird.f32 %v5197
      %vm5204 = vmor %vm5202, %vm5203
      %v5205 = vsel %vm5204, %v5197, %v5201
      %v5206 = vand.u32 2147483647, %v5091
      %vm5207 = vcmp.eq.f32.partialorder %v5206, 8.507059e+37
      %v5208 = vand.u32 %v5091, 2147483648
      %v5209 = vor.u32 1.1754944e-38, %v5208
      %v5210 = vsel %vm5207, %v5209, %v5205
      %v5211 = vmul.f32 1.0, %v5210
      %v5212 = vrcp.pop %v5092
      %v5213 = vmul.f32 %v5092, %v5212
      %v5214 = vsub.f32 1.0, %v5213
      %v5215 = vmul.f32 %v5212, %v5214
      %v5216 = vadd.f32 %v5212, %v5215
      %vm5217 = vweird.f32 %v5092
      %vm5218 = vweird.f32 %v5212
      %vm5219 = vmor %vm5217, %vm5218
      %v5220 = vsel %vm5219, %v5212, %v5216
      %v5221 = vand.u32 2147483647, %v5092
      %vm5222 = vcmp.eq.f32.partialorder %v5221, 8.507059e+37
      %v5223 = vand.u32 %v5092, 2147483648
      %v5224 = vor.u32 1.1754944e-38, %v5223
      %v5225 = vsel %vm5222, %v5224, %v5220
      %v5226 = vmul.f32 1.0, %v5225
      %v5227 = vrcp.pop %v5093
      %v5228 = vmul.f32 %v5093, %v5227
      %v5229 = vsub.f32 1.0, %v5228
      %v5230 = vmul.f32 %v5227, %v5229
      %v5231 = vadd.f32 %v5227, %v5230
      %vm5232 = vweird.f32 %v5093
      %vm5233 = vweird.f32 %v5227
      %vm5234 = vmor %vm5232, %vm5233
      %v5235 = vsel %vm5234, %v5227, %v5231
      %v5236 = vand.u32 2147483647, %v5093
      %vm5237 = vcmp.eq.f32.partialorder %v5236, 8.507059e+37
      %v5238 = vand.u32 %v5093, 2147483648
      %v5239 = vor.u32 1.1754944e-38, %v5238
      %v5240 = vsel %vm5237, %v5239, %v5235
      %v5241 = vmul.f32 1.0, %v5240
      %v5242 = vrcp.pop %v5094
      %v5243 = vmul.f32 %v5094, %v5242
      %v5244 = vsub.f32 1.0, %v5243
      %v5245 = vmul.f32 %v5242, %v5244
      %v5246 = vadd.f32 %v5242, %v5245
      %vm5247 = vweird.f32 %v5094
      %vm5248 = vweird.f32 %v5242
      %vm5249 = vmor %vm5247, %vm5248
      %v5250 = vsel %vm5249, %v5242, %v5246
      %v5251 = vand.u32 2147483647, %v5094
      %vm5252 = vcmp.eq.f32.partialorder %v5251, 8.507059e+37
      %v5253 = vand.u32 %v5094, 2147483648
      %v5254 = vor.u32 1.1754944e-38, %v5253
      %v5255 = vsel %vm5252, %v5254, %v5250
      %v5256 = vmul.f32 1.0, %v5255
      %v5257 = vrcp.pop %v5095
      %v5258 = vmul.f32 %v5095, %v5257
      %v5259 = vsub.f32 1.0, %v5258
      %v5260 = vmul.f32 %v5257, %v5259
      %v5261 = vadd.f32 %v5257, %v5260
      %vm5262 = vweird.f32 %v5095
      %vm5263 = vweird.f32 %v5257
      %vm5264 = vmor %vm5262, %vm5263
      %v5265 = vsel %vm5264, %v5257, %v5261
      %v5266 = vand.u32 2147483647, %v5095
      %vm5267 = vcmp.eq.f32.partialorder %v5266, 8.507059e+37
      %v5268 = vand.u32 %v5095, 2147483648
      %v5269 = vor.u32 1.1754944e-38, %v5268
      %v5270 = vsel %vm5267, %v5269, %v5265
      %v5271 = vmul.f32 1.0, %v5270
      %v5272 = vrcp.pop %v5096
      %v5273 = vmul.f32 %v5096, %v5272
      %v5274 = vsub.f32 1.0, %v5273
      %v5275 = vmul.f32 %v5272, %v5274
      %v5276 = vadd.f32 %v5272, %v5275
      %vm5277 = vweird.f32 %v5096
      %vm5278 = vweird.f32 %v5272
      %vm5279 = vmor %vm5277, %vm5278
      %v5280 = vsel %vm5279, %v5272, %v5276
      %v5281 = vand.u32 2147483647, %v5096
      %vm5282 = vcmp.eq.f32.partialorder %v5281, 8.507059e+37
      %v5283 = vand.u32 %v5096, 2147483648
      %v5284 = vor.u32 1.1754944e-38, %v5283
      %v5285 = vsel %vm5282, %v5284, %v5280
      %v5286 = vmul.f32 1.0, %v5285
      %v5287 = vrcp.pop %v5097
      %v5288 = vmul.f32 %v5097, %v5287
      %v5289 = vsub.f32 1.0, %v5288
      %v5290 = vmul.f32 %v5287, %v5289
      %v5291 = vadd.f32 %v5287, %v5290
      %vm5292 = vweird.f32 %v5097
      %vm5293 = vweird.f32 %v5287
      %vm5294 = vmor %vm5292, %vm5293
      %v5295 = vsel %vm5294, %v5287, %v5291
      %v5296 = vand.u32 2147483647, %v5097
      %vm5297 = vcmp.eq.f32.partialorder %v5296, 8.507059e+37
      %v5298 = vand.u32 %v5097, 2147483648
      %v5299 = vor.u32 1.1754944e-38, %v5298
      %v5300 = vsel %vm5297, %v5299, %v5295
      %v5301 = vmul.f32 1.0, %v5300
      %v5302 = vrcp.pop %v5098
      %v5303 = vmul.f32 %v5098, %v5302
      %v5304 = vsub.f32 1.0, %v5303
      %v5305 = vmul.f32 %v5302, %v5304
      %v5306 = vadd.f32 %v5302, %v5305
      %vm5307 = vweird.f32 %v5098
      %vm5308 = vweird.f32 %v5302
      %vm5309 = vmor %vm5307, %vm5308
      %v5310 = vsel %vm5309, %v5302, %v5306
      %v5311 = vand.u32 2147483647, %v5098
      %vm5312 = vcmp.eq.f32.partialorder %v5311, 8.507059e+37
      %v5313 = vand.u32 %v5098, 2147483648
      %v5314 = vor.u32 1.1754944e-38, %v5313
      %v5315 = vsel %vm5312, %v5314, %v5310
      %v5316 = vmul.f32 1.0, %v5315
      %v5317 = vrcp.pop %v5099
      %v5318 = vmul.f32 %v5099, %v5317
      %v5319 = vsub.f32 1.0, %v5318
      %v5320 = vmul.f32 %v5317, %v5319
      %v5321 = vadd.f32 %v5317, %v5320
      %vm5322 = vweird.f32 %v5099
      %vm5323 = vweird.f32 %v5317
      %vm5324 = vmor %vm5322, %vm5323
      %v5325 = vsel %vm5324, %v5317, %v5321
      %v5326 = vand.u32 2147483647, %v5099
      %vm5327 = vcmp.eq.f32.partialorder %v5326, 8.507059e+37
      %v5328 = vand.u32 %v5099, 2147483648
      %v5329 = vor.u32 1.1754944e-38, %v5328
      %v5330 = vsel %vm5327, %v5329, %v5325
      %v5331 = vmul.f32 1.0, %v5330
      %v5332 = vrcp.pop %v5100
      %v5333 = vmul.f32 %v5100, %v5332
      %v5334 = vsub.f32 1.0, %v5333
      %v5335 = vmul.f32 %v5332, %v5334
      %v5336 = vadd.f32 %v5332, %v5335
      %vm5337 = vweird.f32 %v5100
      %vm5338 = vweird.f32 %v5332
      %vm5339 = vmor %vm5337, %vm5338
      %v5340 = vsel %vm5339, %v5332, %v5336
      %v5341 = vand.u32 2147483647, %v5100
      %vm5342 = vcmp.eq.f32.partialorder %v5341, 8.507059e+37
      %v5343 = vand.u32 %v5100, 2147483648
      %v5344 = vor.u32 1.1754944e-38, %v5343
      %v5345 = vsel %vm5342, %v5344, %v5340
      %v5346 = vmul.f32 1.0, %v5345
      %v5347 = vrcp.pop %v5101
      %v5348 = vmul.f32 %v5101, %v5347
      %v5349 = vsub.f32 1.0, %v5348
      %v5350 = vmul.f32 %v5347, %v5349
      %v5351 = vadd.f32 %v5347, %v5350
      %vm5352 = vweird.f32 %v5101
      %vm5353 = vweird.f32 %v5347
      %vm5354 = vmor %vm5352, %vm5353
      %v5355 = vsel %vm5354, %v5347, %v5351
      %v5356 = vand.u32 2147483647, %v5101
      %vm5357 = vcmp.eq.f32.partialorder %v5356, 8.507059e+37
      %v5358 = vand.u32 %v5101, 2147483648
      %v5359 = vor.u32 1.1754944e-38, %v5358
      %v5360 = vsel %vm5357, %v5359, %v5355
      %v5361 = vmul.f32 1.0, %v5360
      %v5362 = vrcp.pop %v5102
      %v5363 = vmul.f32 %v5102, %v5362
      %v5364 = vsub.f32 1.0, %v5363
      %v5365 = vmul.f32 %v5362, %v5364
      %v5366 = vadd.f32 %v5362, %v5365
      %vm5367 = vweird.f32 %v5102
      %vm5368 = vweird.f32 %v5362
      %vm5369 = vmor %vm5367, %vm5368
      %v5370 = vsel %vm5369, %v5362, %v5366
      %v5371 = vand.u32 2147483647, %v5102
      %vm5372 = vcmp.eq.f32.partialorder %v5371, 8.507059e+37
      %v5373 = vand.u32 %v5102, 2147483648
      %v5374 = vor.u32 1.1754944e-38, %v5373
      %v5375 = vsel %vm5372, %v5374, %v5370
      %v5376 = vmul.f32 1.0, %v5375
      %v5377 = vrcp.pop %v5103
      %v5378 = vmul.f32 %v5103, %v5377
      %v5379 = vsub.f32 1.0, %v5378
      %v5380 = vmul.f32 %v5377, %v5379
      %v5381 = vadd.f32 %v5377, %v5380
      %vm5382 = vweird.f32 %v5103
      %vm5383 = vweird.f32 %v5377
      %vm5384 = vmor %vm5382, %vm5383
      %v5385 = vsel %vm5384, %v5377, %v5381
      %v5386 = vand.u32 2147483647, %v5103
      %vm5387 = vcmp.eq.f32.partialorder %v5386, 8.507059e+37
      %v5388 = vand.u32 %v5103, 2147483648
      %v5389 = vor.u32 1.1754944e-38, %v5388
      %v5390 = vsel %vm5387, %v5389, %v5385
      %v5391 = vmul.f32 1.0, %v5390
      %v5392 = vrcp.pop %v5104
      %v5393 = vmul.f32 %v5104, %v5392
      %v5394 = vsub.f32 1.0, %v5393
      %v5395 = vmul.f32 %v5392, %v5394
      %v5396 = vadd.f32 %v5392, %v5395
      %vm5397 = vweird.f32 %v5104
      %vm5398 = vweird.f32 %v5392
      %vm5399 = vmor %vm5397, %vm5398
      %v5400 = vsel %vm5399, %v5392, %v5396
      %v5401 = vand.u32 2147483647, %v5104
      %vm5402 = vcmp.eq.f32.partialorder %v5401, 8.507059e+37
      %v5403 = vand.u32 %v5104, 2147483648
      %v5404 = vor.u32 1.1754944e-38, %v5403
      %v5405 = vsel %vm5402, %v5404, %v5400
      %v5406 = vmul.f32 1.0, %v5405
      %v5407 = vrcp.pop %v5105
      %v5408 = vmul.f32 %v5105, %v5407
      %v5409 = vsub.f32 1.0, %v5408
      %v5410 = vmul.f32 %v5407, %v5409
      %v5411 = vadd.f32 %v5407, %v5410
      %vm5412 = vweird.f32 %v5105
      %vm5413 = vweird.f32 %v5407
      %vm5414 = vmor %vm5412, %vm5413
      %v5415 = vsel %vm5414, %v5407, %v5411
      %v5416 = vand.u32 2147483647, %v5105
      %vm5417 = vcmp.eq.f32.partialorder %v5416, 8.507059e+37
      %v5418 = vand.u32 %v5105, 2147483648
      %v5419 = vor.u32 1.1754944e-38, %v5418
      %v5420 = vsel %vm5417, %v5419, %v5415
      %v5421 = vmul.f32 1.0, %v5420
      %v5422 = vrcp.pop %v5106
      %v5423 = vmul.f32 %v5106, %v5422
      %v5424 = vsub.f32 1.0, %v5423
      %v5425 = vmul.f32 %v5422, %v5424
      %v5426 = vadd.f32 %v5422, %v5425
      %vm5427 = vweird.f32 %v5106
      %vm5428 = vweird.f32 %v5422
      %vm5429 = vmor %vm5427, %vm5428
      %v5430 = vsel %vm5429, %v5422, %v5426
      %v5431 = vand.u32 2147483647, %v5106
      %vm5432 = vcmp.eq.f32.partialorder %v5431, 8.507059e+37
      %v5433 = vand.u32 %v5106, 2147483648
      %v5434 = vor.u32 1.1754944e-38, %v5433
      %v5435 = vsel %vm5432, %v5434, %v5430
      %v5436 = vmul.f32 1.0, %v5435
      %v5437 = vrcp.pop %v5107
      %v5438 = vmul.f32 %v5107, %v5437
      %v5439 = vsub.f32 1.0, %v5438
      %v5440 = vmul.f32 %v5437, %v5439
      %v5441 = vadd.f32 %v5437, %v5440
      %vm5442 = vweird.f32 %v5107
      %vm5443 = vweird.f32 %v5437
      %vm5444 = vmor %vm5442, %vm5443
      %v5445 = vsel %vm5444, %v5437, %v5441
      %v5446 = vand.u32 2147483647, %v5107
      %vm5447 = vcmp.eq.f32.partialorder %v5446, 8.507059e+37
      %v5448 = vand.u32 %v5107, 2147483648
      %v5449 = vor.u32 1.1754944e-38, %v5448
      %v5450 = vsel %vm5447, %v5449, %v5445
      %v5451 = vmul.f32 1.0, %v5450
      %v5452 = vrcp.pop %v5108
      %v5453 = vmul.f32 %v5108, %v5452
      %v5454 = vsub.f32 1.0, %v5453
      %v5455 = vmul.f32 %v5452, %v5454
      %v5456 = vadd.f32 %v5452, %v5455
      %vm5457 = vweird.f32 %v5108
      %vm5458 = vweird.f32 %v5452
      %vm5459 = vmor %vm5457, %vm5458
      %v5460 = vsel %vm5459, %v5452, %v5456
      %v5461 = vand.u32 2147483647, %v5108
      %vm5462 = vcmp.eq.f32.partialorder %v5461, 8.507059e+37
      %v5463 = vand.u32 %v5108, 2147483648
      %v5464 = vor.u32 1.1754944e-38, %v5463
      %v5465 = vsel %vm5462, %v5464, %v5460
      %v5466 = vmul.f32 1.0, %v5465
      %v5467 = vrcp.pop %v5109
      %v5468 = vmul.f32 %v5109, %v5467
      %v5469 = vsub.f32 1.0, %v5468
      %v5470 = vmul.f32 %v5467, %v5469
      %v5471 = vadd.f32 %v5467, %v5470
      %vm5472 = vweird.f32 %v5109
      %vm5473 = vweird.f32 %v5467
      %vm5474 = vmor %vm5472, %vm5473
      %v5475 = vsel %vm5474, %v5467, %v5471
      %v5476 = vand.u32 2147483647, %v5109
      %vm5477 = vcmp.eq.f32.partialorder %v5476, 8.507059e+37
      %v5478 = vand.u32 %v5109, 2147483648
      %v5479 = vor.u32 1.1754944e-38, %v5478
      %v5480 = vsel %vm5477, %v5479, %v5475
      %v5481 = vmul.f32 1.0, %v5480
      %v5482 = vrcp.pop %v5110
      %v5483 = vmul.f32 %v5110, %v5482
      %v5484 = vsub.f32 1.0, %v5483
      %v5485 = vmul.f32 %v5482, %v5484
      %v5486 = vadd.f32 %v5482, %v5485
      %vm5487 = vweird.f32 %v5110
      %vm5488 = vweird.f32 %v5482
      %vm5489 = vmor %vm5487, %vm5488
      %v5490 = vsel %vm5489, %v5482, %v5486
      %v5491 = vand.u32 2147483647, %v5110
      %vm5492 = vcmp.eq.f32.partialorder %v5491, 8.507059e+37
      %v5493 = vand.u32 %v5110, 2147483648
      %v5494 = vor.u32 1.1754944e-38, %v5493
      %v5495 = vsel %vm5492, %v5494, %v5490
      %v5496 = vmul.f32 1.0, %v5495
      %v5497 = vrcp.pop %v5111
      %v5498 = vmul.f32 %v5111, %v5497
      %v5499 = vsub.f32 1.0, %v5498
      %v5500 = vmul.f32 %v5497, %v5499
      %v5501 = vadd.f32 %v5497, %v5500
      %vm5502 = vweird.f32 %v5111
      %vm5503 = vweird.f32 %v5497
      %vm5504 = vmor %vm5502, %vm5503
      %v5505 = vsel %vm5504, %v5497, %v5501
      %v5506 = vand.u32 2147483647, %v5111
      %vm5507 = vcmp.eq.f32.partialorder %v5506, 8.507059e+37
      %v5508 = vand.u32 %v5111, 2147483648
      %v5509 = vor.u32 1.1754944e-38, %v5508
      %v5510 = vsel %vm5507, %v5509, %v5505
      %v5511 = vmul.f32 1.0, %v5510
      %v5512 = vrcp.pop %v5112
      %v5513 = vmul.f32 %v5112, %v5512
      %v5514 = vsub.f32 1.0, %v5513
      %v5515 = vmul.f32 %v5512, %v5514
      %v5516 = vadd.f32 %v5512, %v5515
      %vm5517 = vweird.f32 %v5112
      %vm5518 = vweird.f32 %v5512
      %vm5519 = vmor %vm5517, %vm5518
      %v5520 = vsel %vm5519, %v5512, %v5516
      %v5521 = vand.u32 2147483647, %v5112
      %vm5522 = vcmp.eq.f32.partialorder %v5521, 8.507059e+37
      %v5523 = vand.u32 %v5112, 2147483648
      %v5524 = vor.u32 1.1754944e-38, %v5523
      %v5525 = vsel %vm5522, %v5524, %v5520
      %v5526 = vmul.f32 1.0, %v5525
      %v5527 = vrcp.pop %v5113
      %v5528 = vmul.f32 %v5113, %v5527
      %v5529 = vsub.f32 1.0, %v5528
      %v5530 = vmul.f32 %v5527, %v5529
      %v5531 = vadd.f32 %v5527, %v5530
      %vm5532 = vweird.f32 %v5113
      %vm5533 = vweird.f32 %v5527
      %vm5534 = vmor %vm5532, %vm5533
      %v5535 = vsel %vm5534, %v5527, %v5531
      %v5536 = vand.u32 2147483647, %v5113
      %vm5537 = vcmp.eq.f32.partialorder %v5536, 8.507059e+37
      %v5538 = vand.u32 %v5113, 2147483648
      %v5539 = vor.u32 1.1754944e-38, %v5538
      %v5540 = vsel %vm5537, %v5539, %v5535
      %v5541 = vmul.f32 1.0, %v5540
      %v5542 = vrcp.pop %v5114
      %v5543 = vmul.f32 %v5114, %v5542
      %v5544 = vsub.f32 1.0, %v5543
      %v5545 = vmul.f32 %v5542, %v5544
      %v5546 = vadd.f32 %v5542, %v5545
      %vm5547 = vweird.f32 %v5114
      %vm5548 = vweird.f32 %v5542
      %vm5549 = vmor %vm5547, %vm5548
      %v5550 = vsel %vm5549, %v5542, %v5546
      %v5551 = vand.u32 2147483647, %v5114
      %vm5552 = vcmp.eq.f32.partialorder %v5551, 8.507059e+37
      %v5553 = vand.u32 %v5114, 2147483648
      %v5554 = vor.u32 1.1754944e-38, %v5553
      %v5555 = vsel %vm5552, %v5554, %v5550
      %v5556 = vmul.f32 1.0, %v5555
      %v5557 = vrcp.pop %v5115
      %v5558 = vmul.f32 %v5115, %v5557
      %v5559 = vsub.f32 1.0, %v5558
      %v5560 = vmul.f32 %v5557, %v5559
      %v5561 = vadd.f32 %v5557, %v5560
      %vm5562 = vweird.f32 %v5115
      %vm5563 = vweird.f32 %v5557
      %vm5564 = vmor %vm5562, %vm5563
      %v5565 = vsel %vm5564, %v5557, %v5561
      %v5566 = vand.u32 2147483647, %v5115
      %vm5567 = vcmp.eq.f32.partialorder %v5566, 8.507059e+37
      %v5568 = vand.u32 %v5115, 2147483648
      %v5569 = vor.u32 1.1754944e-38, %v5568
      %v5570 = vsel %vm5567, %v5569, %v5565
      %v5571 = vmul.f32 1.0, %v5570
      %v5572 = vrcp.pop %v5116
      %v5573 = vmul.f32 %v5116, %v5572
      %v5574 = vsub.f32 1.0, %v5573
      %v5575 = vmul.f32 %v5572, %v5574
      %v5576 = vadd.f32 %v5572, %v5575
      %vm5577 = vweird.f32 %v5116
      %vm5578 = vweird.f32 %v5572
      %vm5579 = vmor %vm5577, %vm5578
      %v5580 = vsel %vm5579, %v5572, %v5576
      %v5581 = vand.u32 2147483647, %v5116
      %vm5582 = vcmp.eq.f32.partialorder %v5581, 8.507059e+37
      %v5583 = vand.u32 %v5116, 2147483648
      %v5584 = vor.u32 1.1754944e-38, %v5583
      %v5585 = vsel %vm5582, %v5584, %v5580
      %v5586 = vmul.f32 1.0, %v5585
      %v5587 = vrcp.pop %v5117
      %v5588 = vmul.f32 %v5117, %v5587
      %v5589 = vsub.f32 1.0, %v5588
      %v5590 = vmul.f32 %v5587, %v5589
      %v5591 = vadd.f32 %v5587, %v5590
      %vm5592 = vweird.f32 %v5117
      %vm5593 = vweird.f32 %v5587
      %vm5594 = vmor %vm5592, %vm5593
      %v5595 = vsel %vm5594, %v5587, %v5591
      %v5596 = vand.u32 2147483647, %v5117
      %vm5597 = vcmp.eq.f32.partialorder %v5596, 8.507059e+37
      %v5598 = vand.u32 %v5117, 2147483648
      %v5599 = vor.u32 1.1754944e-38, %v5598
      %v5600 = vsel %vm5597, %v5599, %v5595
      %v5601 = vmul.f32 1.0, %v5600
      %v5602 = vrcp.pop %v5118
      %v5603 = vmul.f32 %v5118, %v5602
      %v5604 = vsub.f32 1.0, %v5603
      %v5605 = vmul.f32 %v5602, %v5604
      %v5606 = vadd.f32 %v5602, %v5605
      %vm5607 = vweird.f32 %v5118
      %vm5608 = vweird.f32 %v5602
      %vm5609 = vmor %vm5607, %vm5608
      %v5610 = vsel %vm5609, %v5602, %v5606
      %v5611 = vand.u32 2147483647, %v5118
      %vm5612 = vcmp.eq.f32.partialorder %v5611, 8.507059e+37
      %v5613 = vand.u32 %v5118, 2147483648
      %v5614 = vor.u32 1.1754944e-38, %v5613
      %v5615 = vsel %vm5612, %v5614, %v5610
      %v5616 = vmul.f32 1.0, %v5615
      %v5617 = vrcp.pop %v5119
      %v5618 = vmul.f32 %v5119, %v5617
      %v5619 = vsub.f32 1.0, %v5618
      %v5620 = vmul.f32 %v5617, %v5619
      %v5621 = vadd.f32 %v5617, %v5620
      %vm5622 = vweird.f32 %v5119
      %vm5623 = vweird.f32 %v5617
      %vm5624 = vmor %vm5622, %vm5623
      %v5625 = vsel %vm5624, %v5617, %v5621
      %v5626 = vand.u32 2147483647, %v5119
      %vm5627 = vcmp.eq.f32.partialorder %v5626, 8.507059e+37
      %v5628 = vand.u32 %v5119, 2147483648
      %v5629 = vor.u32 1.1754944e-38, %v5628
      %v5630 = vsel %vm5627, %v5629, %v5625
      %v5631 = vmul.f32 1.0, %v5630
      %v5632 = vrcp.pop %v5120
      %v5633 = vmul.f32 %v5120, %v5632
      %v5634 = vsub.f32 1.0, %v5633
      %v5635 = vmul.f32 %v5632, %v5634
      %v5636 = vadd.f32 %v5632, %v5635
      %vm5637 = vweird.f32 %v5120
      %vm5638 = vweird.f32 %v5632
      %vm5639 = vmor %vm5637, %vm5638
      %v5640 = vsel %vm5639, %v5632, %v5636
      %v5641 = vand.u32 2147483647, %v5120
      %vm5642 = vcmp.eq.f32.partialorder %v5641, 8.507059e+37
      %v5643 = vand.u32 %v5120, 2147483648
      %v5644 = vor.u32 1.1754944e-38, %v5643
      %v5645 = vsel %vm5642, %v5644, %v5640
      %v5646 = vmul.f32 1.0, %v5645
      %v5647 = vrcp.pop %v5121
      %v5648 = vmul.f32 %v5121, %v5647
      %v5649 = vsub.f32 1.0, %v5648
      %v5650 = vmul.f32 %v5647, %v5649
      %v5651 = vadd.f32 %v5647, %v5650
      %vm5652 = vweird.f32 %v5121
      %vm5653 = vweird.f32 %v5647
      %vm5654 = vmor %vm5652, %vm5653
      %v5655 = vsel %vm5654, %v5647, %v5651
      %v5656 = vand.u32 2147483647, %v5121
      %vm5657 = vcmp.eq.f32.partialorder %v5656, 8.507059e+37
      %v5658 = vand.u32 %v5121, 2147483648
      %v5659 = vor.u32 1.1754944e-38, %v5658
      %v5660 = vsel %vm5657, %v5659, %v5655
      %v5661 = vmul.f32 1.0, %v5660
      %v5662 = vrcp.pop %v5122
      %v5663 = vmul.f32 %v5122, %v5662
      %v5664 = vsub.f32 1.0, %v5663
      %v5665 = vmul.f32 %v5662, %v5664
      %v5666 = vadd.f32 %v5662, %v5665
      %vm5667 = vweird.f32 %v5122
      %vm5668 = vweird.f32 %v5662
      %vm5669 = vmor %vm5667, %vm5668
      %v5670 = vsel %vm5669, %v5662, %v5666
      %v5671 = vand.u32 2147483647, %v5122
      %vm5672 = vcmp.eq.f32.partialorder %v5671, 8.507059e+37
      %v5673 = vand.u32 %v5122, 2147483648
      %v5674 = vor.u32 1.1754944e-38, %v5673
      %v5675 = vsel %vm5672, %v5674, %v5670
      %v5676 = vmul.f32 1.0, %v5675
      %v5677 = vrcp.pop %v5123
      %v5678 = vmul.f32 %v5123, %v5677
      %v5679 = vsub.f32 1.0, %v5678
      %v5680 = vmul.f32 %v5677, %v5679
      %v5681 = vadd.f32 %v5677, %v5680
      %vm5682 = vweird.f32 %v5123
      %vm5683 = vweird.f32 %v5677
      %vm5684 = vmor %vm5682, %vm5683
      %v5685 = vsel %vm5684, %v5677, %v5681
      %v5686 = vand.u32 2147483647, %v5123
      %vm5687 = vcmp.eq.f32.partialorder %v5686, 8.507059e+37
      %v5688 = vand.u32 %v5123, 2147483648
      %v5689 = vor.u32 1.1754944e-38, %v5688
      %v5690 = vsel %vm5687, %v5689, %v5685
      %v5691 = vmul.f32 1.0, %v5690
      %v5692 = vrcp.pop %v5124
      %v5693 = vmul.f32 %v5124, %v5692
      %v5694 = vsub.f32 1.0, %v5693
      %v5695 = vmul.f32 %v5692, %v5694
      %v5696 = vadd.f32 %v5692, %v5695
      %vm5697 = vweird.f32 %v5124
      %vm5698 = vweird.f32 %v5692
      %vm5699 = vmor %vm5697, %vm5698
      %v5700 = vsel %vm5699, %v5692, %v5696
      %v5701 = vand.u32 2147483647, %v5124
      %vm5702 = vcmp.eq.f32.partialorder %v5701, 8.507059e+37
      %v5703 = vand.u32 %v5124, 2147483648
      %v5704 = vor.u32 1.1754944e-38, %v5703
      %v5705 = vsel %vm5702, %v5704, %v5700
      %v5706 = vmul.f32 1.0, %v5705
      %v5707 = vrcp.pop %v5125
      %v5708 = vmul.f32 %v5125, %v5707
      %v5709 = vsub.f32 1.0, %v5708
      %v5710 = vmul.f32 %v5707, %v5709
      %v5711 = vadd.f32 %v5707, %v5710
      %vm5712 = vweird.f32 %v5125
      %vm5713 = vweird.f32 %v5707
      %vm5714 = vmor %vm5712, %vm5713
      %v5715 = vsel %vm5714, %v5707, %v5711
      %v5716 = vand.u32 2147483647, %v5125
      %vm5717 = vcmp.eq.f32.partialorder %v5716, 8.507059e+37
      %v5718 = vand.u32 %v5125, 2147483648
      %v5719 = vor.u32 1.1754944e-38, %v5718
      %v5720 = vsel %vm5717, %v5719, %v5715
      %v5721 = vmul.f32 1.0, %v5720
      %v5722 = vrcp.pop %v5126
      %v5723 = vmul.f32 %v5126, %v5722
      %v5724 = vsub.f32 1.0, %v5723
      %v5725 = vmul.f32 %v5722, %v5724
      %v5726 = vadd.f32 %v5722, %v5725
      %vm5727 = vweird.f32 %v5126
      %vm5728 = vweird.f32 %v5722
      %vm5729 = vmor %vm5727, %vm5728
      %v5730 = vsel %vm5729, %v5722, %v5726
      %v5731 = vand.u32 2147483647, %v5126
      %vm5732 = vcmp.eq.f32.partialorder %v5731, 8.507059e+37
      %v5733 = vand.u32 %v5126, 2147483648
      %v5734 = vor.u32 1.1754944e-38, %v5733
      %v5735 = vsel %vm5732, %v5734, %v5730
      %v5736 = vmul.f32 1.0, %v5735
      %v5737 = vrcp.pop %v5127
      %v5738 = vmul.f32 %v5127, %v5737
      %v5739 = vsub.f32 1.0, %v5738
      %v5740 = vmul.f32 %v5737, %v5739
      %v5741 = vadd.f32 %v5737, %v5740
      %vm5742 = vweird.f32 %v5127
      %vm5743 = vweird.f32 %v5737
      %vm5744 = vmor %vm5742, %vm5743
      %v5745 = vsel %vm5744, %v5737, %v5741
      %v5746 = vand.u32 2147483647, %v5127
      %vm5747 = vcmp.eq.f32.partialorder %v5746, 8.507059e+37
      %v5748 = vand.u32 %v5127, 2147483648
      %v5749 = vor.u32 1.1754944e-38, %v5748
      %v5750 = vsel %vm5747, %v5749, %v5745
      %v5751 = vmul.f32 1.0, %v5750
      %v5752 = vrcp.pop %v5128
      %v5753 = vmul.f32 %v5128, %v5752
      %v5754 = vsub.f32 1.0, %v5753
      %v5755 = vmul.f32 %v5752, %v5754
      %v5756 = vadd.f32 %v5752, %v5755
      %vm5757 = vweird.f32 %v5128
      %vm5758 = vweird.f32 %v5752
      %vm5759 = vmor %vm5757, %vm5758
      %v5760 = vsel %vm5759, %v5752, %v5756
      %v5761 = vand.u32 2147483647, %v5128
      %vm5762 = vcmp.eq.f32.partialorder %v5761, 8.507059e+37
      %v5763 = vand.u32 %v5128, 2147483648
      %v5764 = vor.u32 1.1754944e-38, %v5763
      %v5765 = vsel %vm5762, %v5764, %v5760
      %v5766 = vmul.f32 1.0, %v5765
      %v5767 = vrcp.pop %v5129
      %v5768 = vmul.f32 %v5129, %v5767
      %v5769 = vsub.f32 1.0, %v5768
      %v5770 = vmul.f32 %v5767, %v5769
      %v5771 = vadd.f32 %v5767, %v5770
      %vm5772 = vweird.f32 %v5129
      %vm5773 = vweird.f32 %v5767
      %vm5774 = vmor %vm5772, %vm5773
      %v5775 = vsel %vm5774, %v5767, %v5771
      %v5776 = vand.u32 2147483647, %v5129
      %vm5777 = vcmp.eq.f32.partialorder %v5776, 8.507059e+37
      %v5778 = vand.u32 %v5129, 2147483648
      %v5779 = vor.u32 1.1754944e-38, %v5778
      %v5780 = vsel %vm5777, %v5779, %v5775
      %v5781 = vmul.f32 1.0, %v5780
      %v5782 = vrcp.pop %v5130
      %v5783 = vmul.f32 %v5130, %v5782
      %v5784 = vsub.f32 1.0, %v5783
      %v5785 = vmul.f32 %v5782, %v5784
      %v5786 = vadd.f32 %v5782, %v5785
      %vm5787 = vweird.f32 %v5130
      %vm5788 = vweird.f32 %v5782
      %vm5789 = vmor %vm5787, %vm5788
      %v5790 = vsel %vm5789, %v5782, %v5786
      %v5791 = vand.u32 2147483647, %v5130
      %vm5792 = vcmp.eq.f32.partialorder %v5791, 8.507059e+37
      %v5793 = vand.u32 %v5130, 2147483648
      %v5794 = vor.u32 1.1754944e-38, %v5793
      %v5795 = vsel %vm5792, %v5794, %v5790
      %v5796 = vmul.f32 1.0, %v5795
      %v5797 = vrcp.pop %v5131
      %v5798 = vmul.f32 %v5131, %v5797
      %v5799 = vsub.f32 1.0, %v5798
      %v5800 = vmul.f32 %v5797, %v5799
      %v5801 = vadd.f32 %v5797, %v5800
      %vm5802 = vweird.f32 %v5131
      %vm5803 = vweird.f32 %v5797
      %vm5804 = vmor %vm5802, %vm5803
      %v5805 = vsel %vm5804, %v5797, %v5801
      %v5806 = vand.u32 2147483647, %v5131
      %vm5807 = vcmp.eq.f32.partialorder %v5806, 8.507059e+37
      %v5808 = vand.u32 %v5131, 2147483648
      %v5809 = vor.u32 1.1754944e-38, %v5808
      %v5810 = vsel %vm5807, %v5809, %v5805
      %v5811 = vmul.f32 1.0, %v5810
      %v5812 = vrcp.pop %v5132
      %v5813 = vmul.f32 %v5132, %v5812
      %v5814 = vsub.f32 1.0, %v5813
      %v5815 = vmul.f32 %v5812, %v5814
      %v5816 = vadd.f32 %v5812, %v5815
      %vm5817 = vweird.f32 %v5132
      %vm5818 = vweird.f32 %v5812
      %vm5819 = vmor %vm5817, %vm5818
      %v5820 = vsel %vm5819, %v5812, %v5816
      %v5821 = vand.u32 2147483647, %v5132
      %vm5822 = vcmp.eq.f32.partialorder %v5821, 8.507059e+37
      %v5823 = vand.u32 %v5132, 2147483648
      %v5824 = vor.u32 1.1754944e-38, %v5823
      %v5825 = vsel %vm5822, %v5824, %v5820
      %v5826 = vmul.f32 1.0, %v5825
      %v5827 = vrcp.pop %v5133
      %v5828 = vmul.f32 %v5133, %v5827
      %v5829 = vsub.f32 1.0, %v5828
      %v5830 = vmul.f32 %v5827, %v5829
      %v5831 = vadd.f32 %v5827, %v5830
      %vm5832 = vweird.f32 %v5133
      %vm5833 = vweird.f32 %v5827
      %vm5834 = vmor %vm5832, %vm5833
      %v5835 = vsel %vm5834, %v5827, %v5831
      %v5836 = vand.u32 2147483647, %v5133
      %vm5837 = vcmp.eq.f32.partialorder %v5836, 8.507059e+37
      %v5838 = vand.u32 %v5133, 2147483648
      %v5839 = vor.u32 1.1754944e-38, %v5838
      %v5840 = vsel %vm5837, %v5839, %v5835
      %v5841 = vmul.f32 1.0, %v5840
      %v5842 = vrcp.pop %v5134
      %v5843 = vmul.f32 %v5134, %v5842
      %v5844 = vsub.f32 1.0, %v5843
      %v5845 = vmul.f32 %v5842, %v5844
      %v5846 = vadd.f32 %v5842, %v5845
      %vm5847 = vweird.f32 %v5134
      %vm5848 = vweird.f32 %v5842
      %vm5849 = vmor %vm5847, %vm5848
      %v5850 = vsel %vm5849, %v5842, %v5846
      %v5851 = vand.u32 2147483647, %v5134
      %vm5852 = vcmp.eq.f32.partialorder %v5851, 8.507059e+37
      %v5853 = vand.u32 %v5134, 2147483648
      %v5854 = vor.u32 1.1754944e-38, %v5853
      %v5855 = vsel %vm5852, %v5854, %v5850
      %v5856 = vmul.f32 1.0, %v5855
      %v5857 = vrcp.pop %v5135
      %v5858 = vmul.f32 %v5135, %v5857
      %v5859 = vsub.f32 1.0, %v5858
      %v5860 = vmul.f32 %v5857, %v5859
      %v5861 = vadd.f32 %v5857, %v5860
      %vm5862 = vweird.f32 %v5135
      %vm5863 = vweird.f32 %v5857
      %vm5864 = vmor %vm5862, %vm5863
      %v5865 = vsel %vm5864, %v5857, %v5861
      %v5866 = vand.u32 2147483647, %v5135
      %vm5867 = vcmp.eq.f32.partialorder %v5866, 8.507059e+37
      %v5868 = vand.u32 %v5135, 2147483648
      %v5869 = vor.u32 1.1754944e-38, %v5868
      %v5870 = vsel %vm5867, %v5869, %v5865
      %v5871 = vmul.f32 1.0, %v5870
      %v5872 = vrcp.pop %v5136
      %v5873 = vmul.f32 %v5136, %v5872
      %v5874 = vsub.f32 1.0, %v5873
      %v5875 = vmul.f32 %v5872, %v5874
      %v5876 = vadd.f32 %v5872, %v5875
      %vm5877 = vweird.f32 %v5136
      %vm5878 = vweird.f32 %v5872
      %vm5879 = vmor %vm5877, %vm5878
      %v5880 = vsel %vm5879, %v5872, %v5876
      %v5881 = vand.u32 2147483647, %v5136
      %vm5882 = vcmp.eq.f32.partialorder %v5881, 8.507059e+37
      %v5883 = vand.u32 %v5136, 2147483648
      %v5884 = vor.u32 1.1754944e-38, %v5883
      %v5885 = vsel %vm5882, %v5884, %v5880
      %v5886 = vmul.f32 1.0, %v5885
      %v5887 = vrcp.pop %v5137
      %v5888 = vmul.f32 %v5137, %v5887
      %v5889 = vsub.f32 1.0, %v5888
      %v5890 = vmul.f32 %v5887, %v5889
      %v5891 = vadd.f32 %v5887, %v5890
      %vm5892 = vweird.f32 %v5137
      %vm5893 = vweird.f32 %v5887
      %vm5894 = vmor %vm5892, %vm5893
      %v5895 = vsel %vm5894, %v5887, %v5891
      %v5896 = vand.u32 2147483647, %v5137
      %vm5897 = vcmp.eq.f32.partialorder %v5896, 8.507059e+37
      %v5898 = vand.u32 %v5137, 2147483648
      %v5899 = vor.u32 1.1754944e-38, %v5898
      %v5900 = vsel %vm5897, %v5899, %v5895
      %v5901 = vmul.f32 1.0, %v5900
      %v5902 = vrcp.pop %v5138
      %v5903 = vmul.f32 %v5138, %v5902
      %v5904 = vsub.f32 1.0, %v5903
      %v5905 = vmul.f32 %v5902, %v5904
      %v5906 = vadd.f32 %v5902, %v5905
      %vm5907 = vweird.f32 %v5138
      %vm5908 = vweird.f32 %v5902
      %vm5909 = vmor %vm5907, %vm5908
      %v5910 = vsel %vm5909, %v5902, %v5906
      %v5911 = vand.u32 2147483647, %v5138
      %vm5912 = vcmp.eq.f32.partialorder %v5911, 8.507059e+37
      %v5913 = vand.u32 %v5138, 2147483648
      %v5914 = vor.u32 1.1754944e-38, %v5913
      %v5915 = vsel %vm5912, %v5914, %v5910
      %v5916 = vmul.f32 1.0, %v5915
      %v5917 = vrcp.pop %v5139
      %v5918 = vmul.f32 %v5139, %v5917
      %v5919 = vsub.f32 1.0, %v5918
      %v5920 = vmul.f32 %v5917, %v5919
      %v5921 = vadd.f32 %v5917, %v5920
      %vm5922 = vweird.f32 %v5139
      %vm5923 = vweird.f32 %v5917
      %vm5924 = vmor %vm5922, %vm5923
      %v5925 = vsel %vm5924, %v5917, %v5921
      %v5926 = vand.u32 2147483647, %v5139
      %vm5927 = vcmp.eq.f32.partialorder %v5926, 8.507059e+37
      %v5928 = vand.u32 %v5139, 2147483648
      %v5929 = vor.u32 1.1754944e-38, %v5928
      %v5930 = vsel %vm5927, %v5929, %v5925
      %v5931 = vmul.f32 1.0, %v5930
      %v5932 = vrcp.pop %v5140
      %v5933 = vmul.f32 %v5140, %v5932
      %v5934 = vsub.f32 1.0, %v5933
      %v5935 = vmul.f32 %v5932, %v5934
      %v5936 = vadd.f32 %v5932, %v5935
      %vm5937 = vweird.f32 %v5140
      %vm5938 = vweird.f32 %v5932
      %vm5939 = vmor %vm5937, %vm5938
      %v5940 = vsel %vm5939, %v5932, %v5936
      %v5941 = vand.u32 2147483647, %v5140
      %vm5942 = vcmp.eq.f32.partialorder %v5941, 8.507059e+37
      %v5943 = vand.u32 %v5140, 2147483648
      %v5944 = vor.u32 1.1754944e-38, %v5943
      %v5945 = vsel %vm5942, %v5944, %v5940
      %v5946 = vmul.f32 1.0, %v5945
      %v5947 = vrcp.pop %v5141
      %v5948 = vmul.f32 %v5141, %v5947
      %v5949 = vsub.f32 1.0, %v5948
      %v5950 = vmul.f32 %v5947, %v5949
      %v5951 = vadd.f32 %v5947, %v5950
      %vm5952 = vweird.f32 %v5141
      %vm5953 = vweird.f32 %v5947
      %vm5954 = vmor %vm5952, %vm5953
      %v5955 = vsel %vm5954, %v5947, %v5951
      %v5956 = vand.u32 2147483647, %v5141
      %vm5957 = vcmp.eq.f32.partialorder %v5956, 8.507059e+37
      %v5958 = vand.u32 %v5141, 2147483648
      %v5959 = vor.u32 1.1754944e-38, %v5958
      %v5960 = vsel %vm5957, %v5959, %v5955
      %v5961 = vmul.f32 1.0, %v5960
      %v5962 = vrcp.pop %v5142
      %v5963 = vmul.f32 %v5142, %v5962
      %v5964 = vsub.f32 1.0, %v5963
      %v5965 = vmul.f32 %v5962, %v5964
      %v5966 = vadd.f32 %v5962, %v5965
      %vm5967 = vweird.f32 %v5142
      %vm5968 = vweird.f32 %v5962
      %vm5969 = vmor %vm5967, %vm5968
      %v5970 = vsel %vm5969, %v5962, %v5966
      %v5971 = vand.u32 2147483647, %v5142
      %vm5972 = vcmp.eq.f32.partialorder %v5971, 8.507059e+37
      %v5973 = vand.u32 %v5142, 2147483648
      %v5974 = vor.u32 1.1754944e-38, %v5973
      %v5975 = vsel %vm5972, %v5974, %v5970
      %v5976 = vmul.f32 1.0, %v5975
      %v5977 = vrcp.pop %v5143
      %v5978 = vmul.f32 %v5143, %v5977
      %v5979 = vsub.f32 1.0, %v5978
      %v5980 = vmul.f32 %v5977, %v5979
      %v5981 = vadd.f32 %v5977, %v5980
      %vm5982 = vweird.f32 %v5143
      %vm5983 = vweird.f32 %v5977
      %vm5984 = vmor %vm5982, %vm5983
      %v5985 = vsel %vm5984, %v5977, %v5981
      %v5986 = vand.u32 2147483647, %v5143
      %vm5987 = vcmp.eq.f32.partialorder %v5986, 8.507059e+37
      %v5988 = vand.u32 %v5143, 2147483648
      %v5989 = vor.u32 1.1754944e-38, %v5988
      %v5990 = vsel %vm5987, %v5989, %v5985
      %v5991 = vmul.f32 1.0, %v5990
      %v5992 = vrcp.pop %v5144
      %v5993 = vmul.f32 %v5144, %v5992
      %v5994 = vsub.f32 1.0, %v5993
      %v5995 = vmul.f32 %v5992, %v5994
      %v5996 = vadd.f32 %v5992, %v5995
      %vm5997 = vweird.f32 %v5144
      %vm5998 = vweird.f32 %v5992
      %vm5999 = vmor %vm5997, %vm5998
      %v6000 = vsel %vm5999, %v5992, %v5996
      %v6001 = vand.u32 2147483647, %v5144
      %vm6002 = vcmp.eq.f32.partialorder %v6001, 8.507059e+37
      %v6003 = vand.u32 %v5144, 2147483648
      %v6004 = vor.u32 1.1754944e-38, %v6003
      %v6005 = vsel %vm6002, %v6004, %v6000
      %v6006 = vmul.f32 1.0, %v6005
      %v6007 = vrcp.pop %v5145
      %v6008 = vmul.f32 %v5145, %v6007
      %v6009 = vsub.f32 1.0, %v6008
      %v6010 = vmul.f32 %v6007, %v6009
      %v6011 = vadd.f32 %v6007, %v6010
      %vm6012 = vweird.f32 %v5145
      %vm6013 = vweird.f32 %v6007
      %vm6014 = vmor %vm6012, %vm6013
      %v6015 = vsel %vm6014, %v6007, %v6011
      %v6016 = vand.u32 2147483647, %v5145
      %vm6017 = vcmp.eq.f32.partialorder %v6016, 8.507059e+37
      %v6018 = vand.u32 %v5145, 2147483648
      %v6019 = vor.u32 1.1754944e-38, %v6018
      %v6020 = vsel %vm6017, %v6019, %v6015
      %v6021 = vmul.f32 1.0, %v6020
      %v6022 = vrcp.pop %v5146
      %v6023 = vmul.f32 %v5146, %v6022
      %v6024 = vsub.f32 1.0, %v6023
      %v6025 = vmul.f32 %v6022, %v6024
      %v6026 = vadd.f32 %v6022, %v6025
      %vm6027 = vweird.f32 %v5146
      %vm6028 = vweird.f32 %v6022
      %vm6029 = vmor %vm6027, %vm6028
      %v6030 = vsel %vm6029, %v6022, %v6026
      %v6031 = vand.u32 2147483647, %v5146
      %vm6032 = vcmp.eq.f32.partialorder %v6031, 8.507059e+37
      %v6033 = vand.u32 %v5146, 2147483648
      %v6034 = vor.u32 1.1754944e-38, %v6033
      %v6035 = vsel %vm6032, %v6034, %v6030
      %v6036 = vmul.f32 1.0, %v6035
      %v6037 = vrcp.pop %v5147
      %v6038 = vmul.f32 %v5147, %v6037
      %v6039 = vsub.f32 1.0, %v6038
      %v6040 = vmul.f32 %v6037, %v6039
      %v6041 = vadd.f32 %v6037, %v6040
      %vm6042 = vweird.f32 %v5147
      %vm6043 = vweird.f32 %v6037
      %vm6044 = vmor %vm6042, %vm6043
      %v6045 = vsel %vm6044, %v6037, %v6041
      %v6046 = vand.u32 2147483647, %v5147
      %vm6047 = vcmp.eq.f32.partialorder %v6046, 8.507059e+37
      %v6048 = vand.u32 %v5147, 2147483648
      %v6049 = vor.u32 1.1754944e-38, %v6048
      %v6050 = vsel %vm6047, %v6049, %v6045
      %v6051 = vmul.f32 1.0, %v6050
      %v6052 = vrcp.pop %v5148
      %v6053 = vmul.f32 %v5148, %v6052
      %v6054 = vsub.f32 1.0, %v6053
      %v6055 = vmul.f32 %v6052, %v6054
      %v6056 = vadd.f32 %v6052, %v6055
      %vm6057 = vweird.f32 %v5148
      %vm6058 = vweird.f32 %v6052
      %vm6059 = vmor %vm6057, %vm6058
      %v6060 = vsel %vm6059, %v6052, %v6056
      %v6061 = vand.u32 2147483647, %v5148
      %vm6062 = vcmp.eq.f32.partialorder %v6061, 8.507059e+37
      %v6063 = vand.u32 %v5148, 2147483648
      %v6064 = vor.u32 1.1754944e-38, %v6063
      %v6065 = vsel %vm6062, %v6064, %v6060
      %v6066 = vmul.f32 1.0, %v6065
      %v6067 = vrcp.pop %v5149
      %v6068 = vmul.f32 %v5149, %v6067
      %v6069 = vsub.f32 1.0, %v6068
      %v6070 = vmul.f32 %v6067, %v6069
      %v6071 = vadd.f32 %v6067, %v6070
      %vm6072 = vweird.f32 %v5149
      %vm6073 = vweird.f32 %v6067
      %vm6074 = vmor %vm6072, %vm6073
      %v6075 = vsel %vm6074, %v6067, %v6071
      %v6076 = vand.u32 2147483647, %v5149
      %vm6077 = vcmp.eq.f32.partialorder %v6076, 8.507059e+37
      %v6078 = vand.u32 %v5149, 2147483648
      %v6079 = vor.u32 1.1754944e-38, %v6078
      %v6080 = vsel %vm6077, %v6079, %v6075
      %v6081 = vmul.f32 1.0, %v6080
      %v6082 = vrcp.pop %v5150
      %v6083 = vmul.f32 %v5150, %v6082
      %v6084 = vsub.f32 1.0, %v6083
      %v6085 = vmul.f32 %v6082, %v6084
      %v6086 = vadd.f32 %v6082, %v6085
      %vm6087 = vweird.f32 %v5150
      %vm6088 = vweird.f32 %v6082
      %vm6089 = vmor %vm6087, %vm6088
      %v6090 = vsel %vm6089, %v6082, %v6086
      %v6091 = vand.u32 2147483647, %v5150
      %vm6092 = vcmp.eq.f32.partialorder %v6091, 8.507059e+37
      %v6093 = vand.u32 %v5150, 2147483648
      %v6094 = vor.u32 1.1754944e-38, %v6093
      %v6095 = vsel %vm6092, %v6094, %v6090
      %v6096 = vmul.f32 1.0, %v6095
      %v6097 = vrcp.pop %v5151
      %v6098 = vmul.f32 %v5151, %v6097
      %v6099 = vsub.f32 1.0, %v6098
      %v6100 = vmul.f32 %v6097, %v6099
      %v6101 = vadd.f32 %v6097, %v6100
      %vm6102 = vweird.f32 %v5151
      %vm6103 = vweird.f32 %v6097
      %vm6104 = vmor %vm6102, %vm6103
      %v6105 = vsel %vm6104, %v6097, %v6101
      %v6106 = vand.u32 2147483647, %v5151
      %vm6107 = vcmp.eq.f32.partialorder %v6106, 8.507059e+37
      %v6108 = vand.u32 %v5151, 2147483648
      %v6109 = vor.u32 1.1754944e-38, %v6108
      %v6110 = vsel %vm6107, %v6109, %v6105
      %v6111 = vmul.f32 1.0, %v6110
      %vm6112 = vcmask 7168
      %6113 = vst.msk [vmem:[%s665] sm:$0xff] %vm6112, %v5166
      %6114 = vst.msk [vmem:[%s665 + $0x8] sm:$0xff] %vm6112, %v5181
      %6115 = vst.msk [vmem:[%s665 + $0x10] sm:$0xff] %vm6112, %v5196
      %6116 = vst.msk [vmem:[%s665 + $0x18] sm:$0xff] %vm6112, %v5211
      %6117 = vst.msk [vmem:[%s665 + $0x20] sm:$0xff] %vm6112, %v5226
      %6118 = vst.msk [vmem:[%s665 + $0x28] sm:$0xff] %vm6112, %v5241
      %6119 = vst.msk [vmem:[%s665 + $0x30] sm:$0xff] %vm6112, %v5256
      %6120 = vst.msk [vmem:[%s665 + $0x38] sm:$0xff] %vm6112, %v5271
      %6121 = vst.msk [vmem:[%s665 + $0x40] sm:$0xff] %vm6112, %v5286
      %6122 = vst.msk [vmem:[%s665 + $0x48] sm:$0xff] %vm6112, %v5301
      %6123 = vst.msk [vmem:[%s665 + $0x50] sm:$0xff] %vm6112, %v5316
      %6124 = vst.msk [vmem:[%s665 + $0x58] sm:$0xff] %vm6112, %v5331
      %6125 = vst.msk [vmem:[%s665 + $0x60] sm:$0xff] %vm6112, %v5346
      %6126 = vst.msk [vmem:[%s665 + $0x68] sm:$0xff] %vm6112, %v5361
      %6127 = vst.msk [vmem:[%s665 + $0x70] sm:$0xff] %vm6112, %v5376
      %6128 = vst.msk [vmem:[%s665 + $0x78] sm:$0xff] %vm6112, %v5391
      %6129 = vst.msk [vmem:[%s665 + $0x80] sm:$0xff] %vm6112, %v5406
      %6130 = vst.msk [vmem:[%s665 + $0x88] sm:$0xff] %vm6112, %v5421
      %6131 = vst.msk [vmem:[%s665 + $0x90] sm:$0xff] %vm6112, %v5436
      %6132 = vst.msk [vmem:[%s665 + $0x98] sm:$0xff] %vm6112, %v5451
      %6133 = vst.msk [vmem:[%s665 + $0xa0] sm:$0xff] %vm6112, %v5466
      %6134 = vst.msk [vmem:[%s665 + $0xa8] sm:$0xff] %vm6112, %v5481
      %6135 = vst.msk [vmem:[%s665 + $0xb0] sm:$0xff] %vm6112, %v5496
      %6136 = vst.msk [vmem:[%s665 + $0xb8] sm:$0xff] %vm6112, %v5511
      %6137 = vst.msk [vmem:[%s665 + $0xc0] sm:$0xff] %vm6112, %v5526
      %6138 = vst.msk [vmem:[%s665 + $0xc8] sm:$0xff] %vm6112, %v5541
      %6139 = vst.msk [vmem:[%s665 + $0xd0] sm:$0xff] %vm6112, %v5556
      %6140 = vst.msk [vmem:[%s665 + $0xd8] sm:$0xff] %vm6112, %v5571
      %6141 = vst.msk [vmem:[%s665 + $0xe0] sm:$0xff] %vm6112, %v5586
      %6142 = vst.msk [vmem:[%s665 + $0xe8] sm:$0xff] %vm6112, %v5601
      %6143 = vst.msk [vmem:[%s665 + $0xf0] sm:$0xff] %vm6112, %v5616
      %6144 = vst.msk [vmem:[%s665 + $0xf8] sm:$0xff] %vm6112, %v5631
      %6145 = vst.msk [vmem:[%s665 + $0x100] sm:$0xff] %vm6112, %v5646
      %6146 = vst.msk [vmem:[%s665 + $0x108] sm:$0xff] %vm6112, %v5661
      %6147 = vst.msk [vmem:[%s665 + $0x110] sm:$0xff] %vm6112, %v5676
      %6148 = vst.msk [vmem:[%s665 + $0x118] sm:$0xff] %vm6112, %v5691
      %6149 = vst.msk [vmem:[%s665 + $0x120] sm:$0xff] %vm6112, %v5706
      %6150 = vst.msk [vmem:[%s665 + $0x128] sm:$0xff] %vm6112, %v5721
      %6151 = vst.msk [vmem:[%s665 + $0x130] sm:$0xff] %vm6112, %v5736
      %6152 = vst.msk [vmem:[%s665 + $0x138] sm:$0xff] %vm6112, %v5751
      %6153 = vst.msk [vmem:[%s665 + $0x140] sm:$0xff] %vm6112, %v5766
      %6154 = vst.msk [vmem:[%s665 + $0x148] sm:$0xff] %vm6112, %v5781
      %6155 = vst.msk [vmem:[%s665 + $0x150] sm:$0xff] %vm6112, %v5796
      %6156 = vst.msk [vmem:[%s665 + $0x158] sm:$0xff] %vm6112, %v5811
      %6157 = vst.msk [vmem:[%s665 + $0x160] sm:$0xff] %vm6112, %v5826
      %6158 = vst.msk [vmem:[%s665 + $0x168] sm:$0xff] %vm6112, %v5841
      %6159 = vst.msk [vmem:[%s665 + $0x170] sm:$0xff] %vm6112, %v5856
      %6160 = vst.msk [vmem:[%s665 + $0x178] sm:$0xff] %vm6112, %v5871
      %6161 = vst.msk [vmem:[%s665 + $0x180] sm:$0xff] %vm6112, %v5886
      %6162 = vst.msk [vmem:[%s665 + $0x188] sm:$0xff] %vm6112, %v5901
      %6163 = vst.msk [vmem:[%s665 + $0x190] sm:$0xff] %vm6112, %v5916
      %6164 = vst.msk [vmem:[%s665 + $0x198] sm:$0xff] %vm6112, %v5931
      %6165 = vst.msk [vmem:[%s665 + $0x1a0] sm:$0xff] %vm6112, %v5946
      %6166 = vst.msk [vmem:[%s665 + $0x1a8] sm:$0xff] %vm6112, %v5961
      %6167 = vst.msk [vmem:[%s665 + $0x1b0] sm:$0xff] %vm6112, %v5976
      %6168 = vst.msk [vmem:[%s665 + $0x1b8] sm:$0xff] %vm6112, %v5991
      %6169 = vst.msk [vmem:[%s665 + $0x1c0] sm:$0xff] %vm6112, %v6006
      %6170 = vst.msk [vmem:[%s665 + $0x1c8] sm:$0xff] %vm6112, %v6021
      %6171 = vst.msk [vmem:[%s665 + $0x1d0] sm:$0xff] %vm6112, %v6036
      %6172 = vst.msk [vmem:[%s665 + $0x1d8] sm:$0xff] %vm6112, %v6051
      %6173 = vst.msk [vmem:[%s665 + $0x1e0] sm:$0xff] %vm6112, %v6066
      %6174 = vst.msk [vmem:[%s665 + $0x1e8] sm:$0xff] %vm6112, %v6081
      %6175 = vst.msk [vmem:[%s665 + $0x1f0] sm:$0xff] %vm6112, %v6096
      %6176 = vst.msk [vmem:[%s665 + $0x1f8] sm:$0xff] %vm6112, %v6111
      %s6177 = smul.u32 64, %s30
      %p6178 = scmp.lt.s32.totalorder %s6177, 127
      %s6179 = scalar_select %p6178, %s6177, 127
      %s6180 = smul.addr %s6179, 8
      %s6181 = scalar_lea.vmem %s17, %s6180
      // Predicated region
      $region89: #{tpu_custom_call.1} parent=87 // pred_check
        %p6182 = pneg %p435
      $region90: #{tpu_custom_call.1} parent=87 // pred_check_branch
        %6184 = sbr.rel (%p6182) target = $region92
      $region91: #{tpu_custom_call.1} parent=87 // pred_region
        %s6185 = smul.u32 64, %s30
      $region92: #{tpu_custom_call.1} parent=87 // pred_fallthru
        _
    $region88: #{tpu_custom_call.1} parent=5 // pred_fallthru
      _
    %p6186 = scmp.le.s32.totalorder 2, %s25
    // Predicated region
    $region93: #{tpu_custom_call.1} parent=5 // pred_check
      %p6187 = pneg %p6186
    $region94: #{tpu_custom_call.1} parent=5 // pred_check_branch
      %6189 = sbr.rel (%p6187) target = $region96
    $region95: #{tpu_custom_call.1} parent=5 // pred_region
      %s6190 = ssub.s32 %s25, 2
      // Predicated region
      $region97: #{tpu_custom_call.1} parent=95 // pred_check
        %p6191 = pneg %p441
      $region98: #{tpu_custom_call.1} parent=95 // pred_check_branch
        %6193 = sbr.rel (%p6191) target = $region100
      $region99: #{tpu_custom_call.1} parent=95 // pred_region
        %s6194 = smul.u32 64, %s31
        %p6195 = scmp.lt.s32.totalorder %s6194, 127
        %s6196 = scalar_select %p6195, %s6194, 127
        %s6197 = smul.addr %s6196, 8
        %s6198 = scalar_lea.vmem %s17, %s6197
      $region100: #{tpu_custom_call.1} parent=95 // pred_fallthru
        _
    $region96: #{tpu_custom_call.1} parent=5 // pred_fallthru
      _
  $region6: #{tpu_custom_call.1} parent=0 // loop_footer
    %s29 = sadd.s32 1, %s25
  $region7: #{tpu_custom_call.1} parent=0 // loop_footer_branch
    %24 = sbr.rel target = $region3
  $region8: #{tpu_custom_call.1} parent=0 // loop_exit
    _

</llo_original>
